<compile_context>
chip_gen: v5e
topology: v5e:2x2
jax: 0.10.0
libtpu: 0.0.40
codegen_flags: <defaults>
</compile_context>

<pallas_src>
import math
import numpy as np
import jax
import jax.numpy as jnp
from jax.experimental import pallas as pl
from jax.experimental.pallas import tpu as pltpu

# Static architecture constants (the module hard-codes 28x28 single-channel input via fc1's size).
K = 5                       # conv kernel size (both convs) and pool kernel size
H_IN = W_IN = 28
HP1 = WP1 = 30              # conv1 zero-padded input (padding=1)
C1, O1 = 1, 5
HC1 = WC1 = 26              # conv1 output spatial
HQ1 = WQ1 = 13              # pool1 output spatial
HP2 = WP2 = 13              # conv2 input (no padding)
C2, O2 = 5, 50
HC2 = WC2 = 9               # conv2 output spatial
HQ2 = WQ2 = 5               # pool2 output spatial
NEG = -1.0e30               # stands in for -inf padding in max-pool


# ----------------------------------------------------------------------------
# Fused whole-network kernel
# ----------------------------------------------------------------------------
def _make_cnn_kernel(N):
    R1 = N * HP1 - (K - 1)   # rows of conv1 output matrix (includes cross-sample garbage rows)
    R2 = N * HP2 - (K - 1)
    f32, bf16 = jnp.float32, jnp.bfloat16

    def conv_pool(xmat, t_ref, brow_ref, rm_ref, R, Wc, O):
        """Conv (5 banded-Toeplitz MXU matmuls) + MaxPool2d(5,2,2) + ReLU6 on the flat layout.

        xmat: (N*Hp, Wp*C).  Returns (R, Wc*O) with row s = n*Hp + i, col j*O + o.
        """
        xb = xmat.astype(bf16)
        acc = None
        for ky in range(K):                      # lhs of tap ky = sublane-shifted slice (MXU dot)
            term = jnp.dot(xb[ky:ky + R, :], t_ref[ky], preferred_element_type=f32)
            acc = term if acc is None else acc + term
        conv = acc + brow_ref[...] + rm_ref[...]     # + bias row, + (-1e30 on cross-sample rows)

        # MaxPool2d(K, stride 2, padding 2), separable H then W; -1e30 pads == -inf padding.
        negr = jnp.full((2, Wc * O), NEG, f32)
        p = jnp.concatenate([negr, conv, negr], axis=0)             # (R+4, Wc*O)
        h = p[0:R, :]
        for t in range(1, K):
            h = jnp.maximum(h, p[t:t + R, :])                       # max over the H window
        negc = jnp.full((R, 2 * O), NEG, f32)
        pw = jnp.concatenate([negc, h, negc], axis=1)               # (R, (Wc+4)*O)
        m = pw[:, 0:Wc * O]
        for t in range(1, K):
            m = jnp.maximum(m, pw[:, t * O: t * O + Wc * O])        # max over the W window
        return jnp.clip(m, 0.0, 6.0)                                # ReLU6

    def kernel(x_ref, y_ref,
               t1_ref, b1_ref, rm1_ref, rs1_ref, cs1_ref,
               t2_ref, b2_ref, rm2_ref, rs2_ref, cs2_ref,
               w1b_ref, w1y_ref, bf1_ref,
               w2_ref, w2y_ref, bf2_ref,
               w3_ref, w3y_ref, bf3_ref,
               o_ref, xp_ref):
        y = y_ref[...]                                              # (N, 1) f32

        # ---- stage 1: zero-padded (X + Y) built in VMEM (conv padding and "+Y" fused in-kernel) ----
        xp_ref[...] = jnp.zeros_like(xp_ref)
        for n in range(N):
            xp_ref[n * HP1 + 1: n * HP1 + 1 + H_IN, 1:1 + W_IN] = (
                x_ref[n * H_IN:(n + 1) * H_IN, :] + y[n:n + 1, :])

        a1 = conv_pool(xp_ref[...], t1_ref, b1_ref, rm1_ref, R1, WC1, O1)          # (R1, 130)

        # ---- stride-2 subsample (selection matmuls) + "+Y" -> conv2 input (N*13, 13*5) ----
        s1 = jnp.dot(rs1_ref[...], a1.astype(bf16), preferred_element_type=f32)    # (N*13, 130)
        x2 = jnp.dot(s1.astype(bf16), cs1_ref[...], preferred_element_type=f32)    # (N*13, 65)
        yb = jnp.concatenate(
            [jnp.zeros((HQ1, WP2 * C2), f32) + y[n:n + 1, :] for n in range(N)], axis=0)
        x2 = x2 + yb

        a2 = conv_pool(x2, t2_ref, b2_ref, rm2_ref, R2, WC2, O2)                   # (R2, 450)

        # ---- stride-2 subsample -> Z laid out (N*5, 5*50): rows n*5+ii, cols jj*50+o ----
        s2 = jnp.dot(rs2_ref[...], a2.astype(bf16), preferred_element_type=f32)    # (N*5, 450)
        z = jnp.dot(s2.astype(bf16), cs2_ref[...], preferred_element_type=f32)     # (N*5, 250)
        zb = z.astype(bf16)

        # ---- FC head; torch.cat([., Y], 1) == separate Y-weight rows split out at init ----
        h1 = bf1_ref[...] + y * w1y_ref[...]                                        # (N, 100)
        for ii in range(HQ2):   # fc1 weight rows were permuted at init to the (ii, jj*50+o) layout
            rows = jnp.concatenate(
                [zb[n * HQ2 + ii: n * HQ2 + ii + 1, :] for n in range(N)], axis=0)  # (N, 250)
            h1 = h1 + jnp.dot(rows, w1b_ref[ii], preferred_element_type=f32)
        h1 = jnp.clip(h1, 0.0, 6.0)

        h2 = jnp.dot(h1.astype(bf16), w2_ref[...], preferred_element_type=f32)
        h2 = jnp.clip(h2 + y * w2y_ref[...] + bf2_ref[...], 0.0, 6.0)               # (N, 50)

        out = jnp.dot(h2.astype(bf16), w3_ref[...], preferred_element_type=f32)
        o_ref[...] = (out + y * w3y_ref[...] + bf3_ref[...]).astype(o_ref.dtype)    # one (N,1) store

    return kernel


# ----------------------------------------------------------------------------
# Parameters: PyTorch-default-style init, then preprocessed into the kernel layouts
# ----------------------------------------------------------------------------
def init_params(key, N=2):
    def unif(k, shape, fan_in):
        bound = 1.0 / math.sqrt(fan_in)
        return np.asarray(jax.random.uniform(k, shape, jnp.float32, -bound, bound))

    ks = jax.random.split(key, 10)
    w1 = unif(ks[0], (O1, C1, K, K), C1 * K * K)            # Conv2d(1, 5, 5) weight (O,C,ky,kx)
    b1 = unif(ks[1], (O1,), C1 * K * K)
    w2 = unif(ks[2], (O2, C2, K, K), C2 * K * K)            # Conv2d(5, 50, 5) weight
    b2 = unif(ks[3], (O2,), C2 * K * K)
    wf1 = unif(ks[4], (O2 * HQ2 * WQ2 + 1, 100), 1251)      # Linear weights stored (in, out)
    bf1 = unif(ks[5], (100,), 1251)
    wf2 = unif(ks[6], (101, 50), 101)
    bf2 = unif(ks[7], (50,), 101)
    wf3 = unif(ks[8], (51, 1), 51)
    bf3 = unif(ks[9], (1,), 51)

    def toeplitz(w, C, O, Wc):
        """Banded block-Toeplitz tap matrices: T[ky][(j+kx)*C + c, j*O + o] = w[o, c, ky, kx]."""
        Wp = Wc + K - 1
        wt = np.transpose(w, (2, 3, 1, 0))                  # (ky, kx, C, O)
        T = np.zeros((K, Wp * C, Wc * O), np.float32)
        for ky in range(K):
            for kx in range(K):
                for j in range(Wc):
                    T[ky, (j + kx) * C:(j + kx) * C + C, j * O:(j + 1) * O] = wt[ky, kx]
        return T

    def row_mask(Hp, Hc):
        """0 on rows holding real conv outputs, -1e30 on rows whose window crosses samples."""
        R = N * Hp - (K - 1)
        rm = np.full((R, 1), NEG, np.float32)
        for n in range(N):
            rm[n * Hp: n * Hp + Hc, 0] = 0.0
        return rm

    def row_sel(Hp, Hq):
        """(N*Hq, R) selector: output row n*Hq+ii <- flat row n*Hp + 2*ii (stride-2 pool centers)."""
        R = N * Hp - (K - 1)
        S = np.zeros((N * Hq, R), np.float32)
        for n in range(N):
            for ii in range(Hq):
                S[n * Hq + ii, n * Hp + 2 * ii] = 1.0
        return S

    def col_sel(Wc, Wq, O):
        """(Wc*O, Wq*O) selector: output col jj*O+o <- col (2*jj)*O+o (stride-2 pool centers)."""
        S = np.zeros((Wc * O, Wq * O), np.float32)
        for jj in range(Wq):
            for o in range(O):
                S[(2 * jj) * O + o, jj * O + o] = 1.0
        return S

    # fc1: drop the transpose/flatten glue by permuting weight rows from torch's (o, ii, jj) flatten
    # order into the kernel's (ii, jj*50+o) feature layout (free at init).
    w1main = wf1[:O2 * HQ2 * WQ2, :].reshape(O2, HQ2, WQ2, 100)
    w1blk = np.transpose(w1main, (1, 2, 0, 3)).reshape(HQ2, WQ2 * O2, 100)

    b16, f32 = jnp.bfloat16, jnp.float32
    return {
        # conv stage 1
        "t1": jnp.asarray(toeplitz(w1, C1, O1, WC1), b16),            # (5, 30, 130)
        "b1row": jnp.asarray(np.tile(b1, WC1).reshape(1, WC1 * O1), f32),
        "rm1": jnp.asarray(row_mask(HP1, HC1), f32),
        "rs1": jnp.asarray(row_sel(HP1, HQ1), b16),
        "cs1": jnp.asarray(col_sel(WC1, WQ1, O1), b16),
        # conv stage 2
        "t2": jnp.asarray(toeplitz(w2, C2, O2, WC2), b16),            # (5, 65, 450)
        "b2row": jnp.asarray(np.tile(b2, WC2).reshape(1, WC2 * O2), f32),
        "rm2": jnp.asarray(row_mask(HP2, HC2), f32),
        "rs2": jnp.asarray(row_sel(HP2, HQ2), b16),
        "cs2": jnp.asarray(col_sel(WC2, WQ2, O2), b16),
        # FC head (Y-rows split out at init; fc1 rows permuted to the kernel feature order)
        "w1blk": jnp.asarray(w1blk, b16),                              # (5, 250, 100)
        "w1y": jnp.asarray(wf1[-1:, :], f32),
        "bf1": jnp.asarray(bf1.reshape(1, 100), f32),
        "w2m": jnp.asarray(wf2[:100, :], b16),
        "w2y": jnp.asarray(wf2[100:, :], f32),
        "bf2": jnp.asarray(bf2.reshape(1, 50), f32),
        "w3m": jnp.asarray(wf3[:50, :], b16),
        "w3y": jnp.asarray(wf3[50:, :], f32),
        "bf3": jnp.asarray(bf3.reshape(1, 1), f32),
    }


# ----------------------------------------------------------------------------
# Forward pass (mirrors CNN.forward) — one pallas_call, wrapper does only free bitcast reshapes
# ----------------------------------------------------------------------------
def cnn_forward(params, X, Y):
    N = X.shape[0]
    assert X.shape[1:] == (1, H_IN, W_IN), X.shape
    assert params["rm1"].shape[0] == N * HP1 - (K - 1), "params built for a different batch size"

    x2d = X.astype(jnp.float32).reshape(N * H_IN, W_IN)    # contiguous reshape -> free bitcast
    y_col = Y.astype(jnp.float32).reshape(N, 1)            # Y.view(-1, 1)

    args = (x2d, y_col,
            params["t1"], params["b1row"], params["rm1"], params["rs1"], params["cs1"],
            params["t2"], params["b2row"], params["rm2"], params["rs2"], params["cs2"],
            params["w1blk"], params["w1y"], params["bf1"],
            params["w2m"], params["w2y"], params["bf2"],
            params["w3m"], params["w3y"], params["bf3"])
    vmem = pl.BlockSpec(memory_space=pltpu.MemorySpace.VMEM)
    return pl.pallas_call(
        _make_cnn_kernel(N),
        out_shape=jax.ShapeDtypeStruct((N, 1), jnp.float32),
        in_specs=[vmem] * len(args),
        out_specs=vmem,
        scratch_shapes=[pltpu.VMEM((N * HP1, WP1), jnp.float32)],   # zero-padded (X + Y)
    )(*args)


if __name__ == "__main__":
    key = jax.random.PRNGKey(0)
    kp, kx, kyy = jax.random.split(key, 3)

    params = init_params(kp, N=2)
    # fc1 hard-codes 50*5*5 flattened conv features -> 28x28 single-channel input.
    X = jax.random.normal(kx, (2, 1, 28, 28), dtype=jnp.float32)
    Y = jax.random.normal(kyy, (2,), dtype=jnp.float32)

    out = jax.block_until_ready(jax.jit(cnn_forward)(params, X, Y))
    assert out.shape == (2, 1), out.shape
    assert bool(jnp.all(jnp.isfinite(out)))
    print("KERNEL_OK")
</pallas_src>

<mosaic_0001>
module attributes {stable_mosaic.version = 11 : i64} {
  func.func @kernel(%arg0: memref<56x28xf32, #tpu.memory_space<vmem>>, %arg1: memref<2x1xf32, #tpu.memory_space<vmem>>, %arg2: memref<5x30x130xbf16, #tpu.memory_space<vmem>>, %arg3: memref<1x130xf32, #tpu.memory_space<vmem>>, %arg4: memref<56x1xf32, #tpu.memory_space<vmem>>, %arg5: memref<26x56xbf16, #tpu.memory_space<vmem>>, %arg6: memref<130x65xbf16, #tpu.memory_space<vmem>>, %arg7: memref<5x65x450xbf16, #tpu.memory_space<vmem>>, %arg8: memref<1x450xf32, #tpu.memory_space<vmem>>, %arg9: memref<22x1xf32, #tpu.memory_space<vmem>>, %arg10: memref<10x22xbf16, #tpu.memory_space<vmem>>, %arg11: memref<450x250xbf16, #tpu.memory_space<vmem>>, %arg12: memref<5x250x100xbf16, #tpu.memory_space<vmem>>, %arg13: memref<1x100xf32, #tpu.memory_space<vmem>>, %arg14: memref<1x100xf32, #tpu.memory_space<vmem>>, %arg15: memref<100x50xbf16, #tpu.memory_space<vmem>>, %arg16: memref<1x50xf32, #tpu.memory_space<vmem>>, %arg17: memref<1x50xf32, #tpu.memory_space<vmem>>, %arg18: memref<50x1xbf16, #tpu.memory_space<vmem>>, %arg19: memref<1x1xf32, #tpu.memory_space<vmem>>, %arg20: memref<1x1xf32, #tpu.memory_space<vmem>>, %arg21: memref<2x1xf32, #tpu.memory_space<vmem>>, %arg22: memref<60x30xf32, #tpu.memory_space<vmem>>) attributes {dimension_semantics = [], scalar_prefetch = 0 : i64, scratch_operands = 1 : i64, tpu.core_type = #tpu.core_type<tc>} {
    %c0 = arith.constant 0 : index
    %c0_0 = arith.constant 0 : index
    %0 = vector.load %arg1[%c0, %c0_0] : memref<2x1xf32, #tpu.memory_space<vmem>>, vector<2x1xf32>
    %cst = arith.constant 0.000000e+00 : f32
    %1 = vector.broadcast %cst : f32 to vector<60x30xf32>
    %c0_1 = arith.constant 0 : index
    %c0_2 = arith.constant 0 : index
    %2 = vector.load %arg22[%c0_1, %c0_2] : memref<60x30xf32, #tpu.memory_space<vmem>>, vector<60x30xf32>
    tpu.vector_store %arg22[%c0_1, %c0_2], %1 {strides = array<i32>} : memref<60x30xf32, #tpu.memory_space<vmem>>, vector<60x30xf32>,
    %c0_3 = arith.constant 0 : index
    %c0_4 = arith.constant 0 : index
    %3 = vector.load %arg0[%c0_3, %c0_4] : memref<56x28xf32, #tpu.memory_space<vmem>>, vector<28x28xf32>
    %4 = vector.extract_strided_slice %0 {offsets = [0, 0], sizes = [1, 1], strides = [1, 1]} : vector<2x1xf32> to vector<1x1xf32>
    %5 = vector.broadcast %4 : vector<1x1xf32> to vector<28x28xf32>
    %6 = arith.addf %3, %5 : vector<28x28xf32>
    %c1 = arith.constant 1 : index
    %c1_5 = arith.constant 1 : index
    %7 = vector.load %arg22[%c1, %c1_5] : memref<60x30xf32, #tpu.memory_space<vmem>>, vector<28x28xf32>
    tpu.vector_store %arg22[%c1, %c1_5], %6 {strides = array<i32>} : memref<60x30xf32, #tpu.memory_space<vmem>>, vector<28x28xf32>,
    %c28 = arith.constant 28 : index
    %c0_6 = arith.constant 0 : index
    %8 = vector.load %arg0[%c28, %c0_6] : memref<56x28xf32, #tpu.memory_space<vmem>>, vector<28x28xf32>
    %9 = vector.extract_strided_slice %0 {offsets = [1, 0], sizes = [1, 1], strides = [1, 1]} : vector<2x1xf32> to vector<1x1xf32>
    %10 = vector.broadcast %9 : vector<1x1xf32> to vector<28x28xf32>
    %11 = arith.addf %8, %10 : vector<28x28xf32>
    %c31 = arith.constant 31 : index
    %c1_7 = arith.constant 1 : index
    %12 = vector.load %arg22[%c31, %c1_7] : memref<60x30xf32, #tpu.memory_space<vmem>>, vector<28x28xf32>
    tpu.vector_store %arg22[%c31, %c1_7], %11 {strides = array<i32>} : memref<60x30xf32, #tpu.memory_space<vmem>>, vector<28x28xf32>,
    %c0_8 = arith.constant 0 : index
    %c0_9 = arith.constant 0 : index
    %13 = vector.load %arg22[%c0_8, %c0_9] : memref<60x30xf32, #tpu.memory_space<vmem>>, vector<60x30xf32>
    %14 = arith.truncf %13 : vector<60x30xf32> to vector<60x30xbf16>
    %15 = vector.extract_strided_slice %14 {offsets = [0, 0], sizes = [56, 30], strides = [1, 1]} : vector<60x30xbf16> to vector<56x30xbf16>
    %c0_10 = arith.constant 0 : index
    %c0_11 = arith.constant 0 : index
    %c0_12 = arith.constant 0 : index
    %16 = vector.load %arg2[%c0_10, %c0_11, %c0_12] : memref<5x30x130xbf16, #tpu.memory_space<vmem>>, vector<1x30x130xbf16>
    %17 = vector.shape_cast %16 : vector<1x30x130xbf16> to vector<30x130xbf16>
    %cst_13 = arith.constant dense<0.000000e+00> : vector<56x130xf32>
    %18 = tpu.matmul %15, %17, %cst_13 {dimension_numbers = #tpu.dot_dimension_numbers<[1], [0], [0], [1], [0, 0, 1, 1], [], []>} : vector<56x30xbf16>, vector<30x130xbf16>, vector<56x130xf32> -> vector<56x130xf32>
    %19 = vector.extract_strided_slice %14 {offsets = [1, 0], sizes = [56, 30], strides = [1, 1]} : vector<60x30xbf16> to vector<56x30xbf16>
    %c1_14 = arith.constant 1 : index
    %c0_15 = arith.constant 0 : index
    %c0_16 = arith.constant 0 : index
    %20 = vector.load %arg2[%c1_14, %c0_15, %c0_16] : memref<5x30x130xbf16, #tpu.memory_space<vmem>>, vector<1x30x130xbf16>
    %21 = vector.shape_cast %20 : vector<1x30x130xbf16> to vector<30x130xbf16>
    %cst_17 = arith.constant dense<0.000000e+00> : vector<56x130xf32>
    %22 = tpu.matmul %19, %21, %cst_17 {dimension_numbers = #tpu.dot_dimension_numbers<[1], [0], [0], [1], [0, 0, 1, 1], [], []>} : vector<56x30xbf16>, vector<30x130xbf16>, vector<56x130xf32> -> vector<56x130xf32>
    %23 = arith.addf %18, %22 : vector<56x130xf32>
    %24 = vector.extract_strided_slice %14 {offsets = [2, 0], sizes = [56, 30], strides = [1, 1]} : vector<60x30xbf16> to vector<56x30xbf16>
    %c2 = arith.constant 2 : index
    %c0_18 = arith.constant 0 : index
    %c0_19 = arith.constant 0 : index
    %25 = vector.load %arg2[%c2, %c0_18, %c0_19] : memref<5x30x130xbf16, #tpu.memory_space<vmem>>, vector<1x30x130xbf16>
    %26 = vector.shape_cast %25 : vector<1x30x130xbf16> to vector<30x130xbf16>
    %cst_20 = arith.constant dense<0.000000e+00> : vector<56x130xf32>
    %27 = tpu.matmul %24, %26, %cst_20 {dimension_numbers = #tpu.dot_dimension_numbers<[1], [0], [0], [1], [0, 0, 1, 1], [], []>} : vector<56x30xbf16>, vector<30x130xbf16>, vector<56x130xf32> -> vector<56x130xf32>
    %28 = arith.addf %23, %27 : vector<56x130xf32>
    %29 = vector.extract_strided_slice %14 {offsets = [3, 0], sizes = [56, 30], strides = [1, 1]} : vector<60x30xbf16> to vector<56x30xbf16>
    %c3 = arith.constant 3 : index
    %c0_21 = arith.constant 0 : index
    %c0_22 = arith.constant 0 : index
    %30 = vector.load %arg2[%c3, %c0_21, %c0_22] : memref<5x30x130xbf16, #tpu.memory_space<vmem>>, vector<1x30x130xbf16>
    %31 = vector.shape_cast %30 : vector<1x30x130xbf16> to vector<30x130xbf16>
    %cst_23 = arith.constant dense<0.000000e+00> : vector<56x130xf32>
    %32 = tpu.matmul %29, %31, %cst_23 {dimension_numbers = #tpu.dot_dimension_numbers<[1], [0], [0], [1], [0, 0, 1, 1], [], []>} : vector<56x30xbf16>, vector<30x130xbf16>, vector<56x130xf32> -> vector<56x130xf32>
    %33 = arith.addf %28, %32 : vector<56x130xf32>
    %34 = vector.extract_strided_slice %14 {offsets = [4, 0], sizes = [56, 30], strides = [1, 1]} : vector<60x30xbf16> to vector<56x30xbf16>
    %c4 = arith.constant 4 : index
    %c0_24 = arith.constant 0 : index
    %c0_25 = arith.constant 0 : index
    %35 = vector.load %arg2[%c4, %c0_24, %c0_25] : memref<5x30x130xbf16, #tpu.memory_space<vmem>>, vector<1x30x130xbf16>
    %36 = vector.shape_cast %35 : vector<1x30x130xbf16> to vector<30x130xbf16>
    %cst_26 = arith.constant dense<0.000000e+00> : vector<56x130xf32>
    %37 = tpu.matmul %34, %36, %cst_26 {dimension_numbers = #tpu.dot_dimension_numbers<[1], [0], [0], [1], [0, 0, 1, 1], [], []>} : vector<56x30xbf16>, vector<30x130xbf16>, vector<56x130xf32> -> vector<56x130xf32>
    %38 = arith.addf %33, %37 : vector<56x130xf32>
    %c0_27 = arith.constant 0 : index
    %c0_28 = arith.constant 0 : index
    %39 = vector.load %arg3[%c0_27, %c0_28] : memref<1x130xf32, #tpu.memory_space<vmem>>, vector<1x130xf32>
    %40 = vector.broadcast %39 : vector<1x130xf32> to vector<56x130xf32>
    %41 = arith.addf %38, %40 : vector<56x130xf32>
    %c0_29 = arith.constant 0 : index
    %c0_30 = arith.constant 0 : index
    %42 = vector.load %arg4[%c0_29, %c0_30] : memref<56x1xf32, #tpu.memory_space<vmem>>, vector<56x1xf32>
    %43 = vector.broadcast %42 : vector<56x1xf32> to vector<56x130xf32>
    %44 = arith.addf %41, %43 : vector<56x130xf32>
    %cst_31 = arith.constant -1.000000e+30 : f32
    %45 = vector.broadcast %cst_31 : f32 to vector<2x130xf32>
    %46 = tpu.concatenate %45, %44, %45 in 0 : vector<2x130xf32>, vector<56x130xf32>, vector<2x130xf32> -> vector<60x130xf32>
    %47 = vector.extract_strided_slice %46 {offsets = [0, 0], sizes = [56, 130], strides = [1, 1]} : vector<60x130xf32> to vector<56x130xf32>
    %48 = vector.extract_strided_slice %46 {offsets = [1, 0], sizes = [56, 130], strides = [1, 1]} : vector<60x130xf32> to vector<56x130xf32>
    %49 = arith.maximumf %47, %48 : vector<56x130xf32>
    %50 = vector.extract_strided_slice %46 {offsets = [2, 0], sizes = [56, 130], strides = [1, 1]} : vector<60x130xf32> to vector<56x130xf32>
    %51 = arith.maximumf %49, %50 : vector<56x130xf32>
    %52 = vector.extract_strided_slice %46 {offsets = [3, 0], sizes = [56, 130], strides = [1, 1]} : vector<60x130xf32> to vector<56x130xf32>
    %53 = arith.maximumf %51, %52 : vector<56x130xf32>
    %54 = vector.extract_strided_slice %46 {offsets = [4, 0], sizes = [56, 130], strides = [1, 1]} : vector<60x130xf32> to vector<56x130xf32>
    %55 = arith.maximumf %53, %54 : vector<56x130xf32>
    %cst_32 = arith.constant -1.000000e+30 : f32
    %56 = vector.broadcast %cst_32 : f32 to vector<56x10xf32>
    %57 = tpu.concatenate %56, %55, %56 in 1 : vector<56x10xf32>, vector<56x130xf32>, vector<56x10xf32> -> vector<56x150xf32>
    %58 = vector.extract_strided_slice %57 {offsets = [0, 0], sizes = [56, 130], strides = [1, 1]} : vector<56x150xf32> to vector<56x130xf32>
    %59 = vector.extract_strided_slice %57 {offsets = [0, 5], sizes = [56, 130], strides = [1, 1]} : vector<56x150xf32> to vector<56x130xf32>
    %60 = arith.maximumf %58, %59 : vector<56x130xf32>
    %61 = vector.extract_strided_slice %57 {offsets = [0, 10], sizes = [56, 130], strides = [1, 1]} : vector<56x150xf32> to vector<56x130xf32>
    %62 = arith.maximumf %60, %61 : vector<56x130xf32>
    %63 = vector.extract_strided_slice %57 {offsets = [0, 15], sizes = [56, 130], strides = [1, 1]} : vector<56x150xf32> to vector<56x130xf32>
    %64 = arith.maximumf %62, %63 : vector<56x130xf32>
    %65 = vector.extract_strided_slice %57 {offsets = [0, 20], sizes = [56, 130], strides = [1, 1]} : vector<56x150xf32> to vector<56x130xf32>
    %66 = arith.maximumf %64, %65 : vector<56x130xf32>
    %cst_33 = arith.constant 0.000000e+00 : f32
    %cst_34 = arith.constant 6.000000e+00 : f32
    %67 = vector.broadcast %cst_33 : f32 to vector<56x130xf32>
    %68 = arith.maximumf %67, %66 : vector<56x130xf32>
    %69 = vector.broadcast %cst_34 : f32 to vector<56x130xf32>
    %70 = arith.minimumf %69, %68 : vector<56x130xf32>
    %c0_35 = arith.constant 0 : index
    %c0_36 = arith.constant 0 : index
    %71 = vector.load %arg5[%c0_35, %c0_36] : memref<26x56xbf16, #tpu.memory_space<vmem>>, vector<26x56xbf16>
    %72 = arith.truncf %70 : vector<56x130xf32> to vector<56x130xbf16>
    %cst_37 = arith.constant dense<0.000000e+00> : vector<26x130xf32>
    %73 = tpu.matmul %71, %72, %cst_37 {dimension_numbers = #tpu.dot_dimension_numbers<[1], [0], [0], [1], [0, 0, 1, 1], [], []>} : vector<26x56xbf16>, vector<56x130xbf16>, vector<26x130xf32> -> vector<26x130xf32>
    %74 = arith.truncf %73 : vector<26x130xf32> to vector<26x130xbf16>
    %c0_38 = arith.constant 0 : index
    %c0_39 = arith.constant 0 : index
    %75 = vector.load %arg6[%c0_38, %c0_39] : memref<130x65xbf16, #tpu.memory_space<vmem>>, vector<130x65xbf16>
    %cst_40 = arith.constant dense<0.000000e+00> : vector<26x65xf32>
    %76 = tpu.matmul %74, %75, %cst_40 {dimension_numbers = #tpu.dot_dimension_numbers<[1], [0], [0], [1], [0, 0, 1, 1], [], []>} : vector<26x130xbf16>, vector<130x65xbf16>, vector<26x65xf32> -> vector<26x65xf32>
    %cst_41 = arith.constant 0.000000e+00 : f32
    %77 = vector.broadcast %cst_41 : f32 to vector<13x65xf32>
    %78 = vector.extract_strided_slice %0 {offsets = [0, 0], sizes = [1, 1], strides = [1, 1]} : vector<2x1xf32> to vector<1x1xf32>
    %79 = vector.broadcast %78 : vector<1x1xf32> to vector<13x65xf32>
    %80 = arith.addf %77, %79 : vector<13x65xf32>
    %cst_42 = arith.constant 0.000000e+00 : f32
    %81 = vector.broadcast %cst_42 : f32 to vector<13x65xf32>
    %82 = vector.extract_strided_slice %0 {offsets = [1, 0], sizes = [1, 1], strides = [1, 1]} : vector<2x1xf32> to vector<1x1xf32>
    %83 = vector.broadcast %82 : vector<1x1xf32> to vector<13x65xf32>
    %84 = arith.addf %81, %83 : vector<13x65xf32>
    %85 = tpu.concatenate %80, %84 in 0 : vector<13x65xf32>, vector<13x65xf32> -> vector<26x65xf32>
    %86 = arith.addf %76, %85 : vector<26x65xf32>
    %87 = arith.truncf %86 : vector<26x65xf32> to vector<26x65xbf16>
    %88 = vector.extract_strided_slice %87 {offsets = [0, 0], sizes = [22, 65], strides = [1, 1]} : vector<26x65xbf16> to vector<22x65xbf16>
    %c0_43 = arith.constant 0 : index
    %c0_44 = arith.constant 0 : index
    %c0_45 = arith.constant 0 : index
    %89 = vector.load %arg7[%c0_43, %c0_44, %c0_45] : memref<5x65x450xbf16, #tpu.memory_space<vmem>>, vector<1x65x450xbf16>
    %90 = vector.shape_cast %89 : vector<1x65x450xbf16> to vector<65x450xbf16>
    %cst_46 = arith.constant dense<0.000000e+00> : vector<22x450xf32>
    %91 = tpu.matmul %88, %90, %cst_46 {dimension_numbers = #tpu.dot_dimension_numbers<[1], [0], [0], [1], [0, 0, 1, 1], [], []>} : vector<22x65xbf16>, vector<65x450xbf16>, vector<22x450xf32> -> vector<22x450xf32>
    %92 = vector.extract_strided_slice %87 {offsets = [1, 0], sizes = [22, 65], strides = [1, 1]} : vector<26x65xbf16> to vector<22x65xbf16>
    %c1_47 = arith.constant 1 : index
    %c0_48 = arith.constant 0 : index
    %c0_49 = arith.constant 0 : index
    %93 = vector.load %arg7[%c1_47, %c0_48, %c0_49] : memref<5x65x450xbf16, #tpu.memory_space<vmem>>, vector<1x65x450xbf16>
    %94 = vector.shape_cast %93 : vector<1x65x450xbf16> to vector<65x450xbf16>
    %cst_50 = arith.constant dense<0.000000e+00> : vector<22x450xf32>
    %95 = tpu.matmul %92, %94, %cst_50 {dimension_numbers = #tpu.dot_dimension_numbers<[1], [0], [0], [1], [0, 0, 1, 1], [], []>} : vector<22x65xbf16>, vector<65x450xbf16>, vector<22x450xf32> -> vector<22x450xf32>
    %96 = arith.addf %91, %95 : vector<22x450xf32>
    %97 = vector.extract_strided_slice %87 {offsets = [2, 0], sizes = [22, 65], strides = [1, 1]} : vector<26x65xbf16> to vector<22x65xbf16>
    %c2_51 = arith.constant 2 : index
    %c0_52 = arith.constant 0 : index
    %c0_53 = arith.constant 0 : index
    %98 = vector.load %arg7[%c2_51, %c0_52, %c0_53] : memref<5x65x450xbf16, #tpu.memory_space<vmem>>, vector<1x65x450xbf16>
    %99 = vector.shape_cast %98 : vector<1x65x450xbf16> to vector<65x450xbf16>
    %cst_54 = arith.constant dense<0.000000e+00> : vector<22x450xf32>
    %100 = tpu.matmul %97, %99, %cst_54 {dimension_numbers = #tpu.dot_dimension_numbers<[1], [0], [0], [1], [0, 0, 1, 1], [], []>} : vector<22x65xbf16>, vector<65x450xbf16>, vector<22x450xf32> -> vector<22x450xf32>
    %101 = arith.addf %96, %100 : vector<22x450xf32>
    %102 = vector.extract_strided_slice %87 {offsets = [3, 0], sizes = [22, 65], strides = [1, 1]} : vector<26x65xbf16> to vector<22x65xbf16>
    %c3_55 = arith.constant 3 : index
    %c0_56 = arith.constant 0 : index
    %c0_57 = arith.constant 0 : index
    %103 = vector.load %arg7[%c3_55, %c0_56, %c0_57] : memref<5x65x450xbf16, #tpu.memory_space<vmem>>, vector<1x65x450xbf16>
    %104 = vector.shape_cast %103 : vector<1x65x450xbf16> to vector<65x450xbf16>
    %cst_58 = arith.constant dense<0.000000e+00> : vector<22x450xf32>
    %105 = tpu.matmul %102, %104, %cst_58 {dimension_numbers = #tpu.dot_dimension_numbers<[1], [0], [0], [1], [0, 0, 1, 1], [], []>} : vector<22x65xbf16>, vector<65x450xbf16>, vector<22x450xf32> -> vector<22x450xf32>
    %106 = arith.addf %101, %105 : vector<22x450xf32>
    %107 = vector.extract_strided_slice %87 {offsets = [4, 0], sizes = [22, 65], strides = [1, 1]} : vector<26x65xbf16> to vector<22x65xbf16>
    %c4_59 = arith.constant 4 : index
    %c0_60 = arith.constant 0 : index
    %c0_61 = arith.constant 0 : index
    %108 = vector.load %arg7[%c4_59, %c0_60, %c0_61] : memref<5x65x450xbf16, #tpu.memory_space<vmem>>, vector<1x65x450xbf16>
    %109 = vector.shape_cast %108 : vector<1x65x450xbf16> to vector<65x450xbf16>
    %cst_62 = arith.constant dense<0.000000e+00> : vector<22x450xf32>
    %110 = tpu.matmul %107, %109, %cst_62 {dimension_numbers = #tpu.dot_dimension_numbers<[1], [0], [0], [1], [0, 0, 1, 1], [], []>} : vector<22x65xbf16>, vector<65x450xbf16>, vector<22x450xf32> -> vector<22x450xf32>
    %111 = arith.addf %106, %110 : vector<22x450xf32>
    %c0_63 = arith.constant 0 : index
    %c0_64 = arith.constant 0 : index
    %112 = vector.load %arg8[%c0_63, %c0_64] : memref<1x450xf32, #tpu.memory_space<vmem>>, vector<1x450xf32>
    %113 = vector.broadcast %112 : vector<1x450xf32> to vector<22x450xf32>
    %114 = arith.addf %111, %113 : vector<22x450xf32>
    %c0_65 = arith.constant 0 : index
    %c0_66 = arith.constant 0 : index
    %115 = vector.load %arg9[%c0_65, %c0_66] : memref<22x1xf32, #tpu.memory_space<vmem>>, vector<22x1xf32>
    %116 = vector.broadcast %115 : vector<22x1xf32> to vector<22x450xf32>
    %117 = arith.addf %114, %116 : vector<22x450xf32>
    %cst_67 = arith.constant -1.000000e+30 : f32
    %118 = vector.broadcast %cst_67 : f32 to vector<2x450xf32>
    %119 = tpu.concatenate %118, %117, %118 in 0 : vector<2x450xf32>, vector<22x450xf32>, vector<2x450xf32> -> vector<26x450xf32>
    %120 = vector.extract_strided_slice %119 {offsets = [0, 0], sizes = [22, 450], strides = [1, 1]} : vector<26x450xf32> to vector<22x450xf32>
    %121 = vector.extract_strided_slice %119 {offsets = [1, 0], sizes = [22, 450], strides = [1, 1]} : vector<26x450xf32> to vector<22x450xf32>
    %122 = arith.maximumf %120, %121 : vector<22x450xf32>
    %123 = vector.extract_strided_slice %119 {offsets = [2, 0], sizes = [22, 450], strides = [1, 1]} : vector<26x450xf32> to vector<22x450xf32>
    %124 = arith.maximumf %122, %123 : vector<22x450xf32>
    %125 = vector.extract_strided_slice %119 {offsets = [3, 0], sizes = [22, 450], strides = [1, 1]} : vector<26x450xf32> to vector<22x450xf32>
    %126 = arith.maximumf %124, %125 : vector<22x450xf32>
    %127 = vector.extract_strided_slice %119 {offsets = [4, 0], sizes = [22, 450], strides = [1, 1]} : vector<26x450xf32> to vector<22x450xf32>
    %128 = arith.maximumf %126, %127 : vector<22x450xf32>
    %cst_68 = arith.constant -1.000000e+30 : f32
    %129 = vector.broadcast %cst_68 : f32 to vector<22x100xf32>
    %130 = tpu.concatenate %129, %128, %129 in 1 : vector<22x100xf32>, vector<22x450xf32>, vector<22x100xf32> -> vector<22x650xf32>
    %131 = vector.extract_strided_slice %130 {offsets = [0, 0], sizes = [22, 450], strides = [1, 1]} : vector<22x650xf32> to vector<22x450xf32>
    %132 = vector.extract_strided_slice %130 {offsets = [0, 50], sizes = [22, 450], strides = [1, 1]} : vector<22x650xf32> to vector<22x450xf32>
    %133 = arith.maximumf %131, %132 : vector<22x450xf32>
    %134 = vector.extract_strided_slice %130 {offsets = [0, 100], sizes = [22, 450], strides = [1, 1]} : vector<22x650xf32> to vector<22x450xf32>
    %135 = arith.maximumf %133, %134 : vector<22x450xf32>
    %136 = vector.extract_strided_slice %130 {offsets = [0, 150], sizes = [22, 450], strides = [1, 1]} : vector<22x650xf32> to vector<22x450xf32>
    %137 = arith.maximumf %135, %136 : vector<22x450xf32>
    %138 = vector.extract_strided_slice %130 {offsets = [0, 200], sizes = [22, 450], strides = [1, 1]} : vector<22x650xf32> to vector<22x450xf32>
    %139 = arith.maximumf %137, %138 : vector<22x450xf32>
    %cst_69 = arith.constant 0.000000e+00 : f32
    %cst_70 = arith.constant 6.000000e+00 : f32
    %140 = vector.broadcast %cst_69 : f32 to vector<22x450xf32>
    %141 = arith.maximumf %140, %139 : vector<22x450xf32>
    %142 = vector.broadcast %cst_70 : f32 to vector<22x450xf32>
    %143 = arith.minimumf %142, %141 : vector<22x450xf32>
    %c0_71 = arith.constant 0 : index
    %c0_72 = arith.constant 0 : index
    %144 = vector.load %arg10[%c0_71, %c0_72] : memref<10x22xbf16, #tpu.memory_space<vmem>>, vector<10x22xbf16>
    %145 = arith.truncf %143 : vector<22x450xf32> to vector<22x450xbf16>
    %cst_73 = arith.constant dense<0.000000e+00> : vector<10x450xf32>
    %146 = tpu.matmul %144, %145, %cst_73 {dimension_numbers = #tpu.dot_dimension_numbers<[1], [0], [0], [1], [0, 0, 1, 1], [], []>} : vector<10x22xbf16>, vector<22x450xbf16>, vector<10x450xf32> -> vector<10x450xf32>
    %147 = arith.truncf %146 : vector<10x450xf32> to vector<10x450xbf16>
    %c0_74 = arith.constant 0 : index
    %c0_75 = arith.constant 0 : index
    %148 = vector.load %arg11[%c0_74, %c0_75] : memref<450x250xbf16, #tpu.memory_space<vmem>>, vector<450x250xbf16>
    %cst_76 = arith.constant dense<0.000000e+00> : vector<10x250xf32>
    %149 = tpu.matmul %147, %148, %cst_76 {dimension_numbers = #tpu.dot_dimension_numbers<[1], [0], [0], [1], [0, 0, 1, 1], [], []>} : vector<10x450xbf16>, vector<450x250xbf16>, vector<10x250xf32> -> vector<10x250xf32>
    %150 = arith.truncf %149 : vector<10x250xf32> to vector<10x250xbf16>
    %c0_77 = arith.constant 0 : index
    %c0_78 = arith.constant 0 : index
    %151 = vector.load %arg14[%c0_77, %c0_78] : memref<1x100xf32, #tpu.memory_space<vmem>>, vector<1x100xf32>
    %c0_79 = arith.constant 0 : index
    %c0_80 = arith.constant 0 : index
    %152 = vector.load %arg13[%c0_79, %c0_80] : memref<1x100xf32, #tpu.memory_space<vmem>>, vector<1x100xf32>
    %153 = vector.broadcast %0 : vector<2x1xf32> to vector<2x100xf32>
    %154 = vector.broadcast %152 : vector<1x100xf32> to vector<2x100xf32>
    %155 = arith.mulf %153, %154 : vector<2x100xf32>
    %156 = vector.broadcast %151 : vector<1x100xf32> to vector<2x100xf32>
    %157 = arith.addf %156, %155 : vector<2x100xf32>
    %158 = vector.extract_strided_slice %150 {offsets = [0, 0], sizes = [1, 250], strides = [1, 1]} : vector<10x250xbf16> to vector<1x250xbf16>
    %159 = vector.extract_strided_slice %150 {offsets = [5, 0], sizes = [1, 250], strides = [1, 1]} : vector<10x250xbf16> to vector<1x250xbf16>
    %160 = tpu.concatenate %158, %159 in 0 : vector<1x250xbf16>, vector<1x250xbf16> -> vector<2x250xbf16>
    %c0_81 = arith.constant 0 : index
    %c0_82 = arith.constant 0 : index
    %c0_83 = arith.constant 0 : index
    %161 = vector.load %arg12[%c0_81, %c0_82, %c0_83] : memref<5x250x100xbf16, #tpu.memory_space<vmem>>, vector<1x250x100xbf16>
    %162 = vector.shape_cast %161 : vector<1x250x100xbf16> to vector<250x100xbf16>
    %cst_84 = arith.constant dense<0.000000e+00> : vector<2x100xf32>
    %163 = tpu.matmul %160, %162, %cst_84 {dimension_numbers = #tpu.dot_dimension_numbers<[1], [0], [0], [1], [0, 0, 1, 1], [], []>} : vector<2x250xbf16>, vector<250x100xbf16>, vector<2x100xf32> -> vector<2x100xf32>
    %164 = arith.addf %157, %163 : vector<2x100xf32>
    %165 = vector.extract_strided_slice %150 {offsets = [1, 0], sizes = [1, 250], strides = [1, 1]} : vector<10x250xbf16> to vector<1x250xbf16>
    %166 = vector.extract_strided_slice %150 {offsets = [6, 0], sizes = [1, 250], strides = [1, 1]} : vector<10x250xbf16> to vector<1x250xbf16>
    %167 = tpu.concatenate %165, %166 in 0 : vector<1x250xbf16>, vector<1x250xbf16> -> vector<2x250xbf16>
    %c1_85 = arith.constant 1 : index
    %c0_86 = arith.constant 0 : index
    %c0_87 = arith.constant 0 : index
    %168 = vector.load %arg12[%c1_85, %c0_86, %c0_87] : memref<5x250x100xbf16, #tpu.memory_space<vmem>>, vector<1x250x100xbf16>
    %169 = vector.shape_cast %168 : vector<1x250x100xbf16> to vector<250x100xbf16>
    %cst_88 = arith.constant dense<0.000000e+00> : vector<2x100xf32>
    %170 = tpu.matmul %167, %169, %cst_88 {dimension_numbers = #tpu.dot_dimension_numbers<[1], [0], [0], [1], [0, 0, 1, 1], [], []>} : vector<2x250xbf16>, vector<250x100xbf16>, vector<2x100xf32> -> vector<2x100xf32>
    %171 = arith.addf %164, %170 : vector<2x100xf32>
    %172 = vector.extract_strided_slice %150 {offsets = [2, 0], sizes = [1, 250], strides = [1, 1]} : vector<10x250xbf16> to vector<1x250xbf16>
    %173 = vector.extract_strided_slice %150 {offsets = [7, 0], sizes = [1, 250], strides = [1, 1]} : vector<10x250xbf16> to vector<1x250xbf16>
    %174 = tpu.concatenate %172, %173 in 0 : vector<1x250xbf16>, vector<1x250xbf16> -> vector<2x250xbf16>
    %c2_89 = arith.constant 2 : index
    %c0_90 = arith.constant 0 : index
    %c0_91 = arith.constant 0 : index
    %175 = vector.load %arg12[%c2_89, %c0_90, %c0_91] : memref<5x250x100xbf16, #tpu.memory_space<vmem>>, vector<1x250x100xbf16>
    %176 = vector.shape_cast %175 : vector<1x250x100xbf16> to vector<250x100xbf16>
    %cst_92 = arith.constant dense<0.000000e+00> : vector<2x100xf32>
    %177 = tpu.matmul %174, %176, %cst_92 {dimension_numbers = #tpu.dot_dimension_numbers<[1], [0], [0], [1], [0, 0, 1, 1], [], []>} : vector<2x250xbf16>, vector<250x100xbf16>, vector<2x100xf32> -> vector<2x100xf32>
    %178 = arith.addf %171, %177 : vector<2x100xf32>
    %179 = vector.extract_strided_slice %150 {offsets = [3, 0], sizes = [1, 250], strides = [1, 1]} : vector<10x250xbf16> to vector<1x250xbf16>
    %180 = vector.extract_strided_slice %150 {offsets = [8, 0], sizes = [1, 250], strides = [1, 1]} : vector<10x250xbf16> to vector<1x250xbf16>
    %181 = tpu.concatenate %179, %180 in 0 : vector<1x250xbf16>, vector<1x250xbf16> -> vector<2x250xbf16>
    %c3_93 = arith.constant 3 : index
    %c0_94 = arith.constant 0 : index
    %c0_95 = arith.constant 0 : index
    %182 = vector.load %arg12[%c3_93, %c0_94, %c0_95] : memref<5x250x100xbf16, #tpu.memory_space<vmem>>, vector<1x250x100xbf16>
    %183 = vector.shape_cast %182 : vector<1x250x100xbf16> to vector<250x100xbf16>
    %cst_96 = arith.constant dense<0.000000e+00> : vector<2x100xf32>
    %184 = tpu.matmul %181, %183, %cst_96 {dimension_numbers = #tpu.dot_dimension_numbers<[1], [0], [0], [1], [0, 0, 1, 1], [], []>} : vector<2x250xbf16>, vector<250x100xbf16>, vector<2x100xf32> -> vector<2x100xf32>
    %185 = arith.addf %178, %184 : vector<2x100xf32>
    %186 = vector.extract_strided_slice %150 {offsets = [4, 0], sizes = [1, 250], strides = [1, 1]} : vector<10x250xbf16> to vector<1x250xbf16>
    %187 = vector.extract_strided_slice %150 {offsets = [9, 0], sizes = [1, 250], strides = [1, 1]} : vector<10x250xbf16> to vector<1x250xbf16>
    %188 = tpu.concatenate %186, %187 in 0 : vector<1x250xbf16>, vector<1x250xbf16> -> vector<2x250xbf16>
    %c4_97 = arith.constant 4 : index
    %c0_98 = arith.constant 0 : index
    %c0_99 = arith.constant 0 : index
    %189 = vector.load %arg12[%c4_97, %c0_98, %c0_99] : memref<5x250x100xbf16, #tpu.memory_space<vmem>>, vector<1x250x100xbf16>
    %190 = vector.shape_cast %189 : vector<1x250x100xbf16> to vector<250x100xbf16>
    %cst_100 = arith.constant dense<0.000000e+00> : vector<2x100xf32>
    %191 = tpu.matmul %188, %190, %cst_100 {dimension_numbers = #tpu.dot_dimension_numbers<[1], [0], [0], [1], [0, 0, 1, 1], [], []>} : vector<2x250xbf16>, vector<250x100xbf16>, vector<2x100xf32> -> vector<2x100xf32>
    %192 = arith.addf %185, %191 : vector<2x100xf32>
    %cst_101 = arith.constant 0.000000e+00 : f32
    %cst_102 = arith.constant 6.000000e+00 : f32
    %193 = vector.broadcast %cst_101 : f32 to vector<2x100xf32>
    %194 = arith.maximumf %193, %192 : vector<2x100xf32>
    %195 = vector.broadcast %cst_102 : f32 to vector<2x100xf32>
    %196 = arith.minimumf %195, %194 : vector<2x100xf32>
    %197 = arith.truncf %196 : vector<2x100xf32> to vector<2x100xbf16>
    %c0_103 = arith.constant 0 : index
    %c0_104 = arith.constant 0 : index
    %198 = vector.load %arg15[%c0_103, %c0_104] : memref<100x50xbf16, #tpu.memory_space<vmem>>, vector<100x50xbf16>
    %cst_105 = arith.constant dense<0.000000e+00> : vector<2x50xf32>
    %199 = tpu.matmul %197, %198, %cst_105 {dimension_numbers = #tpu.dot_dimension_numbers<[1], [0], [0], [1], [0, 0, 1, 1], [], []>} : vector<2x100xbf16>, vector<100x50xbf16>, vector<2x50xf32> -> vector<2x50xf32>
    %c0_106 = arith.constant 0 : index
    %c0_107 = arith.constant 0 : index
    %200 = vector.load %arg16[%c0_106, %c0_107] : memref<1x50xf32, #tpu.memory_space<vmem>>, vector<1x50xf32>
    %201 = vector.broadcast %0 : vector<2x1xf32> to vector<2x50xf32>
    %202 = vector.broadcast %200 : vector<1x50xf32> to vector<2x50xf32>
    %203 = arith.mulf %201, %202 : vector<2x50xf32>
    %204 = arith.addf %199, %203 : vector<2x50xf32>
    %c0_108 = arith.constant 0 : index
    %c0_109 = arith.constant 0 : index
    %205 = vector.load %arg17[%c0_108, %c0_109] : memref<1x50xf32, #tpu.memory_space<vmem>>, vector<1x50xf32>
    %206 = vector.broadcast %205 : vector<1x50xf32> to vector<2x50xf32>
    %207 = arith.addf %204, %206 : vector<2x50xf32>
    %cst_110 = arith.constant 0.000000e+00 : f32
    %cst_111 = arith.constant 6.000000e+00 : f32
    %208 = vector.broadcast %cst_110 : f32 to vector<2x50xf32>
    %209 = arith.maximumf %208, %207 : vector<2x50xf32>
    %210 = vector.broadcast %cst_111 : f32 to vector<2x50xf32>
    %211 = arith.minimumf %210, %209 : vector<2x50xf32>
    %212 = arith.truncf %211 : vector<2x50xf32> to vector<2x50xbf16>
    %c0_112 = arith.constant 0 : index
    %c0_113 = arith.constant 0 : index
    %213 = vector.load %arg18[%c0_112, %c0_113] : memref<50x1xbf16, #tpu.memory_space<vmem>>, vector<50x1xbf16>
    %cst_114 = arith.constant dense<0.000000e+00> : vector<2x1xf32>
    %214 = tpu.matmul %212, %213, %cst_114 {dimension_numbers = #tpu.dot_dimension_numbers<[1], [0], [0], [1], [0, 0, 1, 1], [], []>} : vector<2x50xbf16>, vector<50x1xbf16>, vector<2x1xf32> -> vector<2x1xf32>
    %c0_115 = arith.constant 0 : index
    %c0_116 = arith.constant 0 : index
    %215 = vector.load %arg19[%c0_115, %c0_116] : memref<1x1xf32, #tpu.memory_space<vmem>>, vector<1x1xf32>
    %216 = vector.broadcast %215 : vector<1x1xf32> to vector<2x1xf32>
    %217 = arith.mulf %0, %216 : vector<2x1xf32>
    %218 = arith.addf %214, %217 : vector<2x1xf32>
    %c0_117 = arith.constant 0 : index
    %c0_118 = arith.constant 0 : index
    %219 = vector.load %arg20[%c0_117, %c0_118] : memref<1x1xf32, #tpu.memory_space<vmem>>, vector<1x1xf32>
    %220 = vector.broadcast %219 : vector<1x1xf32> to vector<2x1xf32>
    %221 = arith.addf %218, %220 : vector<2x1xf32>
    %c0_119 = arith.constant 0 : index
    %c0_120 = arith.constant 0 : index
    %222 = vector.load %arg21[%c0_119, %c0_120] : memref<2x1xf32, #tpu.memory_space<vmem>>, vector<2x1xf32>
    tpu.vector_store %arg21[%c0_119, %c0_120], %221 {strides = array<i32>} : memref<2x1xf32, #tpu.memory_space<vmem>>, vector<2x1xf32>,
    return
  }
}

</mosaic_0001>

<llo_original>
// kernel: cnn_forward.1
$region0: #{cnn_forward.1}
  #allocation0 [shape = 'u32[]', space=smem, size = 0x4, offset = 0x4, fixed_abs, tag = 'smem constant byte address 0x4 - core index']
  #allocation1 [shape = 'u32[72,128]{1,0:T(1,128)}', space=vmem, size = 0x9000, scoped, tag = 'internal scratch']
  #allocation2 [shape = 'f32[60,30]{1,0:T(8,128)}', space=vmem, size = 0x8000, scoped, tag = 'scratch operand']
  #allocation3 [shape = 'f32[1,1]{1,0:T(1,128)S(1)}', space=vmem, size = 0x200, scoped, tag = 'scoped memory for cnn_forward.1']
  #allocation4 [shape = 'f32[1,1]{1,0:T(1,128)S(1)}', space=vmem, size = 0x200, scoped, tag = 'scoped memory for cnn_forward.1']
  %s0 = inlined_call_operand.vmem [shape: f32[56,28], index: 0, kind: input, shape index: {}]
  %s1 = inlined_call_operand.vmem [shape: f32[2,1], index: 1, kind: input, shape index: {}]
  %s2 = inlined_call_operand.hbm [shape: bf16[5,30,130], index: 2, kind: input, shape index: {}]
  %s3 = inlined_call_operand.vmem [shape: f32[1,130], index: 3, kind: input, shape index: {}]
  %s4 = inlined_call_operand.vmem [shape: f32[56,1], index: 4, kind: input, shape index: {}]
  %s5 = inlined_call_operand.vmem [shape: bf16[26,56], index: 5, kind: input, shape index: {}]
  %s6 = inlined_call_operand.vmem [shape: bf16[130,65], index: 6, kind: input, shape index: {}]
  %s7 = inlined_call_operand.vmem [shape: bf16[5,65,450], index: 7, kind: input, shape index: {}]
  %s8 = inlined_call_operand.vmem [shape: f32[1,450], index: 8, kind: input, shape index: {}]
  %s9 = inlined_call_operand.vmem [shape: f32[22,1], index: 9, kind: input, shape index: {}]
  %s10 = inlined_call_operand.vmem [shape: bf16[10,22], index: 10, kind: input, shape index: {}]
  %s11 = inlined_call_operand.vmem [shape: bf16[450,250], index: 11, kind: input, shape index: {}]
  %s12 = inlined_call_operand.vmem [shape: bf16[5,250,100], index: 12, kind: input, shape index: {}]
  %s13 = inlined_call_operand.vmem [shape: f32[1,100], index: 13, kind: input, shape index: {}]
  %s14 = inlined_call_operand.hbm [shape: f32[1,100], index: 14, kind: input, shape index: {}]
  %s15 = inlined_call_operand.vmem [shape: bf16[100,50], index: 15, kind: input, shape index: {}]
  %s16 = inlined_call_operand.vmem [shape: f32[1,50], index: 16, kind: input, shape index: {}]
  %s17 = inlined_call_operand.hbm [shape: f32[1,50], index: 17, kind: input, shape index: {}]
  %s18 = inlined_call_operand.vmem [shape: bf16[50,1], index: 18, kind: input, shape index: {}]
  %s19 = inlined_call_operand.<no memory space> [shape: f32[1,1], index: 19, kind: input, shape index: {}]
  %s20 = inlined_call_operand.<no memory space> [shape: f32[1,1], index: 20, kind: input, shape index: {}]
  %s21 = inlined_call_operand.vmem [shape: f32[2,1], index: 21, kind: output, shape index: {}]
  %s22 = sld [smem:[#allocation0]]
  $region106: #{cnn_forward.1} parent=0
    _
  %s24 = ssub.s32 1, %s22
  %s25 = scalar_select 0, %s24, %s22
  %v26 = vstv %s19
  %27 = vst [vmem:[#allocation3] sm:$0x1] %v26
  %v28 = vstv %s20
  %29 = vst [vmem:[#allocation4] sm:$0x1] %v28
  $region1: #{cnn_forward.1} parent=0
    #allocation5 [shape = 'u8[81920]{0}', space=vmem, size = 0x14000, scoped, tag = 'input window, operand 2, single buffered']
    #allocation6 [shape = 's32[1]{0}', space=sflag, size = 0x4, scoped, tag = 'scoped memory for cnn_forward.1']
    #allocation7 [shape = 'u8[512]{0}', space=vmem, size = 0x400, scoped, tag = 'input window, operand 14, single buffered']
    #allocation8 [shape = 's32[1]{0}', space=sflag, size = 0x4, scoped, tag = 'scoped memory for cnn_forward.1']
    #allocation9 [shape = 'u8[512]{0}', space=vmem, size = 0x400, scoped, tag = 'input window, operand 17, single buffered']
    %30 = vsyncpa [#allocation6], 0
    %31 = vsyncpa [#allocation8], 0
    // Predicated region
    $region2: #{cnn_forward.1} parent=1 // pred_check
      _
    $region3: #{cnn_forward.1} parent=1 // pred_check_branch
      %33 = sbr.rel (0) target = $region5
    $region4: #{cnn_forward.1} parent=1 // pred_region
      _
    $region5: #{cnn_forward.1} parent=1 // pred_fallthru
      _
    // Predicated region
    $region6: #{cnn_forward.1} parent=1 // pred_check
      _
    $region7: #{cnn_forward.1} parent=1 // pred_check_branch
      %35 = sbr.rel (0) target = $region9
    $region8: #{cnn_forward.1} parent=1 // pred_region
      _
    $region9: #{cnn_forward.1} parent=1 // pred_fallthru
      _
    // Predicated region
    $region10: #{cnn_forward.1} parent=1 // pred_check
      _
    $region11: #{cnn_forward.1} parent=1 // pred_check_branch
      %37 = sbr.rel (0) target = $region13
    $region12: #{cnn_forward.1} parent=1 // pred_region
      %39 = vsyncadd [#allocation6], 0
      %s40 = sshll.u32 %s2, 4
      %s41 = int_to_ptr.hbm [resolvable:$true] %s40
      %s42 = sshll.u32 [#allocation5], 4
      %s43 = int_to_ptr.vmem [resolvable:$true] %s42
      %48 = dma.hbm_to_vmem [thread:$0]  %s41, 2560, %s43, [#allocation6], 128, 128, 8
    $region13: #{cnn_forward.1} parent=1 // pred_fallthru
      _
    // Predicated region
    $region14: #{cnn_forward.1} parent=1 // pred_check
      _
    $region15: #{cnn_forward.1} parent=1 // pred_check_branch
      %50 = sbr.rel (0) target = $region17
    $region16: #{cnn_forward.1} parent=1 // pred_region
      _
    $region17: #{cnn_forward.1} parent=1 // pred_fallthru
      _
    // Predicated region
    $region18: #{cnn_forward.1} parent=1 // pred_check
      _
    $region19: #{cnn_forward.1} parent=1 // pred_check_branch
      %52 = sbr.rel (0) target = $region21
    $region20: #{cnn_forward.1} parent=1 // pred_region
      _
    $region21: #{cnn_forward.1} parent=1 // pred_fallthru
      _
    // Predicated region
    $region22: #{cnn_forward.1} parent=1 // pred_check
      _
    $region23: #{cnn_forward.1} parent=1 // pred_check_branch
      %54 = sbr.rel (0) target = $region25
    $region24: #{cnn_forward.1} parent=1 // pred_region
      _
    $region25: #{cnn_forward.1} parent=1 // pred_fallthru
      _
    // Predicated region
    $region26: #{cnn_forward.1} parent=1 // pred_check
      _
    $region27: #{cnn_forward.1} parent=1 // pred_check_branch
      %56 = sbr.rel (0) target = $region29
    $region28: #{cnn_forward.1} parent=1 // pred_region
      _
    $region29: #{cnn_forward.1} parent=1 // pred_fallthru
      _
    // Predicated region
    $region30: #{cnn_forward.1} parent=1 // pred_check
      _
    $region31: #{cnn_forward.1} parent=1 // pred_check_branch
      %58 = sbr.rel (0) target = $region33
    $region32: #{cnn_forward.1} parent=1 // pred_region
      _
    $region33: #{cnn_forward.1} parent=1 // pred_fallthru
      _
    // Predicated region
    $region34: #{cnn_forward.1} parent=1 // pred_check
      _
    $region35: #{cnn_forward.1} parent=1 // pred_check_branch
      %60 = sbr.rel (0) target = $region37
    $region36: #{cnn_forward.1} parent=1 // pred_region
      _
    $region37: #{cnn_forward.1} parent=1 // pred_fallthru
      _
    // Predicated region
    $region38: #{cnn_forward.1} parent=1 // pred_check
      _
    $region39: #{cnn_forward.1} parent=1 // pred_check_branch
      %62 = sbr.rel (0) target = $region41
    $region40: #{cnn_forward.1} parent=1 // pred_region
      _
    $region41: #{cnn_forward.1} parent=1 // pred_fallthru
      _
    // Predicated region
    $region42: #{cnn_forward.1} parent=1 // pred_check
      _
    $region43: #{cnn_forward.1} parent=1 // pred_check_branch
      %64 = sbr.rel (0) target = $region45
    $region44: #{cnn_forward.1} parent=1 // pred_region
      _
    $region45: #{cnn_forward.1} parent=1 // pred_fallthru
      _
    // Predicated region
    $region46: #{cnn_forward.1} parent=1 // pred_check
      _
    $region47: #{cnn_forward.1} parent=1 // pred_check_branch
      %66 = sbr.rel (0) target = $region49
    $region48: #{cnn_forward.1} parent=1 // pred_region
      _
    $region49: #{cnn_forward.1} parent=1 // pred_fallthru
      _
    // Predicated region
    $region50: #{cnn_forward.1} parent=1 // pred_check
      _
    $region51: #{cnn_forward.1} parent=1 // pred_check_branch
      %68 = sbr.rel (0) target = $region53
    $region52: #{cnn_forward.1} parent=1 // pred_region
      _
    $region53: #{cnn_forward.1} parent=1 // pred_fallthru
      _
    // Predicated region
    $region54: #{cnn_forward.1} parent=1 // pred_check
      _
    $region55: #{cnn_forward.1} parent=1 // pred_check_branch
      %70 = sbr.rel (0) target = $region57
    $region56: #{cnn_forward.1} parent=1 // pred_region
      _
    $region57: #{cnn_forward.1} parent=1 // pred_fallthru
      _
    // Predicated region
    $region58: #{cnn_forward.1} parent=1 // pred_check
      _
    $region59: #{cnn_forward.1} parent=1 // pred_check_branch
      %72 = sbr.rel (0) target = $region61
    $region60: #{cnn_forward.1} parent=1 // pred_region
      %74 = vsyncadd [#allocation8], 0
      %s76 = sshll.u32 %s14, 4
      %s77 = int_to_ptr.hbm [resolvable:$true] %s76
      %s78 = sshll.u32 [#allocation7], 4
      %s79 = int_to_ptr.vmem [resolvable:$true] %s78
      %81 = dma.hbm_to_vmem [thread:$0]  %s77, 16, %s79, [#allocation8]
    $region61: #{cnn_forward.1} parent=1 // pred_fallthru
      _
    // Predicated region
    $region62: #{cnn_forward.1} parent=1 // pred_check
      _
    $region63: #{cnn_forward.1} parent=1 // pred_check_branch
      %83 = sbr.rel (0) target = $region65
    $region64: #{cnn_forward.1} parent=1 // pred_region
      _
    $region65: #{cnn_forward.1} parent=1 // pred_fallthru
      _
    // Predicated region
    $region66: #{cnn_forward.1} parent=1 // pred_check
      _
    $region67: #{cnn_forward.1} parent=1 // pred_check_branch
      %85 = sbr.rel (0) target = $region69
    $region68: #{cnn_forward.1} parent=1 // pred_region
      _
    $region69: #{cnn_forward.1} parent=1 // pred_fallthru
      _
    // Predicated region
    $region70: #{cnn_forward.1} parent=1 // pred_check
      _
    $region71: #{cnn_forward.1} parent=1 // pred_check_branch
      %87 = sbr.rel (0) target = $region73
    $region72: #{cnn_forward.1} parent=1 // pred_region
      %89 = vsyncadd [#allocation8], 0
      %s91 = sshll.u32 %s17, 4
      %s92 = int_to_ptr.hbm [resolvable:$true] %s91
      %s93 = sshll.u32 [#allocation9], 4
      %s94 = int_to_ptr.vmem [resolvable:$true] %s93
      %96 = dma.hbm_to_vmem [thread:$0]  %s92, 16, %s94, [#allocation8]
    $region73: #{cnn_forward.1} parent=1 // pred_fallthru
      _
    // Predicated region
    $region74: #{cnn_forward.1} parent=1 // pred_check
      _
    $region75: #{cnn_forward.1} parent=1 // pred_check_branch
      %98 = sbr.rel (0) target = $region77
    $region76: #{cnn_forward.1} parent=1 // pred_region
      _
    $region77: #{cnn_forward.1} parent=1 // pred_fallthru
      _
    // Predicated region
    $region78: #{cnn_forward.1} parent=1 // pred_check
      _
    $region79: #{cnn_forward.1} parent=1 // pred_check_branch
      %100 = sbr.rel (0) target = $region81
    $region80: #{cnn_forward.1} parent=1 // pred_region
      _
    $region81: #{cnn_forward.1} parent=1 // pred_fallthru
      _
    // Predicated region
    $region82: #{cnn_forward.1} parent=1 // pred_check
      _
    $region83: #{cnn_forward.1} parent=1 // pred_check_branch
      %102 = sbr.rel (0) target = $region85
    $region84: #{cnn_forward.1} parent=1 // pred_region
      _
    $region85: #{cnn_forward.1} parent=1 // pred_fallthru
      _
    // Predicated region
    $region86: #{cnn_forward.1} parent=1 // pred_check
      _
    $region87: #{cnn_forward.1} parent=1 // pred_check_branch
      %104 = sbr.rel (0) target = $region89
    $region88: #{cnn_forward.1} parent=1 // pred_region
      %106 = dma.done [#allocation6], 2560
    $region89: #{cnn_forward.1} parent=1 // pred_fallthru
      _
    // Predicated region
    $region90: #{cnn_forward.1} parent=1 // pred_check
      _
    $region91: #{cnn_forward.1} parent=1 // pred_check_branch
      %108 = sbr.rel (0) target = $region93
    $region92: #{cnn_forward.1} parent=1 // pred_region
      %110 = dma.done [#allocation8], 16
    $region93: #{cnn_forward.1} parent=1 // pred_fallthru
      _
    // Predicated region
    $region94: #{cnn_forward.1} parent=1 // pred_check
      _
    $region95: #{cnn_forward.1} parent=1 // pred_check_branch
      %112 = sbr.rel (0) target = $region97
    $region96: #{cnn_forward.1} parent=1 // pred_region
      %114 = dma.done [#allocation8], 16
    $region97: #{cnn_forward.1} parent=1 // pred_fallthru
      _
    %v116 = vld [vmem:[%s1] sm:$0x3]
    %vm117 = vcmask 244736
    %118 = vst.msk [vmem:[#allocation2] sm:$0xff] %vm117, 0.0
    %119 = vst.msk [vmem:[#allocation2 + $0x8] sm:$0xff] %vm117, 0.0
    %120 = vst.msk [vmem:[#allocation2 + $0x10] sm:$0xff] %vm117, 0.0
    %121 = vst.msk [vmem:[#allocation2 + $0x18] sm:$0xff] %vm117, 0.0
    %122 = vst.msk [vmem:[#allocation2 + $0x20] sm:$0xff] %vm117, 0.0
    %123 = vst.msk [vmem:[#allocation2 + $0x28] sm:$0xff] %vm117, 0.0
    %124 = vst.msk [vmem:[#allocation2 + $0x30] sm:$0xff] %vm117, 0.0
    %vm125 = vcmask 240640
    %126 = vst.msk [vmem:[#allocation2 + $0x38] sm:$0xf] %vm125, 0.0
    %v127 = vld [vmem:[%s0] sm:$0xff]
    %v128 = vld [vmem:[%s0 + $0x8] sm:$0xff]
    %v129 = vld [vmem:[%s0 + $0x10] sm:$0xff]
    %v130 = vld [vmem:[%s0 + $0x18] sm:$0xf]
    %s132 = vtos %v116
    %v133 = vstv %s132
    %v135 = vadd.f32 %v127, %v133
    %v136 = vadd.f32 %v128, %v133
    %v137 = vadd.f32 %v129, %v133
    %v138 = vadd.f32 %v130, %v133
    %143 = vrot.lane.b32.xlu0 %v135, 1
    %v144 = vpop.permute.xlu0 %143
    %145 = vrot.lane.b32.xlu0 %v136, 1
    %v146 = vpop.permute.xlu0 %145
    %147 = vrot.lane.b32.xlu0 %v137, 1
    %v148 = vpop.permute.xlu0 %147
    %149 = vrot.lane.b32.xlu0 %v138, 1
    %v150 = vpop.permute.xlu0 %149
    %vm155 = vcmask 236552
    %156 = vst.msk [vmem:[#allocation2 + $0x1] sm:$0xff] %vm155, %v144
    %157 = vst.msk [vmem:[#allocation2 + $0x9] sm:$0xff] %vm155, %v146
    %158 = vst.msk [vmem:[#allocation2 + $0x11] sm:$0xff] %vm155, %v148
    %vm159 = vcmask 232456
    %160 = vst.msk [vmem:[#allocation2 + $0x19] sm:$0xf] %vm159, %v150
    %v161 = vld [vmem:[%s0 + $0x1c] sm:$0xff]
    %v162 = vld [vmem:[%s0 + $0x24] sm:$0xff]
    %v163 = vld [vmem:[%s0 + $0x2c] sm:$0xff]
    %v164 = vld [vmem:[%s0 + $0x34] sm:$0xf]
    %v165 = vrot.slane %v116, 1
    %s166 = vtos %v165
    %v167 = vstv %s166
    %v169 = vadd.f32 %v161, %v167
    %v170 = vadd.f32 %v162, %v167
    %v171 = vadd.f32 %v163, %v167
    %v172 = vadd.f32 %v164, %v167
    %177 = vrot.lane.b32.xlu0 %v169, 1
    %v178 = vpop.permute.xlu0 %177
    %179 = vrot.lane.b32.xlu0 %v170, 1
    %v180 = vpop.permute.xlu0 %179
    %181 = vrot.lane.b32.xlu0 %v171, 1
    %v182 = vpop.permute.xlu0 %181
    %183 = vrot.lane.b32.xlu0 %v172, 1
    %v184 = vpop.permute.xlu0 %183
    %189 = vst.msk [vmem:[#allocation2 + $0x1f] sm:$0xff] %vm155, %v178
    %190 = vst.msk [vmem:[#allocation2 + $0x27] sm:$0xff] %vm155, %v180
    %191 = vst.msk [vmem:[#allocation2 + $0x2f] sm:$0xff] %vm155, %v182
    %192 = vst.msk [vmem:[#allocation2 + $0x37] sm:$0xf] %vm159, %v184
    %v193 = vld [vmem:[#allocation2] sm:$0xff]
    %v194 = vld [vmem:[#allocation2 + $0x8] sm:$0xff]
    %v195 = vld [vmem:[#allocation2 + $0x10] sm:$0xff]
    %v196 = vld [vmem:[#allocation2 + $0x18] sm:$0xff]
    %v197 = vld [vmem:[#allocation2 + $0x20] sm:$0xff]
    %v198 = vld [vmem:[#allocation2 + $0x28] sm:$0xff]
    %v199 = vld [vmem:[#allocation2 + $0x30] sm:$0xff]
    %v200 = vld [vmem:[#allocation2 + $0x38] sm:$0xf]
    %v201 = vpack.c.bf16 %v193, %v193
    %v202 = vpack.c.bf16 %v194, %v194
    %v203 = vpack.c.bf16 %v195, %v195
    %v204 = vpack.c.bf16 %v196, %v196
    %v205 = vpack.c.bf16 %v197, %v197
    %v206 = vpack.c.bf16 %v198, %v198
    %v207 = vpack.c.bf16 %v199, %v199
    %v208 = vpack.c.bf16 %v200, %v200
    %v209 = vld [vmem:[#allocation5] sm:$0xff]
    %v210 = vld [vmem:[#allocation5 + $0x8] sm:$0xff]
    %v211 = vld [vmem:[#allocation5 + $0x10] sm:$0xff]
    %v212 = vld [vmem:[#allocation5 + $0x18] sm:$0x77]
    %s213 = scalar_lea.vmem [#allocation5], 32
    %v214 = vld [vmem:[%s213] sm:$0xff]
    %v215 = vld [vmem:[%s213 + $0x8] sm:$0xff]
    %v216 = vld [vmem:[%s213 + $0x10] sm:$0xff]
    %v217 = vld [vmem:[%s213 + $0x18] sm:$0x77]
    %v226 = vunpack.c.l.b16 %v201
    %v227 = vunpack.c.l.b16 %v202
    %v228 = vunpack.c.l.b16 %v203
    %v229 = vunpack.c.l.b16 %v204
    %v230 = vunpack.c.l.b16 %v205
    %v231 = vunpack.c.l.b16 %v206
    %v232 = vunpack.c.l.b16 %v207
    %v233 = vunpack.c.l.b16 %v208
    %v234 = vpack.c.b16 %v227, %v226
    %v235 = vpack.c.b16 %v229, %v228
    %v236 = vpack.c.b16 %v231, %v230
    %v237 = vpack.c.b16 %v233, %v232
    %vm238 = vsmask.f32 7424
    %v240 = vshrl.u32 %v234, 16
    %v242 = vshll.u32 %v234, 16
    %v244 = vrot.slane %v242, 1
    %v245 = vor.u32 %v240, %v244
    %v247 = vshll.u32 %v235, 16
    %v249 = vrot.slane %v247, 1
    %v250 = vsel %vm238, %v245, %v249
    %v251 = vshrl.u32 %v235, 16
    %v253 = vor.u32 %v251, %v249
    %v255 = vshll.u32 %v236, 16
    %v257 = vrot.slane %v255, 1
    %v258 = vsel %vm238, %v253, %v257
    %v259 = vshrl.u32 %v236, 16
    %v261 = vor.u32 %v259, %v257
    %v263 = vshll.u32 %v237, 16
    %v265 = vrot.slane %v263, 1
    %v266 = vsel %vm238, %v261, %v265
    %v267 = vshrl.u32 %v237, 16
    %v269 = vor.u32 %v267, %v265
    %v274 = vunpack.c.l.b16 %v214
    %v275 = vunpack.c.h.b16 %v214
    %v276 = vunpack.c.l.b16 %v215
    %v277 = vunpack.c.h.b16 %v215
    %v278 = vunpack.c.l.b16 %v216
    %v279 = vunpack.c.h.b16 %v216
    %v280 = vunpack.c.l.b16 %v217
    %v281 = vunpack.c.h.b16 %v217
    %v282 = vpack.c.b16 %v276, %v274
    %v283 = vpack.c.b16 %v277, %v275
    %v284 = vpack.c.b16 %v280, %v278
    %v285 = vpack.c.b16 %v281, %v279
    %v289 = vsel %vm117, %v250, 0
    %v292 = vsel %vm117, %v258, 0
    %v295 = vsel %vm117, %v266, 0
    %v298 = vsel %vm117, %v269, 0
    %vm300 = vcmask 1046528
    %v302 = vsel %vm300, %v284, 0
    %v305 = vsel %vm300, %v285, 0
    %307 = vmatpush.bf16.msra.mxu0 0
    %308 = vmatpush.bf16.msra.mxu0 0
    %309 = vmatpush.bf16.msra.mxu0 0
    %310 = vmatpush.bf16.msra.mxu0 0
    %311 = vmatpush.bf16.msra.mxu0 0
    %312 = vmatpush.bf16.msra.mxu0 0
    %313 = vmatpush.bf16.msra.mxu0 %v302
    %314 = vmatpush.bf16.msra.mxu0 %v282
    %315 = vmatmul.bf16.gmra.mxu0 %v289
    %v316 = vpop.f32.mrf.mxu0
    %v317 = vadd.f32 0.0, %v316
    %v318 = vpop.f32.mrf.mxu0
    %v319 = vadd.f32 0.0, %v318
    %320 = vmatmul.bf16.gmra.mxu0 %v292
    %v321 = vpop.f32.mrf.mxu0
    %v322 = vadd.f32 0.0, %v321
    %v323 = vpop.f32.mrf.mxu0
    %v324 = vadd.f32 0.0, %v323
    %325 = vmatmul.bf16.gmra.mxu0 %v295
    %v326 = vpop.f32.mrf.mxu0
    %v327 = vadd.f32 0.0, %v326
    %v328 = vpop.f32.mrf.mxu0
    %v329 = vadd.f32 0.0, %v328
    %330 = vmatmul.bf16.gmra.mxu0 %v298
    %v331 = vpop.f32.mrf.mxu0
    %v332 = vadd.f32 0.0, %v331
    %v333 = vpop.f32.mrf.mxu0
    %334 = vdwg.mxu0
    %335 = vmatpush.bf16.msra.mxu0 0
    %336 = vmatpush.bf16.msra.mxu0 0
    %337 = vmatpush.bf16.msra.mxu0 0
    %338 = vmatpush.bf16.msra.mxu0 0
    %339 = vmatpush.bf16.msra.mxu0 0
    %340 = vmatpush.bf16.msra.mxu0 0
    %341 = vmatpush.bf16.msra.mxu0 %v305
    %342 = vmatpush.bf16.msra.mxu0 %v283
    %343 = vmatmul.bf16.gmra.mxu0 %v289
    %v344 = vpop.f32.mrf.mxu0
    %v345 = vadd.f32 0.0, %v344
    %v346 = vpop.f32.mrf.mxu0
    %v347 = vadd.f32 0.0, %v346
    %348 = vmatmul.bf16.gmra.mxu0 %v292
    %v349 = vpop.f32.mrf.mxu0
    %v350 = vadd.f32 0.0, %v349
    %v351 = vpop.f32.mrf.mxu0
    %v352 = vadd.f32 0.0, %v351
    %353 = vmatmul.bf16.gmra.mxu0 %v295
    %v354 = vpop.f32.mrf.mxu0
    %v355 = vadd.f32 0.0, %v354
    %v356 = vpop.f32.mrf.mxu0
    %v357 = vadd.f32 0.0, %v356
    %358 = vmatmul.bf16.gmra.mxu0 %v298
    %v359 = vpop.f32.mrf.mxu0
    %v360 = vadd.f32 0.0, %v359
    %v361 = vpop.f32.mrf.mxu0
    %362 = vdwg.mxu0
    %v363 = vpack.c.b16 %v232, %v232
    %v368 = vunpack.c.l.b16 %v209
    %v369 = vunpack.c.h.b16 %v209
    %v370 = vunpack.c.l.b16 %v210
    %v371 = vunpack.c.h.b16 %v210
    %v372 = vunpack.c.l.b16 %v211
    %v373 = vunpack.c.h.b16 %v211
    %v374 = vunpack.c.l.b16 %v212
    %v375 = vunpack.c.h.b16 %v212
    %v376 = vpack.c.b16 %v370, %v368
    %v377 = vpack.c.b16 %v371, %v369
    %v378 = vpack.c.b16 %v374, %v372
    %v379 = vpack.c.b16 %v375, %v373
    %v382 = vsel %vm117, %v234, 0
    %v384 = vsel %vm117, %v235, 0
    %v386 = vsel %vm117, %v236, 0
    %v389 = vsel %vm117, %v363, 0
    %v392 = vsel %vm300, %v378, 0
    %v395 = vsel %vm300, %v379, 0
    %397 = vmatpush.bf16.msra.mxu0 0
    %398 = vmatpush.bf16.msra.mxu0 0
    %399 = vmatpush.bf16.msra.mxu0 0
    %400 = vmatpush.bf16.msra.mxu0 0
    %401 = vmatpush.bf16.msra.mxu0 0
    %402 = vmatpush.bf16.msra.mxu0 0
    %403 = vmatpush.bf16.msra.mxu0 %v392
    %404 = vmatpush.bf16.msra.mxu0 %v376
    %405 = vmatmul.bf16.gmra.mxu0 %v382
    %v406 = vpop.f32.mrf.mxu0
    %v407 = vadd.f32 %v317, %v406
    %v408 = vpop.f32.mrf.mxu0
    %v409 = vadd.f32 %v319, %v408
    %410 = vmatmul.bf16.gmra.mxu0 %v384
    %v411 = vpop.f32.mrf.mxu0
    %v412 = vadd.f32 %v322, %v411
    %v413 = vpop.f32.mrf.mxu0
    %v414 = vadd.f32 %v324, %v413
    %415 = vmatmul.bf16.gmra.mxu0 %v386
    %v416 = vpop.f32.mrf.mxu0
    %v417 = vadd.f32 %v327, %v416
    %v418 = vpop.f32.mrf.mxu0
    %v419 = vadd.f32 %v329, %v418
    %420 = vmatmul.bf16.gmra.mxu0 %v389
    %v421 = vpop.f32.mrf.mxu0
    %v422 = vadd.f32 %v332, %v421
    %v423 = vpop.f32.mrf.mxu0
    %424 = vdwg.mxu0
    %425 = vmatpush.bf16.msra.mxu0 0
    %426 = vmatpush.bf16.msra.mxu0 0
    %427 = vmatpush.bf16.msra.mxu0 0
    %428 = vmatpush.bf16.msra.mxu0 0
    %429 = vmatpush.bf16.msra.mxu0 0
    %430 = vmatpush.bf16.msra.mxu0 0
    %431 = vmatpush.bf16.msra.mxu0 %v395
    %432 = vmatpush.bf16.msra.mxu0 %v377
    %433 = vmatmul.bf16.gmra.mxu0 %v382
    %v434 = vpop.f32.mrf.mxu0
    %v435 = vadd.f32 %v345, %v434
    %v436 = vpop.f32.mrf.mxu0
    %v437 = vadd.f32 %v347, %v436
    %438 = vmatmul.bf16.gmra.mxu0 %v384
    %v439 = vpop.f32.mrf.mxu0
    %v440 = vadd.f32 %v350, %v439
    %v441 = vpop.f32.mrf.mxu0
    %v442 = vadd.f32 %v352, %v441
    %443 = vmatmul.bf16.gmra.mxu0 %v386
    %v444 = vpop.f32.mrf.mxu0
    %v445 = vadd.f32 %v355, %v444
    %v446 = vpop.f32.mrf.mxu0
    %v447 = vadd.f32 %v357, %v446
    %448 = vmatmul.bf16.gmra.mxu0 %v389
    %v449 = vpop.f32.mrf.mxu0
    %v450 = vadd.f32 %v360, %v449
    %v451 = vpop.f32.mrf.mxu0
    %452 = vdwg.mxu0
    %s453 = scalar_lea.vmem [#allocation5], 64
    %v454 = vld [vmem:[%s453] sm:$0xff]
    %v455 = vld [vmem:[%s453 + $0x8] sm:$0xff]
    %v456 = vld [vmem:[%s453 + $0x10] sm:$0xff]
    %v457 = vld [vmem:[%s453 + $0x18] sm:$0x77]
    %vm458 = vcmask 1046528
    %v459 = vrot.slane %v234, 1
    %v460 = vrot.slane %v235, 1
    %v461 = vsel %vm458, %v459, %v460
    %v462 = vrot.slane %v236, 1
    %v463 = vsel %vm458, %v460, %v462
    %v464 = vrot.slane %v237, 1
    %v465 = vsel %vm458, %v462, %v464
    %v470 = vunpack.c.l.b16 %v454
    %v471 = vunpack.c.h.b16 %v454
    %v472 = vunpack.c.l.b16 %v455
    %v473 = vunpack.c.h.b16 %v455
    %v474 = vunpack.c.l.b16 %v456
    %v475 = vunpack.c.h.b16 %v456
    %v476 = vunpack.c.l.b16 %v457
    %v477 = vunpack.c.h.b16 %v457
    %v478 = vpack.c.b16 %v472, %v470
    %v479 = vpack.c.b16 %v473, %v471
    %v480 = vpack.c.b16 %v476, %v474
    %v481 = vpack.c.b16 %v477, %v475
    %v485 = vsel %vm117, %v461, 0
    %v488 = vsel %vm117, %v463, 0
    %v491 = vsel %vm117, %v465, 0
    %v494 = vsel %vm117, %v464, 0
    %v497 = vsel %vm300, %v480, 0
    %v500 = vsel %vm300, %v481, 0
    %502 = vmatpush.bf16.msra.mxu0 0
    %503 = vmatpush.bf16.msra.mxu0 0
    %504 = vmatpush.bf16.msra.mxu0 0
    %505 = vmatpush.bf16.msra.mxu0 0
    %506 = vmatpush.bf16.msra.mxu0 0
    %507 = vmatpush.bf16.msra.mxu0 0
    %508 = vmatpush.bf16.msra.mxu0 %v497
    %509 = vmatpush.bf16.msra.mxu0 %v478
    %510 = vmatmul.bf16.gmra.mxu0 %v485
    %v511 = vpop.f32.mrf.mxu0
    %v512 = vadd.f32 0.0, %v511
    %v513 = vpop.f32.mrf.mxu0
    %v514 = vadd.f32 0.0, %v513
    %515 = vmatmul.bf16.gmra.mxu0 %v488
    %v516 = vpop.f32.mrf.mxu0
    %v517 = vadd.f32 0.0, %v516
    %v518 = vpop.f32.mrf.mxu0
    %v519 = vadd.f32 0.0, %v518
    %520 = vmatmul.bf16.gmra.mxu0 %v491
    %v521 = vpop.f32.mrf.mxu0
    %v522 = vadd.f32 0.0, %v521
    %v523 = vpop.f32.mrf.mxu0
    %v524 = vadd.f32 0.0, %v523
    %525 = vmatmul.bf16.gmra.mxu0 %v494
    %v526 = vpop.f32.mrf.mxu0
    %v527 = vadd.f32 0.0, %v526
    %v528 = vpop.f32.mrf.mxu0
    %529 = vdwg.mxu0
    %530 = vmatpush.bf16.msra.mxu0 0
    %531 = vmatpush.bf16.msra.mxu0 0
    %532 = vmatpush.bf16.msra.mxu0 0
    %533 = vmatpush.bf16.msra.mxu0 0
    %534 = vmatpush.bf16.msra.mxu0 0
    %535 = vmatpush.bf16.msra.mxu0 0
    %536 = vmatpush.bf16.msra.mxu0 %v500
    %537 = vmatpush.bf16.msra.mxu0 %v479
    %538 = vmatmul.bf16.gmra.mxu0 %v485
    %v539 = vpop.f32.mrf.mxu0
    %v540 = vadd.f32 0.0, %v539
    %v541 = vpop.f32.mrf.mxu0
    %v542 = vadd.f32 0.0, %v541
    %543 = vmatmul.bf16.gmra.mxu0 %v488
    %v544 = vpop.f32.mrf.mxu0
    %v545 = vadd.f32 0.0, %v544
    %v546 = vpop.f32.mrf.mxu0
    %v547 = vadd.f32 0.0, %v546
    %548 = vmatmul.bf16.gmra.mxu0 %v491
    %v549 = vpop.f32.mrf.mxu0
    %v550 = vadd.f32 0.0, %v549
    %v551 = vpop.f32.mrf.mxu0
    %v552 = vadd.f32 0.0, %v551
    %553 = vmatmul.bf16.gmra.mxu0 %v494
    %v554 = vpop.f32.mrf.mxu0
    %v555 = vadd.f32 0.0, %v554
    %v556 = vpop.f32.mrf.mxu0
    %557 = vdwg.mxu0
    %v558 = vadd.f32 %v407, %v512
    %v559 = vadd.f32 %v435, %v540
    %v560 = vadd.f32 %v409, %v514
    %v561 = vadd.f32 %v437, %v542
    %v562 = vadd.f32 %v412, %v517
    %v563 = vadd.f32 %v440, %v545
    %v564 = vadd.f32 %v414, %v519
    %v565 = vadd.f32 %v442, %v547
    %v566 = vadd.f32 %v417, %v522
    %v567 = vadd.f32 %v445, %v550
    %v568 = vadd.f32 %v419, %v524
    %v569 = vadd.f32 %v447, %v552
    %v570 = vadd.f32 %v422, %v527
    %v571 = vadd.f32 %v450, %v555
    %s572 = scalar_lea.vmem [#allocation5], 96
    %v573 = vld [vmem:[%s572] sm:$0xff]
    %v574 = vld [vmem:[%s572 + $0x8] sm:$0xff]
    %v575 = vld [vmem:[%s572 + $0x10] sm:$0xff]
    %v576 = vld [vmem:[%s572 + $0x18] sm:$0x77]
    %vm577 = vsmask.f32 6400
    %v578 = vrot.slane %v240, 1
    %v579 = vrot.slane %v242, 2
    %v580 = vor.u32 %v578, %v579
    %v581 = vrot.slane %v251, 1
    %v582 = vrot.slane %v247, 2
    %v583 = vor.u32 %v581, %v582
    %v584 = vsel %vm577, %v580, %v583
    %v585 = vrot.slane %v259, 1
    %v586 = vrot.slane %v255, 2
    %v587 = vor.u32 %v585, %v586
    %v588 = vsel %vm577, %v583, %v587
    %v589 = vrot.slane %v267, 1
    %v590 = vrot.slane %v263, 2
    %v591 = vor.u32 %v589, %v590
    %v592 = vsel %vm577, %v587, %v591
    %v597 = vunpack.c.l.b16 %v573
    %v598 = vunpack.c.h.b16 %v573
    %v599 = vunpack.c.l.b16 %v574
    %v600 = vunpack.c.h.b16 %v574
    %v601 = vunpack.c.l.b16 %v575
    %v602 = vunpack.c.h.b16 %v575
    %v603 = vunpack.c.l.b16 %v576
    %v604 = vunpack.c.h.b16 %v576
    %v605 = vpack.c.b16 %v599, %v597
    %v606 = vpack.c.b16 %v600, %v598
    %v607 = vpack.c.b16 %v603, %v601
    %v608 = vpack.c.b16 %v604, %v602
    %v612 = vsel %vm117, %v584, 0
    %v615 = vsel %vm117, %v588, 0
    %v618 = vsel %vm117, %v592, 0
    %v621 = vsel %vm117, %v591, 0
    %v624 = vsel %vm300, %v607, 0
    %v627 = vsel %vm300, %v608, 0
    %629 = vmatpush.bf16.msra.mxu0 0
    %630 = vmatpush.bf16.msra.mxu0 0
    %631 = vmatpush.bf16.msra.mxu0 0
    %632 = vmatpush.bf16.msra.mxu0 0
    %633 = vmatpush.bf16.msra.mxu0 0
    %634 = vmatpush.bf16.msra.mxu0 0
    %635 = vmatpush.bf16.msra.mxu0 %v624
    %636 = vmatpush.bf16.msra.mxu0 %v605
    %637 = vmatmul.bf16.gmra.mxu0 %v612
    %v638 = vpop.f32.mrf.mxu0
    %v639 = vadd.f32 0.0, %v638
    %v640 = vpop.f32.mrf.mxu0
    %v641 = vadd.f32 0.0, %v640
    %642 = vmatmul.bf16.gmra.mxu0 %v615
    %v643 = vpop.f32.mrf.mxu0
    %v644 = vadd.f32 0.0, %v643
    %v645 = vpop.f32.mrf.mxu0
    %v646 = vadd.f32 0.0, %v645
    %647 = vmatmul.bf16.gmra.mxu0 %v618
    %v648 = vpop.f32.mrf.mxu0
    %v649 = vadd.f32 0.0, %v648
    %v650 = vpop.f32.mrf.mxu0
    %v651 = vadd.f32 0.0, %v650
    %652 = vmatmul.bf16.gmra.mxu0 %v621
    %v653 = vpop.f32.mrf.mxu0
    %v654 = vadd.f32 0.0, %v653
    %v655 = vpop.f32.mrf.mxu0
    %656 = vdwg.mxu0
    %657 = vmatpush.bf16.msra.mxu0 0
    %658 = vmatpush.bf16.msra.mxu0 0
    %659 = vmatpush.bf16.msra.mxu0 0
    %660 = vmatpush.bf16.msra.mxu0 0
    %661 = vmatpush.bf16.msra.mxu0 0
    %662 = vmatpush.bf16.msra.mxu0 0
    %663 = vmatpush.bf16.msra.mxu0 %v627
    %664 = vmatpush.bf16.msra.mxu0 %v606
    %665 = vmatmul.bf16.gmra.mxu0 %v612
    %v666 = vpop.f32.mrf.mxu0
    %v667 = vadd.f32 0.0, %v666
    %v668 = vpop.f32.mrf.mxu0
    %v669 = vadd.f32 0.0, %v668
    %670 = vmatmul.bf16.gmra.mxu0 %v615
    %v671 = vpop.f32.mrf.mxu0
    %v672 = vadd.f32 0.0, %v671
    %v673 = vpop.f32.mrf.mxu0
    %v674 = vadd.f32 0.0, %v673
    %675 = vmatmul.bf16.gmra.mxu0 %v618
    %v676 = vpop.f32.mrf.mxu0
    %v677 = vadd.f32 0.0, %v676
    %v678 = vpop.f32.mrf.mxu0
    %v679 = vadd.f32 0.0, %v678
    %680 = vmatmul.bf16.gmra.mxu0 %v621
    %v681 = vpop.f32.mrf.mxu0
    %v682 = vadd.f32 0.0, %v681
    %v683 = vpop.f32.mrf.mxu0
    %684 = vdwg.mxu0
    %v685 = vadd.f32 %v558, %v639
    %v686 = vadd.f32 %v559, %v667
    %v687 = vadd.f32 %v560, %v641
    %v688 = vadd.f32 %v561, %v669
    %v689 = vadd.f32 %v562, %v644
    %v690 = vadd.f32 %v563, %v672
    %v691 = vadd.f32 %v564, %v646
    %v692 = vadd.f32 %v565, %v674
    %v693 = vadd.f32 %v566, %v649
    %v694 = vadd.f32 %v567, %v677
    %v695 = vadd.f32 %v568, %v651
    %v696 = vadd.f32 %v569, %v679
    %v697 = vadd.f32 %v570, %v654
    %v698 = vadd.f32 %v571, %v682
    %s699 = scalar_lea.vmem [#allocation5], 128
    %v700 = vld [vmem:[%s699] sm:$0xff]
    %v701 = vld [vmem:[%s699 + $0x8] sm:$0xff]
    %v702 = vld [vmem:[%s699 + $0x10] sm:$0xff]
    %v703 = vld [vmem:[%s699 + $0x18] sm:$0x77]
    %vm704 = vcmask 1045504
    %v705 = vrot.slane %v234, 2
    %v706 = vrot.slane %v235, 2
    %v707 = vsel %vm704, %v705, %v706
    %v708 = vrot.slane %v236, 2
    %v709 = vsel %vm704, %v706, %v708
    %v710 = vrot.slane %v237, 2
    %v711 = vsel %vm704, %v708, %v710
    %v716 = vunpack.c.l.b16 %v700
    %v717 = vunpack.c.h.b16 %v700
    %v718 = vunpack.c.l.b16 %v701
    %v719 = vunpack.c.h.b16 %v701
    %v720 = vunpack.c.l.b16 %v702
    %v721 = vunpack.c.h.b16 %v702
    %v722 = vunpack.c.l.b16 %v703
    %v723 = vunpack.c.h.b16 %v703
    %v724 = vpack.c.b16 %v718, %v716
    %v725 = vpack.c.b16 %v719, %v717
    %v726 = vpack.c.b16 %v722, %v720
    %v727 = vpack.c.b16 %v723, %v721
    %v731 = vsel %vm117, %v707, 0
    %v734 = vsel %vm117, %v709, 0
    %v737 = vsel %vm117, %v711, 0
    %v740 = vsel %vm117, %v710, 0
    %v743 = vsel %vm300, %v726, 0
    %v746 = vsel %vm300, %v727, 0
    %748 = vmatpush.bf16.msra.mxu0 0
    %749 = vmatpush.bf16.msra.mxu0 0
    %750 = vmatpush.bf16.msra.mxu0 0
    %751 = vmatpush.bf16.msra.mxu0 0
    %752 = vmatpush.bf16.msra.mxu0 0
    %753 = vmatpush.bf16.msra.mxu0 0
    %754 = vmatpush.bf16.msra.mxu0 %v743
    %755 = vmatpush.bf16.msra.mxu0 %v724
    %756 = vmatmul.bf16.gmra.mxu0 %v731
    %v757 = vpop.f32.mrf.mxu0
    %v758 = vadd.f32 0.0, %v757
    %v759 = vpop.f32.mrf.mxu0
    %v760 = vadd.f32 0.0, %v759
    %761 = vmatmul.bf16.gmra.mxu0 %v734
    %v762 = vpop.f32.mrf.mxu0
    %v763 = vadd.f32 0.0, %v762
    %v764 = vpop.f32.mrf.mxu0
    %v765 = vadd.f32 0.0, %v764
    %766 = vmatmul.bf16.gmra.mxu0 %v737
    %v767 = vpop.f32.mrf.mxu0
    %v768 = vadd.f32 0.0, %v767
    %v769 = vpop.f32.mrf.mxu0
    %v770 = vadd.f32 0.0, %v769
    %771 = vmatmul.bf16.gmra.mxu0 %v740
    %v772 = vpop.f32.mrf.mxu0
    %v773 = vadd.f32 0.0, %v772
    %v774 = vpop.f32.mrf.mxu0
    %775 = vdwg.mxu0
    %776 = vmatpush.bf16.msra.mxu0 0
    %777 = vmatpush.bf16.msra.mxu0 0
    %778 = vmatpush.bf16.msra.mxu0 0
    %779 = vmatpush.bf16.msra.mxu0 0
    %780 = vmatpush.bf16.msra.mxu0 0
    %781 = vmatpush.bf16.msra.mxu0 0
    %782 = vmatpush.bf16.msra.mxu0 %v746
    %783 = vmatpush.bf16.msra.mxu0 %v725
    %784 = vmatmul.bf16.gmra.mxu0 %v731
    %v785 = vpop.f32.mrf.mxu0
    %v786 = vadd.f32 0.0, %v785
    %v787 = vpop.f32.mrf.mxu0
    %v788 = vadd.f32 0.0, %v787
    %789 = vmatmul.bf16.gmra.mxu0 %v734
    %v790 = vpop.f32.mrf.mxu0
    %v791 = vadd.f32 0.0, %v790
    %v792 = vpop.f32.mrf.mxu0
    %v793 = vadd.f32 0.0, %v792
    %794 = vmatmul.bf16.gmra.mxu0 %v737
    %v795 = vpop.f32.mrf.mxu0
    %v796 = vadd.f32 0.0, %v795
    %v797 = vpop.f32.mrf.mxu0
    %v798 = vadd.f32 0.0, %v797
    %799 = vmatmul.bf16.gmra.mxu0 %v740
    %v800 = vpop.f32.mrf.mxu0
    %v801 = vadd.f32 0.0, %v800
    %v802 = vpop.f32.mrf.mxu0
    %803 = vdwg.mxu0
    %v804 = vadd.f32 %v685, %v758
    %v805 = vadd.f32 %v686, %v786
    %v806 = vadd.f32 %v687, %v760
    %v807 = vadd.f32 %v688, %v788
    %v808 = vadd.f32 %v689, %v763
    %v809 = vadd.f32 %v690, %v791
    %v810 = vadd.f32 %v691, %v765
    %v811 = vadd.f32 %v692, %v793
    %v812 = vadd.f32 %v693, %v768
    %v813 = vadd.f32 %v694, %v796
    %v814 = vadd.f32 %v695, %v770
    %v815 = vadd.f32 %v696, %v798
    %v816 = vadd.f32 %v697, %v773
    %v817 = vadd.f32 %v698, %v801
    %v818 = vld [vmem:[%s3] sm:$0x3]
    %v820 = vperm.slane %v818, 0
    %v821 = vperm.slane %v818, 1
    %v824 = vadd.f32 %v804, %v820
    %v825 = vadd.f32 %v805, %v821
    %v826 = vadd.f32 %v806, %v820
    %v827 = vadd.f32 %v807, %v821
    %v828 = vadd.f32 %v808, %v820
    %v829 = vadd.f32 %v809, %v821
    %v830 = vadd.f32 %v810, %v820
    %v831 = vadd.f32 %v811, %v821
    %v832 = vadd.f32 %v812, %v820
    %v833 = vadd.f32 %v813, %v821
    %v834 = vadd.f32 %v814, %v820
    %v835 = vadd.f32 %v815, %v821
    %v836 = vadd.f32 %v816, %v820
    %v837 = vadd.f32 %v817, %v821
    %v838 = vld [vmem:[%s4] sm:$0xff]
    %v839 = vld [vmem:[%s4 + $0x8] sm:$0xff]
    %v840 = vld [vmem:[%s4 + $0x10] sm:$0xff]
    %v841 = vld [vmem:[%s4 + $0x18] sm:$0xff]
    %v842 = vld [vmem:[%s4 + $0x20] sm:$0xff]
    %v843 = vld [vmem:[%s4 + $0x28] sm:$0xff]
    %v844 = vld [vmem:[%s4 + $0x30] sm:$0xff]
    %846 = vset.pattern.permute.xlu0 0
    %847 = vperm.xlu0 %846, %v838
    %v848 = vpop.permute.xlu0 %847
    %851 = vset.pattern.permute.xlu0 0
    %852 = vperm.xlu0 %851, %v839
    %v853 = vpop.permute.xlu0 %852
    %856 = vset.pattern.permute.xlu0 0
    %857 = vperm.xlu0 %856, %v840
    %v858 = vpop.permute.xlu0 %857
    %861 = vset.pattern.permute.xlu0 0
    %862 = vperm.xlu0 %861, %v841
    %v863 = vpop.permute.xlu0 %862
    %866 = vset.pattern.permute.xlu0 0
    %867 = vperm.xlu0 %866, %v842
    %v868 = vpop.permute.xlu0 %867
    %871 = vset.pattern.permute.xlu0 0
    %872 = vperm.xlu0 %871, %v843
    %v873 = vpop.permute.xlu0 %872
    %876 = vset.pattern.permute.xlu0 0
    %877 = vperm.xlu0 %876, %v844
    %v878 = vpop.permute.xlu0 %877
    %v880 = vadd.f32 %v824, %v848
    %v881 = vadd.f32 %v825, %v848
    %v882 = vadd.f32 %v826, %v853
    %v883 = vadd.f32 %v827, %v853
    %v884 = vadd.f32 %v828, %v858
    %v885 = vadd.f32 %v829, %v858
    %v886 = vadd.f32 %v830, %v863
    %v887 = vadd.f32 %v831, %v863
    %v888 = vadd.f32 %v832, %v868
    %v889 = vadd.f32 %v833, %v868
    %v890 = vadd.f32 %v834, %v873
    %v891 = vadd.f32 %v835, %v873
    %v892 = vadd.f32 %v836, %v878
    %v893 = vadd.f32 %v837, %v878
    %vm908 = vcmask 1041408
    %v909 = vrot.slane %v880, 6
    %v910 = vrot.slane %v881, 6
    %v911 = vrot.slane %v882, 6
    %v912 = vsel %vm908, %v909, %v911
    %v913 = vrot.slane %v883, 6
    %v914 = vsel %vm908, %v910, %v913
    %v915 = vrot.slane %v884, 6
    %v916 = vsel %vm908, %v911, %v915
    %v917 = vrot.slane %v885, 6
    %v918 = vsel %vm908, %v913, %v917
    %v919 = vrot.slane %v886, 6
    %v920 = vsel %vm908, %v915, %v919
    %v921 = vrot.slane %v887, 6
    %v922 = vsel %vm908, %v917, %v921
    %v923 = vrot.slane %v888, 6
    %v924 = vsel %vm908, %v919, %v923
    %v925 = vrot.slane %v889, 6
    %v926 = vsel %vm908, %v921, %v925
    %v927 = vrot.slane %v890, 6
    %v928 = vsel %vm908, %v923, %v927
    %v929 = vrot.slane %v891, 6
    %v930 = vsel %vm908, %v925, %v929
    %v931 = vrot.slane %v892, 6
    %v932 = vsel %vm908, %v927, %v931
    %v933 = vrot.slane %v893, 6
    %v934 = vsel %vm908, %v929, %v933
    %v951 = vsel %vm908, -1e+30, %v909
    %v952 = vsel %vm908, -1e+30, %v910
    %v953 = vsel %vm908, %v931, -1e+30
    %v954 = vsel %vm908, %v933, -1e+30
    %v959 = vrot.slane %v951, 1
    %v960 = vrot.slane %v912, 1
    %v961 = vsel %vm300, %v959, %v960
    %v962 = vrot.slane %v952, 1
    %v963 = vrot.slane %v914, 1
    %v964 = vsel %vm300, %v962, %v963
    %v965 = vrot.slane %v916, 1
    %v966 = vsel %vm300, %v960, %v965
    %v967 = vrot.slane %v918, 1
    %v968 = vsel %vm300, %v963, %v967
    %v969 = vrot.slane %v920, 1
    %v970 = vsel %vm300, %v965, %v969
    %v971 = vrot.slane %v922, 1
    %v972 = vsel %vm300, %v967, %v971
    %v973 = vrot.slane %v924, 1
    %v974 = vsel %vm300, %v969, %v973
    %v975 = vrot.slane %v926, 1
    %v976 = vsel %vm300, %v971, %v975
    %v977 = vrot.slane %v928, 1
    %v978 = vsel %vm300, %v973, %v977
    %v979 = vrot.slane %v930, 1
    %v980 = vsel %vm300, %v975, %v979
    %v981 = vrot.slane %v932, 1
    %v982 = vsel %vm300, %v977, %v981
    %v983 = vrot.slane %v934, 1
    %v984 = vsel %vm300, %v979, %v983
    %v985 = vrot.slane %v953, 1
    %v986 = vsel %vm300, %v981, %v985
    %v987 = vrot.slane %v954, 1
    %v988 = vsel %vm300, %v983, %v987
    %v1003 = vmax.f32 %v951, %v961
    %v1004 = vmax.f32 %v952, %v964
    %v1005 = vmax.f32 %v912, %v966
    %v1006 = vmax.f32 %v914, %v968
    %v1007 = vmax.f32 %v916, %v970
    %v1008 = vmax.f32 %v918, %v972
    %v1009 = vmax.f32 %v920, %v974
    %v1010 = vmax.f32 %v922, %v976
    %v1011 = vmax.f32 %v924, %v978
    %v1012 = vmax.f32 %v926, %v980
    %v1013 = vmax.f32 %v928, %v982
    %v1014 = vmax.f32 %v930, %v984
    %v1015 = vmax.f32 %v932, %v986
    %v1016 = vmax.f32 %v934, %v988
    %vm1017 = vcmask 1045504
    %v1018 = vrot.slane %v951, 2
    %v1019 = vrot.slane %v912, 2
    %v1020 = vsel %vm1017, %v1018, %v1019
    %v1021 = vrot.slane %v952, 2
    %v1022 = vrot.slane %v914, 2
    %v1023 = vsel %vm1017, %v1021, %v1022
    %v1024 = vrot.slane %v916, 2
    %v1025 = vsel %vm1017, %v1019, %v1024
    %v1026 = vrot.slane %v918, 2
    %v1027 = vsel %vm1017, %v1022, %v1026
    %v1028 = vrot.slane %v920, 2
    %v1029 = vsel %vm1017, %v1024, %v1028
    %v1030 = vrot.slane %v922, 2
    %v1031 = vsel %vm1017, %v1026, %v1030
    %v1032 = vrot.slane %v924, 2
    %v1033 = vsel %vm1017, %v1028, %v1032
    %v1034 = vrot.slane %v926, 2
    %v1035 = vsel %vm1017, %v1030, %v1034
    %v1036 = vrot.slane %v928, 2
    %v1037 = vsel %vm1017, %v1032, %v1036
    %v1038 = vrot.slane %v930, 2
    %v1039 = vsel %vm1017, %v1034, %v1038
    %v1040 = vrot.slane %v932, 2
    %v1041 = vsel %vm1017, %v1036, %v1040
    %v1042 = vrot.slane %v934, 2
    %v1043 = vsel %vm1017, %v1038, %v1042
    %v1044 = vrot.slane %v953, 2
    %v1045 = vsel %vm1017, %v1040, %v1044
    %v1046 = vrot.slane %v954, 2
    %v1047 = vsel %vm1017, %v1042, %v1046
    %v1062 = vmax.f32 %v1003, %v1020
    %v1063 = vmax.f32 %v1004, %v1023
    %v1064 = vmax.f32 %v1005, %v1025
    %v1065 = vmax.f32 %v1006, %v1027
    %v1066 = vmax.f32 %v1007, %v1029
    %v1067 = vmax.f32 %v1008, %v1031
    %v1068 = vmax.f32 %v1009, %v1033
    %v1069 = vmax.f32 %v1010, %v1035
    %v1070 = vmax.f32 %v1011, %v1037
    %v1071 = vmax.f32 %v1012, %v1039
    %v1072 = vmax.f32 %v1013, %v1041
    %v1073 = vmax.f32 %v1014, %v1043
    %v1074 = vmax.f32 %v1015, %v1045
    %v1075 = vmax.f32 %v1016, %v1047
    %vm1076 = vcmask 1044480
    %v1077 = vrot.slane %v951, 3
    %v1078 = vrot.slane %v912, 3
    %v1079 = vsel %vm1076, %v1077, %v1078
    %v1080 = vrot.slane %v952, 3
    %v1081 = vrot.slane %v914, 3
    %v1082 = vsel %vm1076, %v1080, %v1081
    %v1083 = vrot.slane %v916, 3
    %v1084 = vsel %vm1076, %v1078, %v1083
    %v1085 = vrot.slane %v918, 3
    %v1086 = vsel %vm1076, %v1081, %v1085
    %v1087 = vrot.slane %v920, 3
    %v1088 = vsel %vm1076, %v1083, %v1087
    %v1089 = vrot.slane %v922, 3
    %v1090 = vsel %vm1076, %v1085, %v1089
    %v1091 = vrot.slane %v924, 3
    %v1092 = vsel %vm1076, %v1087, %v1091
    %v1093 = vrot.slane %v926, 3
    %v1094 = vsel %vm1076, %v1089, %v1093
    %v1095 = vrot.slane %v928, 3
    %v1096 = vsel %vm1076, %v1091, %v1095
    %v1097 = vrot.slane %v930, 3
    %v1098 = vsel %vm1076, %v1093, %v1097
    %v1099 = vrot.slane %v932, 3
    %v1100 = vsel %vm1076, %v1095, %v1099
    %v1101 = vrot.slane %v934, 3
    %v1102 = vsel %vm1076, %v1097, %v1101
    %v1103 = vrot.slane %v953, 3
    %v1104 = vsel %vm1076, %v1099, %v1103
    %v1105 = vrot.slane %v954, 3
    %v1106 = vsel %vm1076, %v1101, %v1105
    %v1121 = vmax.f32 %v1062, %v1079
    %v1122 = vmax.f32 %v1063, %v1082
    %v1123 = vmax.f32 %v1064, %v1084
    %v1124 = vmax.f32 %v1065, %v1086
    %v1125 = vmax.f32 %v1066, %v1088
    %v1126 = vmax.f32 %v1067, %v1090
    %v1127 = vmax.f32 %v1068, %v1092
    %v1128 = vmax.f32 %v1069, %v1094
    %v1129 = vmax.f32 %v1070, %v1096
    %v1130 = vmax.f32 %v1071, %v1098
    %v1131 = vmax.f32 %v1072, %v1100
    %v1132 = vmax.f32 %v1073, %v1102
    %v1133 = vmax.f32 %v1074, %v1104
    %v1134 = vmax.f32 %v1075, %v1106
    %vm1135 = vcmask 1043456
    %v1136 = vrot.slane %v951, 4
    %v1137 = vrot.slane %v912, 4
    %v1138 = vsel %vm1135, %v1136, %v1137
    %v1139 = vrot.slane %v952, 4
    %v1140 = vrot.slane %v914, 4
    %v1141 = vsel %vm1135, %v1139, %v1140
    %v1142 = vrot.slane %v916, 4
    %v1143 = vsel %vm1135, %v1137, %v1142
    %v1144 = vrot.slane %v918, 4
    %v1145 = vsel %vm1135, %v1140, %v1144
    %v1146 = vrot.slane %v920, 4
    %v1147 = vsel %vm1135, %v1142, %v1146
    %v1148 = vrot.slane %v922, 4
    %v1149 = vsel %vm1135, %v1144, %v1148
    %v1150 = vrot.slane %v924, 4
    %v1151 = vsel %vm1135, %v1146, %v1150
    %v1152 = vrot.slane %v926, 4
    %v1153 = vsel %vm1135, %v1148, %v1152
    %v1154 = vrot.slane %v928, 4
    %v1155 = vsel %vm1135, %v1150, %v1154
    %v1156 = vrot.slane %v930, 4
    %v1157 = vsel %vm1135, %v1152, %v1156
    %v1158 = vrot.slane %v932, 4
    %v1159 = vsel %vm1135, %v1154, %v1158
    %v1160 = vrot.slane %v934, 4
    %v1161 = vsel %vm1135, %v1156, %v1160
    %v1162 = vrot.slane %v953, 4
    %v1163 = vsel %vm1135, %v1158, %v1162
    %v1164 = vrot.slane %v954, 4
    %v1165 = vsel %vm1135, %v1160, %v1164
    %v1180 = vmax.f32 %v1121, %v1138
    %v1181 = vmax.f32 %v1122, %v1141
    %v1182 = vmax.f32 %v1123, %v1143
    %v1183 = vmax.f32 %v1124, %v1145
    %v1184 = vmax.f32 %v1125, %v1147
    %v1185 = vmax.f32 %v1126, %v1149
    %v1186 = vmax.f32 %v1127, %v1151
    %v1187 = vmax.f32 %v1128, %v1153
    %v1188 = vmax.f32 %v1129, %v1155
    %v1189 = vmax.f32 %v1130, %v1157
    %v1190 = vmax.f32 %v1131, %v1159
    %v1191 = vmax.f32 %v1132, %v1161
    %v1192 = vmax.f32 %v1133, %v1163
    %v1193 = vmax.f32 %v1134, %v1165
    %1208 = vrot.lane.b32.xlu0 %v1180, 10
    %v1209 = vpop.permute.xlu0 %1208
    %1210 = vrot.lane.b32.xlu0 %v1181, 10
    %v1211 = vpop.permute.xlu0 %1210
    %1212 = vrot.lane.b32.xlu0 %v1182, 10
    %v1213 = vpop.permute.xlu0 %1212
    %1214 = vrot.lane.b32.xlu0 %v1183, 10
    %v1215 = vpop.permute.xlu0 %1214
    %1216 = vrot.lane.b32.xlu0 %v1184, 10
    %v1217 = vpop.permute.xlu0 %1216
    %1218 = vrot.lane.b32.xlu0 %v1185, 10
    %v1219 = vpop.permute.xlu0 %1218
    %1220 = vrot.lane.b32.xlu0 %v1186, 10
    %v1221 = vpop.permute.xlu0 %1220
    %1222 = vrot.lane.b32.xlu0 %v1187, 10
    %v1223 = vpop.permute.xlu0 %1222
    %1224 = vrot.lane.b32.xlu0 %v1188, 10
    %v1225 = vpop.permute.xlu0 %1224
    %1226 = vrot.lane.b32.xlu0 %v1189, 10
    %v1227 = vpop.permute.xlu0 %1226
    %1228 = vrot.lane.b32.xlu0 %v1190, 10
    %v1229 = vpop.permute.xlu0 %1228
    %1230 = vrot.lane.b32.xlu0 %v1191, 10
    %v1231 = vpop.permute.xlu0 %1230
    %1232 = vrot.lane.b32.xlu0 %v1192, 10
    %v1233 = vpop.permute.xlu0 %1232
    %1234 = vrot.lane.b32.xlu0 %v1193, 10
    %v1235 = vpop.permute.xlu0 %1234
    %vm1236 = vcmask 80896
    %v1237 = vsel %vm1236, %v1209, %v1211
    %v1238 = vsel %vm1236, %v1213, %v1215
    %v1239 = vsel %vm1236, %v1217, %v1219
    %v1240 = vsel %vm1236, %v1221, %v1223
    %v1241 = vsel %vm1236, %v1225, %v1227
    %v1242 = vsel %vm1236, %v1229, %v1231
    %v1243 = vsel %vm1236, %v1233, %v1235
    %v1258 = vsel %vm1236, -1e+30, %v1209
    %v1259 = vsel %vm1236, -1e+30, %v1213
    %v1260 = vsel %vm1236, -1e+30, %v1217
    %v1261 = vsel %vm1236, -1e+30, %v1221
    %v1262 = vsel %vm1236, -1e+30, %v1225
    %v1263 = vsel %vm1236, -1e+30, %v1229
    %v1264 = vsel %vm1236, -1e+30, %v1233
    %vm1265 = vcmask 97280
    %v1266 = vsel %vm1265, %v1237, -1e+30
    %v1267 = vsel %vm1265, %v1238, -1e+30
    %v1268 = vsel %vm1265, %v1239, -1e+30
    %v1269 = vsel %vm1265, %v1240, -1e+30
    %v1270 = vsel %vm1265, %v1241, -1e+30
    %v1271 = vsel %vm1265, %v1242, -1e+30
    %v1272 = vsel %vm1265, %v1243, -1e+30
    %1287 = vrot.lane.b32.xlu0 %v1258, 123
    %v1288 = vpop.permute.xlu0 %1287
    %1289 = vrot.lane.b32.xlu0 %v1266, 123
    %v1290 = vpop.permute.xlu0 %1289
    %1291 = vrot.lane.b32.xlu0 %v1259, 123
    %v1292 = vpop.permute.xlu0 %1291
    %1293 = vrot.lane.b32.xlu0 %v1267, 123
    %v1294 = vpop.permute.xlu0 %1293
    %1295 = vrot.lane.b32.xlu0 %v1260, 123
    %v1296 = vpop.permute.xlu0 %1295
    %1297 = vrot.lane.b32.xlu0 %v1268, 123
    %v1298 = vpop.permute.xlu0 %1297
    %1299 = vrot.lane.b32.xlu0 %v1261, 123
    %v1300 = vpop.permute.xlu0 %1299
    %1301 = vrot.lane.b32.xlu0 %v1269, 123
    %v1302 = vpop.permute.xlu0 %1301
    %1303 = vrot.lane.b32.xlu0 %v1262, 123
    %v1304 = vpop.permute.xlu0 %1303
    %1305 = vrot.lane.b32.xlu0 %v1270, 123
    %v1306 = vpop.permute.xlu0 %1305
    %1307 = vrot.lane.b32.xlu0 %v1263, 123
    %v1308 = vpop.permute.xlu0 %1307
    %1309 = vrot.lane.b32.xlu0 %v1271, 123
    %v1310 = vpop.permute.xlu0 %1309
    %1311 = vrot.lane.b32.xlu0 %v1264, 123
    %v1312 = vpop.permute.xlu0 %1311
    %1313 = vrot.lane.b32.xlu0 %v1272, 123
    %v1314 = vpop.permute.xlu0 %1313
    %vm1315 = vcmask 1006592
    %v1316 = vsel %vm1315, %v1288, %v1290
    %v1317 = vsel %vm1315, %v1292, %v1294
    %v1318 = vsel %vm1315, %v1296, %v1298
    %v1319 = vsel %vm1315, %v1300, %v1302
    %v1320 = vsel %vm1315, %v1304, %v1306
    %v1321 = vsel %vm1315, %v1308, %v1310
    %v1322 = vsel %vm1315, %v1312, %v1314
    %v1337 = vmax.f32 %v1258, %v1316
    %v1338 = vmax.f32 %v1266, %v1290
    %v1339 = vmax.f32 %v1259, %v1317
    %v1340 = vmax.f32 %v1267, %v1294
    %v1341 = vmax.f32 %v1260, %v1318
    %v1342 = vmax.f32 %v1268, %v1298
    %v1343 = vmax.f32 %v1261, %v1319
    %v1344 = vmax.f32 %v1269, %v1302
    %v1345 = vmax.f32 %v1262, %v1320
    %v1346 = vmax.f32 %v1270, %v1306
    %v1347 = vmax.f32 %v1263, %v1321
    %v1348 = vmax.f32 %v1271, %v1310
    %v1349 = vmax.f32 %v1264, %v1322
    %v1350 = vmax.f32 %v1272, %v1314
    %1351 = vrot.lane.b32.xlu0 %v1258, 118
    %v1352 = vpop.permute.xlu0 %1351
    %1353 = vrot.lane.b32.xlu0 %v1266, 118
    %v1354 = vpop.permute.xlu0 %1353
    %1355 = vrot.lane.b32.xlu0 %v1259, 118
    %v1356 = vpop.permute.xlu0 %1355
    %1357 = vrot.lane.b32.xlu0 %v1267, 118
    %v1358 = vpop.permute.xlu0 %1357
    %1359 = vrot.lane.b32.xlu0 %v1260, 118
    %v1360 = vpop.permute.xlu0 %1359
    %1361 = vrot.lane.b32.xlu0 %v1268, 118
    %v1362 = vpop.permute.xlu0 %1361
    %1363 = vrot.lane.b32.xlu0 %v1261, 118
    %v1364 = vpop.permute.xlu0 %1363
    %1365 = vrot.lane.b32.xlu0 %v1269, 118
    %v1366 = vpop.permute.xlu0 %1365
    %1367 = vrot.lane.b32.xlu0 %v1262, 118
    %v1368 = vpop.permute.xlu0 %1367
    %1369 = vrot.lane.b32.xlu0 %v1270, 118
    %v1370 = vpop.permute.xlu0 %1369
    %1371 = vrot.lane.b32.xlu0 %v1263, 118
    %v1372 = vpop.permute.xlu0 %1371
    %1373 = vrot.lane.b32.xlu0 %v1271, 118
    %v1374 = vpop.permute.xlu0 %1373
    %1375 = vrot.lane.b32.xlu0 %v1264, 118
    %v1376 = vpop.permute.xlu0 %1375
    %1377 = vrot.lane.b32.xlu0 %v1272, 118
    %v1378 = vpop.permute.xlu0 %1377
    %vm1379 = vcmask 965632
    %v1380 = vsel %vm1379, %v1352, %v1354
    %v1381 = vsel %vm1379, %v1356, %v1358
    %v1382 = vsel %vm1379, %v1360, %v1362
    %v1383 = vsel %vm1379, %v1364, %v1366
    %v1384 = vsel %vm1379, %v1368, %v1370
    %v1385 = vsel %vm1379, %v1372, %v1374
    %v1386 = vsel %vm1379, %v1376, %v1378
    %v1401 = vmax.f32 %v1337, %v1380
    %v1402 = vmax.f32 %v1338, %v1354
    %v1403 = vmax.f32 %v1339, %v1381
    %v1404 = vmax.f32 %v1340, %v1358
    %v1405 = vmax.f32 %v1341, %v1382
    %v1406 = vmax.f32 %v1342, %v1362
    %v1407 = vmax.f32 %v1343, %v1383
    %v1408 = vmax.f32 %v1344, %v1366
    %v1409 = vmax.f32 %v1345, %v1384
    %v1410 = vmax.f32 %v1346, %v1370
    %v1411 = vmax.f32 %v1347, %v1385
    %v1412 = vmax.f32 %v1348, %v1374
    %v1413 = vmax.f32 %v1349, %v1386
    %v1414 = vmax.f32 %v1350, %v1378
    %1415 = vrot.lane.b32.xlu0 %v1258, 113
    %v1416 = vpop.permute.xlu0 %1415
    %1417 = vrot.lane.b32.xlu0 %v1266, 113
    %v1418 = vpop.permute.xlu0 %1417
    %1419 = vrot.lane.b32.xlu0 %v1259, 113
    %v1420 = vpop.permute.xlu0 %1419
    %1421 = vrot.lane.b32.xlu0 %v1267, 113
    %v1422 = vpop.permute.xlu0 %1421
    %1423 = vrot.lane.b32.xlu0 %v1260, 113
    %v1424 = vpop.permute.xlu0 %1423
    %1425 = vrot.lane.b32.xlu0 %v1268, 113
    %v1426 = vpop.permute.xlu0 %1425
    %1427 = vrot.lane.b32.xlu0 %v1261, 113
    %v1428 = vpop.permute.xlu0 %1427
    %1429 = vrot.lane.b32.xlu0 %v1269, 113
    %v1430 = vpop.permute.xlu0 %1429
    %1431 = vrot.lane.b32.xlu0 %v1262, 113
    %v1432 = vpop.permute.xlu0 %1431
    %1433 = vrot.lane.b32.xlu0 %v1270, 113
    %v1434 = vpop.permute.xlu0 %1433
    %1435 = vrot.lane.b32.xlu0 %v1263, 113
    %v1436 = vpop.permute.xlu0 %1435
    %1437 = vrot.lane.b32.xlu0 %v1271, 113
    %v1438 = vpop.permute.xlu0 %1437
    %1439 = vrot.lane.b32.xlu0 %v1264, 113
    %v1440 = vpop.permute.xlu0 %1439
    %1441 = vrot.lane.b32.xlu0 %v1272, 113
    %v1442 = vpop.permute.xlu0 %1441
    %vm1443 = vcmask 924672
    %v1444 = vsel %vm1443, %v1416, %v1418
    %v1445 = vsel %vm1443, %v1420, %v1422
    %v1446 = vsel %vm1443, %v1424, %v1426
    %v1447 = vsel %vm1443, %v1428, %v1430
    %v1448 = vsel %vm1443, %v1432, %v1434
    %v1449 = vsel %vm1443, %v1436, %v1438
    %v1450 = vsel %vm1443, %v1440, %v1442
    %v1465 = vmax.f32 %v1401, %v1444
    %v1466 = vmax.f32 %v1402, %v1418
    %v1467 = vmax.f32 %v1403, %v1445
    %v1468 = vmax.f32 %v1404, %v1422
    %v1469 = vmax.f32 %v1405, %v1446
    %v1470 = vmax.f32 %v1406, %v1426
    %v1471 = vmax.f32 %v1407, %v1447
    %v1472 = vmax.f32 %v1408, %v1430
    %v1473 = vmax.f32 %v1409, %v1448
    %v1474 = vmax.f32 %v1410, %v1434
    %v1475 = vmax.f32 %v1411, %v1449
    %v1476 = vmax.f32 %v1412, %v1438
    %v1477 = vmax.f32 %v1413, %v1450
    %v1478 = vmax.f32 %v1414, %v1442
    %1479 = vrot.lane.b32.xlu0 %v1258, 108
    %v1480 = vpop.permute.xlu0 %1479
    %1481 = vrot.lane.b32.xlu0 %v1266, 108
    %v1482 = vpop.permute.xlu0 %1481
    %1483 = vrot.lane.b32.xlu0 %v1259, 108
    %v1484 = vpop.permute.xlu0 %1483
    %1485 = vrot.lane.b32.xlu0 %v1267, 108
    %v1486 = vpop.permute.xlu0 %1485
    %1487 = vrot.lane.b32.xlu0 %v1260, 108
    %v1488 = vpop.permute.xlu0 %1487
    %1489 = vrot.lane.b32.xlu0 %v1268, 108
    %v1490 = vpop.permute.xlu0 %1489
    %1491 = vrot.lane.b32.xlu0 %v1261, 108
    %v1492 = vpop.permute.xlu0 %1491
    %1493 = vrot.lane.b32.xlu0 %v1269, 108
    %v1494 = vpop.permute.xlu0 %1493
    %1495 = vrot.lane.b32.xlu0 %v1262, 108
    %v1496 = vpop.permute.xlu0 %1495
    %1497 = vrot.lane.b32.xlu0 %v1270, 108
    %v1498 = vpop.permute.xlu0 %1497
    %1499 = vrot.lane.b32.xlu0 %v1263, 108
    %v1500 = vpop.permute.xlu0 %1499
    %1501 = vrot.lane.b32.xlu0 %v1271, 108
    %v1502 = vpop.permute.xlu0 %1501
    %1503 = vrot.lane.b32.xlu0 %v1264, 108
    %v1504 = vpop.permute.xlu0 %1503
    %1505 = vrot.lane.b32.xlu0 %v1272, 108
    %v1506 = vpop.permute.xlu0 %1505
    %vm1507 = vcmask 883712
    %v1508 = vsel %vm1507, %v1480, %v1482
    %v1509 = vsel %vm1507, %v1484, %v1486
    %v1510 = vsel %vm1507, %v1488, %v1490
    %v1511 = vsel %vm1507, %v1492, %v1494
    %v1512 = vsel %vm1507, %v1496, %v1498
    %v1513 = vsel %vm1507, %v1500, %v1502
    %v1514 = vsel %vm1507, %v1504, %v1506
    %v1529 = vmax.f32 %v1465, %v1508
    %v1530 = vmax.f32 %v1466, %v1482
    %v1531 = vmax.f32 %v1467, %v1509
    %v1532 = vmax.f32 %v1468, %v1486
    %v1533 = vmax.f32 %v1469, %v1510
    %v1534 = vmax.f32 %v1470, %v1490
    %v1535 = vmax.f32 %v1471, %v1511
    %v1536 = vmax.f32 %v1472, %v1494
    %v1537 = vmax.f32 %v1473, %v1512
    %v1538 = vmax.f32 %v1474, %v1498
    %v1539 = vmax.f32 %v1475, %v1513
    %v1540 = vmax.f32 %v1476, %v1502
    %v1541 = vmax.f32 %v1477, %v1514
    %v1542 = vmax.f32 %v1478, %v1506
    %v1543 = vmax.f32 %v1529, 0.0
    %v1544 = vmax.f32 %v1530, 0.0
    %v1545 = vmax.f32 %v1531, 0.0
    %v1546 = vmax.f32 %v1532, 0.0
    %v1547 = vmax.f32 %v1533, 0.0
    %v1548 = vmax.f32 %v1534, 0.0
    %v1549 = vmax.f32 %v1535, 0.0
    %v1550 = vmax.f32 %v1536, 0.0
    %v1551 = vmax.f32 %v1537, 0.0
    %v1552 = vmax.f32 %v1538, 0.0
    %v1553 = vmax.f32 %v1539, 0.0
    %v1554 = vmax.f32 %v1540, 0.0
    %v1555 = vmax.f32 %v1541, 0.0
    %v1556 = vmax.f32 %v1542, 0.0
    %v1557 = vmin.f32 %v1543, 6.0
    %v1558 = vmin.f32 %v1544, 6.0
    %v1559 = vmin.f32 %v1545, 6.0
    %v1560 = vmin.f32 %v1546, 6.0
    %v1561 = vmin.f32 %v1547, 6.0
    %v1562 = vmin.f32 %v1548, 6.0
    %v1563 = vmin.f32 %v1549, 6.0
    %v1564 = vmin.f32 %v1550, 6.0
    %v1565 = vmin.f32 %v1551, 6.0
    %v1566 = vmin.f32 %v1552, 6.0
    %v1567 = vmin.f32 %v1553, 6.0
    %v1568 = vmin.f32 %v1554, 6.0
    %v1569 = vmin.f32 %v1555, 6.0
    %v1570 = vmin.f32 %v1556, 6.0
    %v1571 = vld [vmem:[%s5] sm:$0xf]
    %v1572 = vld [vmem:[%s5 + $0x4] sm:$0xf]
    %v1573 = vld [vmem:[%s5 + $0x8] sm:$0xf]
    %v1574 = vld [vmem:[%s5 + $0xc] sm:$0x1]
    %v1575 = vpack.c.bf16 %v1559, %v1557
    %v1576 = vpack.c.bf16 %v1560, %v1558
    %v1577 = vpack.c.bf16 %v1563, %v1561
    %v1578 = vpack.c.bf16 %v1564, %v1562
    %v1579 = vpack.c.bf16 %v1567, %v1565
    %v1580 = vpack.c.bf16 %v1568, %v1566
    %v1581 = vpack.c.bf16 %v1569, %v1569
    %v1582 = vpack.c.bf16 %v1570, %v1570
    %v1587 = vunpack.c.l.b16 %v1571
    %v1588 = vunpack.c.l.b16 %v1572
    %v1589 = vunpack.c.l.b16 %v1573
    %v1590 = vunpack.c.l.b16 %v1574
    %v1591 = vpack.c.b16 %v1588, %v1587
    %v1592 = vpack.c.b16 %v1590, %v1589
    %vm1593 = vcmask 457728
    %v1595 = vsel %vm1593, %v1591, 0
    %v1598 = vsel %vm1593, %v1592, 0
    %v1601 = vsel %vm1135, %v1581, 0
    %v1604 = vsel %vm1135, %v1582, 0
    %1606 = vmatpush.bf16.msra.mxu0 0
    %1607 = vmatpush.bf16.msra.mxu0 0
    %1608 = vmatpush.bf16.msra.mxu0 0
    %1609 = vmatpush.bf16.msra.mxu0 0
    %1610 = vmatpush.bf16.msra.mxu0 %v1601
    %1611 = vmatpush.bf16.msra.mxu0 %v1579
    %1612 = vmatpush.bf16.msra.mxu0 %v1577
    %1613 = vmatpush.bf16.msra.mxu0 %v1575
    %1614 = vmatmul.bf16.gmra.mxu0 %v1595
    %v1615 = vpop.f32.mrf.mxu0
    %v1616 = vadd.f32 0.0, %v1615
    %v1617 = vpop.f32.mrf.mxu0
    %v1618 = vadd.f32 0.0, %v1617
    %1619 = vmatmul.bf16.gmra.mxu0 %v1598
    %v1620 = vpop.f32.mrf.mxu0
    %v1621 = vadd.f32 0.0, %v1620
    %v1622 = vpop.f32.mrf.mxu0
    %v1623 = vadd.f32 0.0, %v1622
    %1624 = vdwg.mxu0
    %1625 = vmatpush.bf16.msra.mxu0 0
    %1626 = vmatpush.bf16.msra.mxu0 0
    %1627 = vmatpush.bf16.msra.mxu0 0
    %1628 = vmatpush.bf16.msra.mxu0 0
    %1629 = vmatpush.bf16.msra.mxu0 %v1604
    %1630 = vmatpush.bf16.msra.mxu0 %v1580
    %1631 = vmatpush.bf16.msra.mxu0 %v1578
    %1632 = vmatpush.bf16.msra.mxu0 %v1576
    %1633 = vmatmul.bf16.gmra.mxu0 %v1595
    %v1634 = vpop.f32.mrf.mxu0
    %v1635 = vadd.f32 0.0, %v1634
    %v1636 = vpop.f32.mrf.mxu0
    %v1637 = vadd.f32 0.0, %v1636
    %1638 = vmatmul.bf16.gmra.mxu0 %v1598
    %v1639 = vpop.f32.mrf.mxu0
    %v1640 = vadd.f32 0.0, %v1639
    %v1641 = vpop.f32.mrf.mxu0
    %v1642 = vadd.f32 0.0, %v1641
    %1643 = vdwg.mxu0
    %v1644 = vpack.c.bf16 %v1618, %v1616
    %v1645 = vpack.c.bf16 %v1637, %v1635
    %v1646 = vpack.c.bf16 %v1623, %v1621
    %v1647 = vpack.c.bf16 %v1642, %v1640
    %v1648 = vld [vmem:[%s6] sm:$0xf]
    %v1649 = vld [vmem:[%s6 + $0x4] sm:$0xf]
    %v1650 = vld [vmem:[%s6 + $0x8] sm:$0xf]
    %v1651 = vld [vmem:[%s6 + $0xc] sm:$0xf]
    %v1652 = vld [vmem:[%s6 + $0x10] sm:$0xf]
    %v1653 = vld [vmem:[%s6 + $0x14] sm:$0xf]
    %v1654 = vld [vmem:[%s6 + $0x18] sm:$0xf]
    %v1655 = vld [vmem:[%s6 + $0x1c] sm:$0xf]
    %v1656 = vld [vmem:[%s6 + $0x20] sm:$0xf]
    %v1657 = vld [vmem:[%s6 + $0x24] sm:$0xf]
    %v1658 = vld [vmem:[%s6 + $0x28] sm:$0xf]
    %v1659 = vld [vmem:[%s6 + $0x2c] sm:$0xf]
    %v1660 = vld [vmem:[%s6 + $0x30] sm:$0xf]
    %v1661 = vld [vmem:[%s6 + $0x34] sm:$0xf]
    %v1662 = vld [vmem:[%s6 + $0x38] sm:$0xf]
    %v1663 = vld [vmem:[%s6 + $0x3c] sm:$0xf]
    %v1664 = vld [vmem:[%s6 + $0x40] sm:$0x1]
    %v1665 = vadd.f32 %v133, 0.0
    %v1666 = vadd.f32 %v167, 0.0
    %v1667 = vsel %vm1076, %v1665, %v1666
    %v1685 = vunpack.c.l.b16 %v1648
    %v1686 = vunpack.c.l.b16 %v1649
    %v1687 = vunpack.c.l.b16 %v1650
    %v1688 = vunpack.c.l.b16 %v1651
    %v1689 = vunpack.c.l.b16 %v1652
    %v1690 = vunpack.c.l.b16 %v1653
    %v1691 = vunpack.c.l.b16 %v1654
    %v1692 = vunpack.c.l.b16 %v1655
    %v1693 = vunpack.c.l.b16 %v1656
    %v1694 = vunpack.c.l.b16 %v1657
    %v1695 = vunpack.c.l.b16 %v1658
    %v1696 = vunpack.c.l.b16 %v1659
    %v1697 = vunpack.c.l.b16 %v1660
    %v1698 = vunpack.c.l.b16 %v1661
    %v1699 = vunpack.c.l.b16 %v1662
    %v1700 = vunpack.c.l.b16 %v1663
    %v1701 = vunpack.c.l.b16 %v1664
    %v1702 = vpack.c.b16 %v1686, %v1685
    %v1703 = vpack.c.b16 %v1688, %v1687
    %v1704 = vpack.c.b16 %v1690, %v1689
    %v1705 = vpack.c.b16 %v1692, %v1691
    %v1706 = vpack.c.b16 %v1694, %v1693
    %v1707 = vpack.c.b16 %v1696, %v1695
    %v1708 = vpack.c.b16 %v1698, %v1697
    %v1709 = vpack.c.b16 %v1700, %v1699
    %v1710 = vpack.c.b16 %v1701, %v1701
    %vm1719 = vcmask 15360
    %v1721 = vsel %vm1719, %v1645, 0
    %v1724 = vsel %vm1719, %v1647, 0
    %vm1726 = vcmask 1040384
    %v1728 = vsel %vm1726, %v1710, 0
    %1730 = vmatpush.bf16.msra.mxu0 %v1709
    %1731 = vmatpush.bf16.msra.mxu0 %v1708
    %1732 = vmatpush.bf16.msra.mxu0 %v1707
    %1733 = vmatpush.bf16.msra.mxu0 %v1706
    %1734 = vmatpush.bf16.msra.mxu0 %v1705
    %1735 = vmatpush.bf16.msra.mxu0 %v1704
    %1736 = vmatpush.bf16.msra.mxu0 %v1703
    %1737 = vmatpush.bf16.msra.mxu0 %v1702
    %1738 = vmatmul.bf16.gmra.mxu0 %v1644
    %v1739 = vpop.f32.mrf.mxu0
    %v1740 = vadd.f32 %v1665, %v1739
    %v1741 = vpop.f32.mrf.mxu0
    %v1742 = vadd.f32 %v1667, %v1741
    %1743 = vmatmul.bf16.gmra.mxu0 %v1646
    %v1744 = vpop.f32.mrf.mxu0
    %v1745 = vadd.f32 %v1666, %v1744
    %v1746 = vpop.f32.mrf.mxu0
    %v1747 = vadd.f32 %v1666, %v1746
    %1748 = vdwg.mxu0
    %1749 = vmatpush.bf16.msra.mxu0 0
    %1750 = vmatpush.bf16.msra.mxu0 0
    %1751 = vmatpush.bf16.msra.mxu0 0
    %1752 = vmatpush.bf16.msra.mxu0 0
    %1753 = vmatpush.bf16.msra.mxu0 0
    %1754 = vmatpush.bf16.msra.mxu0 0
    %1755 = vmatpush.bf16.msra.mxu0 0
    %1756 = vmatpush.bf16.msra.mxu0 %v1728
    %1757 = vmatmul.bf16.gmra.mxu0 %v1721
    %v1758 = vpop.f32.mrf.mxu0
    %v1759 = vadd.f32 %v1740, %v1758
    %v1760 = vpop.f32.mrf.mxu0
    %v1761 = vadd.f32 %v1742, %v1760
    %1762 = vmatmul.bf16.gmra.mxu0 %v1724
    %v1763 = vpop.f32.mrf.mxu0
    %v1764 = vadd.f32 %v1745, %v1763
    %v1765 = vpop.f32.mrf.mxu0
    %v1766 = vadd.f32 %v1747, %v1765
    %1767 = vdwg.mxu0
    %v1768 = vpack.c.bf16 %v1759, %v1759
    %v1769 = vpack.c.bf16 %v1761, %v1761
    %v1770 = vpack.c.bf16 %v1764, %v1764
    %v1771 = vpack.c.bf16 %v1766, %v1766
    %v1772 = vld [vmem:[%s7] sm:$0xff]
    %v1773 = vld [vmem:[%s7 + $0x8] sm:$0xff]
    %v1774 = vld [vmem:[%s7 + $0x10] sm:$0xff]
    %v1775 = vld [vmem:[%s7 + $0x18] sm:$0xff]
    %v1776 = vld [vmem:[%s7 + $0x20] sm:$0xff]
    %v1777 = vld [vmem:[%s7 + $0x28] sm:$0xff]
    %v1778 = vld [vmem:[%s7 + $0x30] sm:$0xff]
    %v1779 = vld [vmem:[%s7 + $0x38] sm:$0xff]
    %v1780 = vld [vmem:[%s7 + $0x40] sm:$0xff]
    %v1781 = vld [vmem:[%s7 + $0x48] sm:$0xff]
    %v1782 = vld [vmem:[%s7 + $0x50] sm:$0xff]
    %v1783 = vld [vmem:[%s7 + $0x58] sm:$0xff]
    %v1784 = vld [vmem:[%s7 + $0x60] sm:$0xff]
    %v1785 = vld [vmem:[%s7 + $0x68] sm:$0xff]
    %v1786 = vld [vmem:[%s7 + $0x70] sm:$0xff]
    %v1787 = vld [vmem:[%s7 + $0x78] sm:$0xff]
    %v1788 = vld [vmem:[%s7 + $0x80] sm:$0x11]
    %v1789 = vld [vmem:[%s7 + $0x88] sm:$0x11]
    %s1790 = scalar_lea.vmem %s7, 144
    %v1791 = vld [vmem:[%s1790] sm:$0xff]
    %v1792 = vld [vmem:[%s1790 + $0x8] sm:$0xff]
    %v1793 = vld [vmem:[%s1790 + $0x10] sm:$0xff]
    %v1794 = vld [vmem:[%s1790 + $0x18] sm:$0xff]
    %v1795 = vld [vmem:[%s1790 + $0x20] sm:$0xff]
    %v1796 = vld [vmem:[%s1790 + $0x28] sm:$0xff]
    %v1797 = vld [vmem:[%s1790 + $0x30] sm:$0xff]
    %v1798 = vld [vmem:[%s1790 + $0x38] sm:$0xff]
    %v1799 = vld [vmem:[%s1790 + $0x40] sm:$0xff]
    %v1800 = vld [vmem:[%s1790 + $0x48] sm:$0xff]
    %v1801 = vld [vmem:[%s1790 + $0x50] sm:$0xff]
    %v1802 = vld [vmem:[%s1790 + $0x58] sm:$0xff]
    %v1803 = vld [vmem:[%s1790 + $0x60] sm:$0xff]
    %v1804 = vld [vmem:[%s1790 + $0x68] sm:$0xff]
    %v1805 = vld [vmem:[%s1790 + $0x70] sm:$0xff]
    %v1806 = vld [vmem:[%s1790 + $0x78] sm:$0xff]
    %v1807 = vld [vmem:[%s1790 + $0x80] sm:$0x11]
    %v1808 = vld [vmem:[%s1790 + $0x88] sm:$0x11]
    %v1812 = vunpack.c.l.b16 %v1768
    %v1813 = vunpack.c.l.b16 %v1769
    %v1814 = vunpack.c.l.b16 %v1770
    %v1815 = vpack.c.b16 %v1813, %v1812
    %v1816 = vpack.c.b16 %v1814, %v1814
    %v1818 = vshrl.u32 %v1815, 16
    %v1820 = vshll.u32 %v1815, 16
    %v1822 = vrot.slane %v1820, 1
    %v1823 = vor.u32 %v1818, %v1822
    %v1825 = vshll.u32 %v1816, 16
    %v1827 = vrot.slane %v1825, 1
    %v1828 = vsel %vm238, %v1823, %v1827
    %v1829 = vshrl.u32 %v1816, 16
    %v1831 = vor.u32 %v1829, %v1827
    %v1850 = vunpack.c.l.b16 %v1791
    %v1851 = vunpack.c.h.b16 %v1791
    %v1852 = vunpack.c.l.b16 %v1792
    %v1853 = vunpack.c.h.b16 %v1792
    %v1854 = vunpack.c.l.b16 %v1793
    %v1855 = vunpack.c.h.b16 %v1793
    %v1856 = vunpack.c.l.b16 %v1794
    %v1857 = vunpack.c.h.b16 %v1794
    %v1858 = vunpack.c.l.b16 %v1795
    %v1859 = vunpack.c.h.b16 %v1795
    %v1860 = vunpack.c.l.b16 %v1796
    %v1861 = vunpack.c.h.b16 %v1796
    %v1862 = vunpack.c.l.b16 %v1797
    %v1863 = vunpack.c.h.b16 %v1797
    %v1864 = vunpack.c.l.b16 %v1798
    %v1865 = vunpack.c.h.b16 %v1798
    %v1866 = vunpack.c.l.b16 %v1799
    %v1867 = vunpack.c.h.b16 %v1799
    %v1868 = vunpack.c.l.b16 %v1800
    %v1869 = vunpack.c.h.b16 %v1800
    %v1870 = vunpack.c.l.b16 %v1801
    %v1871 = vunpack.c.h.b16 %v1801
    %v1872 = vunpack.c.l.b16 %v1802
    %v1873 = vunpack.c.h.b16 %v1802
    %v1874 = vunpack.c.l.b16 %v1803
    %v1875 = vunpack.c.h.b16 %v1803
    %v1876 = vunpack.c.l.b16 %v1804
    %v1877 = vunpack.c.h.b16 %v1804
    %v1878 = vunpack.c.l.b16 %v1805
    %v1879 = vunpack.c.h.b16 %v1805
    %v1880 = vunpack.c.l.b16 %v1806
    %v1881 = vunpack.c.h.b16 %v1806
    %v1882 = vunpack.c.l.b16 %v1807
    %v1883 = vunpack.c.h.b16 %v1807
    %v1884 = vunpack.c.l.b16 %v1808
    %v1885 = vunpack.c.h.b16 %v1808
    %v1886 = vpack.c.b16 %v1854, %v1850
    %v1887 = vpack.c.b16 %v1855, %v1851
    %v1888 = vpack.c.b16 %v1856, %v1852
    %v1889 = vpack.c.b16 %v1857, %v1853
    %v1890 = vpack.c.b16 %v1862, %v1858
    %v1891 = vpack.c.b16 %v1863, %v1859
    %v1892 = vpack.c.b16 %v1864, %v1860
    %v1893 = vpack.c.b16 %v1865, %v1861
    %v1894 = vpack.c.b16 %v1870, %v1866
    %v1895 = vpack.c.b16 %v1871, %v1867
    %v1896 = vpack.c.b16 %v1872, %v1868
    %v1897 = vpack.c.b16 %v1873, %v1869
    %v1898 = vpack.c.b16 %v1878, %v1874
    %v1899 = vpack.c.b16 %v1879, %v1875
    %v1900 = vpack.c.b16 %v1880, %v1876
    %v1901 = vpack.c.b16 %v1881, %v1877
    %v1902 = vpack.c.b16 %v1882, %v1882
    %v1903 = vpack.c.b16 %v1883, %v1883
    %v1904 = vpack.c.b16 %v1884, %v1884
    %v1905 = vpack.c.b16 %v1885, %v1885
    %vm1922 = vcmask 531456
    %v1924 = vsel %vm1922, %v1828, 0
    %v1927 = vsel %vm1922, %v1831, 0
    %v1929 = vsel 0, 4294967295, 65535
    %v1930 = vsel %vm1726, %v1929, 0
    %v1932 = vand.u32 %v1902, %v1930
    %v1935 = vand.u32 %v1903, %v1930
    %v1938 = vand.u32 %v1904, %v1930
    %v1941 = vand.u32 %v1905, %v1930
    %1943 = vmatpush.bf16.msra.mxu0 0
    %1944 = vmatpush.bf16.msra.mxu0 0
    %1945 = vmatpush.bf16.msra.mxu0 0
    %1946 = vmatpush.bf16.msra.mxu0 %v1932
    %1947 = vmatpush.bf16.msra.mxu0 %v1898
    %1948 = vmatpush.bf16.msra.mxu0 %v1894
    %1949 = vmatpush.bf16.msra.mxu0 %v1890
    %1950 = vmatpush.bf16.msra.mxu0 %v1886
    %1951 = vmatmul.bf16.gmra.mxu0 %v1924
    %v1952 = vpop.f32.mrf.mxu0
    %v1953 = vadd.f32 0.0, %v1952
    %v1954 = vpop.f32.mrf.mxu0
    %v1955 = vadd.f32 0.0, %v1954
    %1956 = vmatmul.bf16.gmra.mxu0 %v1927
    %v1957 = vpop.f32.mrf.mxu0
    %v1958 = vadd.f32 0.0, %v1957
    %v1959 = vpop.f32.mrf.mxu0
    %1960 = vdwg.mxu0
    %1961 = vmatpush.bf16.msra.mxu0 0
    %1962 = vmatpush.bf16.msra.mxu0 0
    %1963 = vmatpush.bf16.msra.mxu0 0
    %1964 = vmatpush.bf16.msra.mxu0 %v1935
    %1965 = vmatpush.bf16.msra.mxu0 %v1899
    %1966 = vmatpush.bf16.msra.mxu0 %v1895
    %1967 = vmatpush.bf16.msra.mxu0 %v1891
    %1968 = vmatpush.bf16.msra.mxu0 %v1887
    %1969 = vmatmul.bf16.gmra.mxu0 %v1924
    %v1970 = vpop.f32.mrf.mxu0
    %v1971 = vadd.f32 0.0, %v1970
    %v1972 = vpop.f32.mrf.mxu0
    %v1973 = vadd.f32 0.0, %v1972
    %1974 = vmatmul.bf16.gmra.mxu0 %v1927
    %v1975 = vpop.f32.mrf.mxu0
    %v1976 = vadd.f32 0.0, %v1975
    %v1977 = vpop.f32.mrf.mxu0
    %1978 = vdwg.mxu0
    %1979 = vmatpush.bf16.msra.mxu0 0
    %1980 = vmatpush.bf16.msra.mxu0 0
    %1981 = vmatpush.bf16.msra.mxu0 0
    %1982 = vmatpush.bf16.msra.mxu0 %v1938
    %1983 = vmatpush.bf16.msra.mxu0 %v1900
    %1984 = vmatpush.bf16.msra.mxu0 %v1896
    %1985 = vmatpush.bf16.msra.mxu0 %v1892
    %1986 = vmatpush.bf16.msra.mxu0 %v1888
    %1987 = vmatmul.bf16.gmra.mxu0 %v1924
    %v1988 = vpop.f32.mrf.mxu0
    %v1989 = vadd.f32 0.0, %v1988
    %v1990 = vpop.f32.mrf.mxu0
    %v1991 = vadd.f32 0.0, %v1990
    %1992 = vmatmul.bf16.gmra.mxu0 %v1927
    %v1993 = vpop.f32.mrf.mxu0
    %v1994 = vadd.f32 0.0, %v1993
    %v1995 = vpop.f32.mrf.mxu0
    %1996 = vdwg.mxu0
    %1997 = vmatpush.bf16.msra.mxu0 0
    %1998 = vmatpush.bf16.msra.mxu0 0
    %1999 = vmatpush.bf16.msra.mxu0 0
    %2000 = vmatpush.bf16.msra.mxu0 %v1941
    %2001 = vmatpush.bf16.msra.mxu0 %v1901
    %2002 = vmatpush.bf16.msra.mxu0 %v1897
    %2003 = vmatpush.bf16.msra.mxu0 %v1893
    %2004 = vmatpush.bf16.msra.mxu0 %v1889
    %2005 = vmatmul.bf16.gmra.mxu0 %v1924
    %v2006 = vpop.f32.mrf.mxu0
    %v2007 = vadd.f32 0.0, %v2006
    %v2008 = vpop.f32.mrf.mxu0
    %v2009 = vadd.f32 0.0, %v2008
    %2010 = vmatmul.bf16.gmra.mxu0 %v1927
    %v2011 = vpop.f32.mrf.mxu0
    %v2012 = vadd.f32 0.0, %v2011
    %v2013 = vpop.f32.mrf.mxu0
    %2014 = vdwg.mxu0
    %v2033 = vunpack.c.l.b16 %v1772
    %v2034 = vunpack.c.h.b16 %v1772
    %v2035 = vunpack.c.l.b16 %v1773
    %v2036 = vunpack.c.h.b16 %v1773
    %v2037 = vunpack.c.l.b16 %v1774
    %v2038 = vunpack.c.h.b16 %v1774
    %v2039 = vunpack.c.l.b16 %v1775
    %v2040 = vunpack.c.h.b16 %v1775
    %v2041 = vunpack.c.l.b16 %v1776
    %v2042 = vunpack.c.h.b16 %v1776
    %v2043 = vunpack.c.l.b16 %v1777
    %v2044 = vunpack.c.h.b16 %v1777
    %v2045 = vunpack.c.l.b16 %v1778
    %v2046 = vunpack.c.h.b16 %v1778
    %v2047 = vunpack.c.l.b16 %v1779
    %v2048 = vunpack.c.h.b16 %v1779
    %v2049 = vunpack.c.l.b16 %v1780
    %v2050 = vunpack.c.h.b16 %v1780
    %v2051 = vunpack.c.l.b16 %v1781
    %v2052 = vunpack.c.h.b16 %v1781
    %v2053 = vunpack.c.l.b16 %v1782
    %v2054 = vunpack.c.h.b16 %v1782
    %v2055 = vunpack.c.l.b16 %v1783
    %v2056 = vunpack.c.h.b16 %v1783
    %v2057 = vunpack.c.l.b16 %v1784
    %v2058 = vunpack.c.h.b16 %v1784
    %v2059 = vunpack.c.l.b16 %v1785
    %v2060 = vunpack.c.h.b16 %v1785
    %v2061 = vunpack.c.l.b16 %v1786
    %v2062 = vunpack.c.h.b16 %v1786
    %v2063 = vunpack.c.l.b16 %v1787
    %v2064 = vunpack.c.h.b16 %v1787
    %v2065 = vunpack.c.l.b16 %v1788
    %v2066 = vunpack.c.h.b16 %v1788
    %v2067 = vunpack.c.l.b16 %v1789
    %v2068 = vunpack.c.h.b16 %v1789
    %v2069 = vpack.c.b16 %v2037, %v2033
    %v2070 = vpack.c.b16 %v2038, %v2034
    %v2071 = vpack.c.b16 %v2039, %v2035
    %v2072 = vpack.c.b16 %v2040, %v2036
    %v2073 = vpack.c.b16 %v2045, %v2041
    %v2074 = vpack.c.b16 %v2046, %v2042
    %v2075 = vpack.c.b16 %v2047, %v2043
    %v2076 = vpack.c.b16 %v2048, %v2044
    %v2077 = vpack.c.b16 %v2053, %v2049
    %v2078 = vpack.c.b16 %v2054, %v2050
    %v2079 = vpack.c.b16 %v2055, %v2051
    %v2080 = vpack.c.b16 %v2056, %v2052
    %v2081 = vpack.c.b16 %v2061, %v2057
    %v2082 = vpack.c.b16 %v2062, %v2058
    %v2083 = vpack.c.b16 %v2063, %v2059
    %v2084 = vpack.c.b16 %v2064, %v2060
    %v2085 = vpack.c.b16 %v2065, %v2065
    %v2086 = vpack.c.b16 %v2066, %v2066
    %v2087 = vpack.c.b16 %v2067, %v2067
    %v2088 = vpack.c.b16 %v2068, %v2068
    %v2105 = vsel %vm1922, %v1815, 0
    %v2107 = vsel %vm1922, %v1816, 0
    %v2110 = vand.u32 %v2085, %v1930
    %v2113 = vand.u32 %v2086, %v1930
    %v2116 = vand.u32 %v2087, %v1930
    %v2119 = vand.u32 %v2088, %v1930
    %2121 = vmatpush.bf16.msra.mxu0 0
    %2122 = vmatpush.bf16.msra.mxu0 0
    %2123 = vmatpush.bf16.msra.mxu0 0
    %2124 = vmatpush.bf16.msra.mxu0 %v2110
    %2125 = vmatpush.bf16.msra.mxu0 %v2081
    %2126 = vmatpush.bf16.msra.mxu0 %v2077
    %2127 = vmatpush.bf16.msra.mxu0 %v2073
    %2128 = vmatpush.bf16.msra.mxu0 %v2069
    %2129 = vmatmul.bf16.gmra.mxu0 %v2105
    %v2130 = vpop.f32.mrf.mxu0
    %v2131 = vadd.f32 %v1953, %v2130
    %v2132 = vpop.f32.mrf.mxu0
    %v2133 = vadd.f32 %v1955, %v2132
    %2134 = vmatmul.bf16.gmra.mxu0 %v2107
    %v2135 = vpop.f32.mrf.mxu0
    %v2136 = vadd.f32 %v1958, %v2135
    %v2137 = vpop.f32.mrf.mxu0
    %2138 = vdwg.mxu0
    %2139 = vmatpush.bf16.msra.mxu0 0
    %2140 = vmatpush.bf16.msra.mxu0 0
    %2141 = vmatpush.bf16.msra.mxu0 0
    %2142 = vmatpush.bf16.msra.mxu0 %v2113
    %2143 = vmatpush.bf16.msra.mxu0 %v2082
    %2144 = vmatpush.bf16.msra.mxu0 %v2078
    %2145 = vmatpush.bf16.msra.mxu0 %v2074
    %2146 = vmatpush.bf16.msra.mxu0 %v2070
    %2147 = vmatmul.bf16.gmra.mxu0 %v2105
    %v2148 = vpop.f32.mrf.mxu0
    %v2149 = vadd.f32 %v1971, %v2148
    %v2150 = vpop.f32.mrf.mxu0
    %v2151 = vadd.f32 %v1973, %v2150
    %2152 = vmatmul.bf16.gmra.mxu0 %v2107
    %v2153 = vpop.f32.mrf.mxu0
    %v2154 = vadd.f32 %v1976, %v2153
    %v2155 = vpop.f32.mrf.mxu0
    %2156 = vdwg.mxu0
    %2157 = vmatpush.bf16.msra.mxu0 0
    %2158 = vmatpush.bf16.msra.mxu0 0
    %2159 = vmatpush.bf16.msra.mxu0 0
    %2160 = vmatpush.bf16.msra.mxu0 %v2116
    %2161 = vmatpush.bf16.msra.mxu0 %v2083
    %2162 = vmatpush.bf16.msra.mxu0 %v2079
    %2163 = vmatpush.bf16.msra.mxu0 %v2075
    %2164 = vmatpush.bf16.msra.mxu0 %v2071
    %2165 = vmatmul.bf16.gmra.mxu0 %v2105
    %v2166 = vpop.f32.mrf.mxu0
    %v2167 = vadd.f32 %v1989, %v2166
    %v2168 = vpop.f32.mrf.mxu0
    %v2169 = vadd.f32 %v1991, %v2168
    %2170 = vmatmul.bf16.gmra.mxu0 %v2107
    %v2171 = vpop.f32.mrf.mxu0
    %v2172 = vadd.f32 %v1994, %v2171
    %v2173 = vpop.f32.mrf.mxu0
    %2174 = vdwg.mxu0
    %2175 = vmatpush.bf16.msra.mxu0 0
    %2176 = vmatpush.bf16.msra.mxu0 0
    %2177 = vmatpush.bf16.msra.mxu0 0
    %2178 = vmatpush.bf16.msra.mxu0 %v2119
    %2179 = vmatpush.bf16.msra.mxu0 %v2084
    %2180 = vmatpush.bf16.msra.mxu0 %v2080
    %2181 = vmatpush.bf16.msra.mxu0 %v2076
    %2182 = vmatpush.bf16.msra.mxu0 %v2072
    %2183 = vmatmul.bf16.gmra.mxu0 %v2105
    %v2184 = vpop.f32.mrf.mxu0
    %v2185 = vadd.f32 %v2007, %v2184
    %v2186 = vpop.f32.mrf.mxu0
    %v2187 = vadd.f32 %v2009, %v2186
    %2188 = vmatmul.bf16.gmra.mxu0 %v2107
    %v2189 = vpop.f32.mrf.mxu0
    %v2190 = vadd.f32 %v2012, %v2189
    %v2191 = vpop.f32.mrf.mxu0
    %2192 = vdwg.mxu0
    %s2193 = scalar_lea.vmem %s7, 288
    %v2194 = vld [vmem:[%s2193] sm:$0xff]
    %v2195 = vld [vmem:[%s2193 + $0x8] sm:$0xff]
    %v2196 = vld [vmem:[%s2193 + $0x10] sm:$0xff]
    %v2197 = vld [vmem:[%s2193 + $0x18] sm:$0xff]
    %v2198 = vld [vmem:[%s2193 + $0x20] sm:$0xff]
    %v2199 = vld [vmem:[%s2193 + $0x28] sm:$0xff]
    %v2200 = vld [vmem:[%s2193 + $0x30] sm:$0xff]
    %v2201 = vld [vmem:[%s2193 + $0x38] sm:$0xff]
    %v2202 = vld [vmem:[%s2193 + $0x40] sm:$0xff]
    %v2203 = vld [vmem:[%s2193 + $0x48] sm:$0xff]
    %v2204 = vld [vmem:[%s2193 + $0x50] sm:$0xff]
    %v2205 = vld [vmem:[%s2193 + $0x58] sm:$0xff]
    %v2206 = vld [vmem:[%s2193 + $0x60] sm:$0xff]
    %v2207 = vld [vmem:[%s2193 + $0x68] sm:$0xff]
    %v2208 = vld [vmem:[%s2193 + $0x70] sm:$0xff]
    %v2209 = vld [vmem:[%s2193 + $0x78] sm:$0xff]
    %v2210 = vld [vmem:[%s2193 + $0x80] sm:$0x11]
    %v2211 = vld [vmem:[%s2193 + $0x88] sm:$0x11]
    %v2212 = vrot.slane %v1815, 1
    %v2213 = vrot.slane %v1816, 1
    %v2214 = vsel %vm458, %v2212, %v2213
    %v2233 = vunpack.c.l.b16 %v2194
    %v2234 = vunpack.c.h.b16 %v2194
    %v2235 = vunpack.c.l.b16 %v2195
    %v2236 = vunpack.c.h.b16 %v2195
    %v2237 = vunpack.c.l.b16 %v2196
    %v2238 = vunpack.c.h.b16 %v2196
    %v2239 = vunpack.c.l.b16 %v2197
    %v2240 = vunpack.c.h.b16 %v2197
    %v2241 = vunpack.c.l.b16 %v2198
    %v2242 = vunpack.c.h.b16 %v2198
    %v2243 = vunpack.c.l.b16 %v2199
    %v2244 = vunpack.c.h.b16 %v2199
    %v2245 = vunpack.c.l.b16 %v2200
    %v2246 = vunpack.c.h.b16 %v2200
    %v2247 = vunpack.c.l.b16 %v2201
    %v2248 = vunpack.c.h.b16 %v2201
    %v2249 = vunpack.c.l.b16 %v2202
    %v2250 = vunpack.c.h.b16 %v2202
    %v2251 = vunpack.c.l.b16 %v2203
    %v2252 = vunpack.c.h.b16 %v2203
    %v2253 = vunpack.c.l.b16 %v2204
    %v2254 = vunpack.c.h.b16 %v2204
    %v2255 = vunpack.c.l.b16 %v2205
    %v2256 = vunpack.c.h.b16 %v2205
    %v2257 = vunpack.c.l.b16 %v2206
    %v2258 = vunpack.c.h.b16 %v2206
    %v2259 = vunpack.c.l.b16 %v2207
    %v2260 = vunpack.c.h.b16 %v2207
    %v2261 = vunpack.c.l.b16 %v2208
    %v2262 = vunpack.c.h.b16 %v2208
    %v2263 = vunpack.c.l.b16 %v2209
    %v2264 = vunpack.c.h.b16 %v2209
    %v2265 = vunpack.c.l.b16 %v2210
    %v2266 = vunpack.c.h.b16 %v2210
    %v2267 = vunpack.c.l.b16 %v2211
    %v2268 = vunpack.c.h.b16 %v2211
    %v2269 = vpack.c.b16 %v2237, %v2233
    %v2270 = vpack.c.b16 %v2238, %v2234
    %v2271 = vpack.c.b16 %v2239, %v2235
    %v2272 = vpack.c.b16 %v2240, %v2236
    %v2273 = vpack.c.b16 %v2245, %v2241
    %v2274 = vpack.c.b16 %v2246, %v2242
    %v2275 = vpack.c.b16 %v2247, %v2243
    %v2276 = vpack.c.b16 %v2248, %v2244
    %v2277 = vpack.c.b16 %v2253, %v2249
    %v2278 = vpack.c.b16 %v2254, %v2250
    %v2279 = vpack.c.b16 %v2255, %v2251
    %v2280 = vpack.c.b16 %v2256, %v2252
    %v2281 = vpack.c.b16 %v2261, %v2257
    %v2282 = vpack.c.b16 %v2262, %v2258
    %v2283 = vpack.c.b16 %v2263, %v2259
    %v2284 = vpack.c.b16 %v2264, %v2260
    %v2285 = vpack.c.b16 %v2265, %v2265
    %v2286 = vpack.c.b16 %v2266, %v2266
    %v2287 = vpack.c.b16 %v2267, %v2267
    %v2288 = vpack.c.b16 %v2268, %v2268
    %v2306 = vsel %vm1922, %v2214, 0
    %v2309 = vsel %vm1922, %v2213, 0
    %v2312 = vand.u32 %v2285, %v1930
    %v2315 = vand.u32 %v2286, %v1930
    %v2318 = vand.u32 %v2287, %v1930
    %v2321 = vand.u32 %v2288, %v1930
    %2323 = vmatpush.bf16.msra.mxu0 0
    %2324 = vmatpush.bf16.msra.mxu0 0
    %2325 = vmatpush.bf16.msra.mxu0 0
    %2326 = vmatpush.bf16.msra.mxu0 %v2312
    %2327 = vmatpush.bf16.msra.mxu0 %v2281
    %2328 = vmatpush.bf16.msra.mxu0 %v2277
    %2329 = vmatpush.bf16.msra.mxu0 %v2273
    %2330 = vmatpush.bf16.msra.mxu0 %v2269
    %2331 = vmatmul.bf16.gmra.mxu0 %v2306
    %v2332 = vpop.f32.mrf.mxu0
    %v2333 = vadd.f32 0.0, %v2332
    %v2334 = vpop.f32.mrf.mxu0
    %v2335 = vadd.f32 0.0, %v2334
    %2336 = vmatmul.bf16.gmra.mxu0 %v2309
    %v2337 = vpop.f32.mrf.mxu0
    %v2338 = vadd.f32 0.0, %v2337
    %v2339 = vpop.f32.mrf.mxu0
    %2340 = vdwg.mxu0
    %2341 = vmatpush.bf16.msra.mxu0 0
    %2342 = vmatpush.bf16.msra.mxu0 0
    %2343 = vmatpush.bf16.msra.mxu0 0
    %2344 = vmatpush.bf16.msra.mxu0 %v2315
    %2345 = vmatpush.bf16.msra.mxu0 %v2282
    %2346 = vmatpush.bf16.msra.mxu0 %v2278
    %2347 = vmatpush.bf16.msra.mxu0 %v2274
    %2348 = vmatpush.bf16.msra.mxu0 %v2270
    %2349 = vmatmul.bf16.gmra.mxu0 %v2306
    %v2350 = vpop.f32.mrf.mxu0
    %v2351 = vadd.f32 0.0, %v2350
    %v2352 = vpop.f32.mrf.mxu0
    %v2353 = vadd.f32 0.0, %v2352
    %2354 = vmatmul.bf16.gmra.mxu0 %v2309
    %v2355 = vpop.f32.mrf.mxu0
    %v2356 = vadd.f32 0.0, %v2355
    %v2357 = vpop.f32.mrf.mxu0
    %2358 = vdwg.mxu0
    %2359 = vmatpush.bf16.msra.mxu0 0
    %2360 = vmatpush.bf16.msra.mxu0 0
    %2361 = vmatpush.bf16.msra.mxu0 0
    %2362 = vmatpush.bf16.msra.mxu0 %v2318
    %2363 = vmatpush.bf16.msra.mxu0 %v2283
    %2364 = vmatpush.bf16.msra.mxu0 %v2279
    %2365 = vmatpush.bf16.msra.mxu0 %v2275
    %2366 = vmatpush.bf16.msra.mxu0 %v2271
    %2367 = vmatmul.bf16.gmra.mxu0 %v2306
    %v2368 = vpop.f32.mrf.mxu0
    %v2369 = vadd.f32 0.0, %v2368
    %v2370 = vpop.f32.mrf.mxu0
    %v2371 = vadd.f32 0.0, %v2370
    %2372 = vmatmul.bf16.gmra.mxu0 %v2309
    %v2373 = vpop.f32.mrf.mxu0
    %v2374 = vadd.f32 0.0, %v2373
    %v2375 = vpop.f32.mrf.mxu0
    %2376 = vdwg.mxu0
    %2377 = vmatpush.bf16.msra.mxu0 0
    %2378 = vmatpush.bf16.msra.mxu0 0
    %2379 = vmatpush.bf16.msra.mxu0 0
    %2380 = vmatpush.bf16.msra.mxu0 %v2321
    %2381 = vmatpush.bf16.msra.mxu0 %v2284
    %2382 = vmatpush.bf16.msra.mxu0 %v2280
    %2383 = vmatpush.bf16.msra.mxu0 %v2276
    %2384 = vmatpush.bf16.msra.mxu0 %v2272
    %2385 = vmatmul.bf16.gmra.mxu0 %v2306
    %v2386 = vpop.f32.mrf.mxu0
    %v2387 = vadd.f32 0.0, %v2386
    %v2388 = vpop.f32.mrf.mxu0
    %v2389 = vadd.f32 0.0, %v2388
    %2390 = vmatmul.bf16.gmra.mxu0 %v2309
    %v2391 = vpop.f32.mrf.mxu0
    %v2392 = vadd.f32 0.0, %v2391
    %v2393 = vpop.f32.mrf.mxu0
    %2394 = vdwg.mxu0
    %v2395 = vadd.f32 %v2131, %v2333
    %v2396 = vadd.f32 %v2149, %v2351
    %v2397 = vadd.f32 %v2167, %v2369
    %v2398 = vadd.f32 %v2185, %v2387
    %v2399 = vadd.f32 %v2133, %v2335
    %v2400 = vadd.f32 %v2151, %v2353
    %v2401 = vadd.f32 %v2169, %v2371
    %v2402 = vadd.f32 %v2187, %v2389
    %v2403 = vadd.f32 %v2136, %v2338
    %v2404 = vadd.f32 %v2154, %v2356
    %v2405 = vadd.f32 %v2172, %v2374
    %v2406 = vadd.f32 %v2190, %v2392
    %s2407 = scalar_lea.vmem %s7, 432
    %v2408 = vld [vmem:[%s2407] sm:$0xff]
    %v2409 = vld [vmem:[%s2407 + $0x8] sm:$0xff]
    %v2410 = vld [vmem:[%s2407 + $0x10] sm:$0xff]
    %v2411 = vld [vmem:[%s2407 + $0x18] sm:$0xff]
    %v2412 = vld [vmem:[%s2407 + $0x20] sm:$0xff]
    %v2413 = vld [vmem:[%s2407 + $0x28] sm:$0xff]
    %v2414 = vld [vmem:[%s2407 + $0x30] sm:$0xff]
    %v2415 = vld [vmem:[%s2407 + $0x38] sm:$0xff]
    %v2416 = vld [vmem:[%s2407 + $0x40] sm:$0xff]
    %v2417 = vld [vmem:[%s2407 + $0x48] sm:$0xff]
    %v2418 = vld [vmem:[%s2407 + $0x50] sm:$0xff]
    %v2419 = vld [vmem:[%s2407 + $0x58] sm:$0xff]
    %v2420 = vld [vmem:[%s2407 + $0x60] sm:$0xff]
    %v2421 = vld [vmem:[%s2407 + $0x68] sm:$0xff]
    %v2422 = vld [vmem:[%s2407 + $0x70] sm:$0xff]
    %v2423 = vld [vmem:[%s2407 + $0x78] sm:$0xff]
    %v2424 = vld [vmem:[%s2407 + $0x80] sm:$0x11]
    %v2425 = vld [vmem:[%s2407 + $0x88] sm:$0x11]
    %v2427 = vunpack.c.l.b16 %v1771
    %v2428 = vpack.c.b16 %v2427, %v1814
    %v2429 = vrot.slane %v1818, 1
    %v2430 = vrot.slane %v1820, 2
    %v2431 = vor.u32 %v2429, %v2430
    %v2433 = vshrl.u32 %v2428, 16
    %v2435 = vrot.slane %v2433, 1
    %v2436 = vshll.u32 %v2428, 16
    %v2438 = vrot.slane %v2436, 2
    %v2439 = vor.u32 %v2435, %v2438
    %v2440 = vsel %vm577, %v2431, %v2439
    %v2459 = vunpack.c.l.b16 %v2408
    %v2460 = vunpack.c.h.b16 %v2408
    %v2461 = vunpack.c.l.b16 %v2409
    %v2462 = vunpack.c.h.b16 %v2409
    %v2463 = vunpack.c.l.b16 %v2410
    %v2464 = vunpack.c.h.b16 %v2410
    %v2465 = vunpack.c.l.b16 %v2411
    %v2466 = vunpack.c.h.b16 %v2411
    %v2467 = vunpack.c.l.b16 %v2412
    %v2468 = vunpack.c.h.b16 %v2412
    %v2469 = vunpack.c.l.b16 %v2413
    %v2470 = vunpack.c.h.b16 %v2413
    %v2471 = vunpack.c.l.b16 %v2414
    %v2472 = vunpack.c.h.b16 %v2414
    %v2473 = vunpack.c.l.b16 %v2415
    %v2474 = vunpack.c.h.b16 %v2415
    %v2475 = vunpack.c.l.b16 %v2416
    %v2476 = vunpack.c.h.b16 %v2416
    %v2477 = vunpack.c.l.b16 %v2417
    %v2478 = vunpack.c.h.b16 %v2417
    %v2479 = vunpack.c.l.b16 %v2418
    %v2480 = vunpack.c.h.b16 %v2418
    %v2481 = vunpack.c.l.b16 %v2419
    %v2482 = vunpack.c.h.b16 %v2419
    %v2483 = vunpack.c.l.b16 %v2420
    %v2484 = vunpack.c.h.b16 %v2420
    %v2485 = vunpack.c.l.b16 %v2421
    %v2486 = vunpack.c.h.b16 %v2421
    %v2487 = vunpack.c.l.b16 %v2422
    %v2488 = vunpack.c.h.b16 %v2422
    %v2489 = vunpack.c.l.b16 %v2423
    %v2490 = vunpack.c.h.b16 %v2423
    %v2491 = vunpack.c.l.b16 %v2424
    %v2492 = vunpack.c.h.b16 %v2424
    %v2493 = vunpack.c.l.b16 %v2425
    %v2494 = vunpack.c.h.b16 %v2425
    %v2495 = vpack.c.b16 %v2463, %v2459
    %v2496 = vpack.c.b16 %v2464, %v2460
    %v2497 = vpack.c.b16 %v2465, %v2461
    %v2498 = vpack.c.b16 %v2466, %v2462
    %v2499 = vpack.c.b16 %v2471, %v2467
    %v2500 = vpack.c.b16 %v2472, %v2468
    %v2501 = vpack.c.b16 %v2473, %v2469
    %v2502 = vpack.c.b16 %v2474, %v2470
    %v2503 = vpack.c.b16 %v2479, %v2475
    %v2504 = vpack.c.b16 %v2480, %v2476
    %v2505 = vpack.c.b16 %v2481, %v2477
    %v2506 = vpack.c.b16 %v2482, %v2478
    %v2507 = vpack.c.b16 %v2487, %v2483
    %v2508 = vpack.c.b16 %v2488, %v2484
    %v2509 = vpack.c.b16 %v2489, %v2485
    %v2510 = vpack.c.b16 %v2490, %v2486
    %v2511 = vpack.c.b16 %v2491, %v2491
    %v2512 = vpack.c.b16 %v2492, %v2492
    %v2513 = vpack.c.b16 %v2493, %v2493
    %v2514 = vpack.c.b16 %v2494, %v2494
    %v2532 = vsel %vm1922, %v2440, 0
    %v2535 = vsel %vm1922, %v2439, 0
    %v2538 = vand.u32 %v2511, %v1930
    %v2541 = vand.u32 %v2512, %v1930
    %v2544 = vand.u32 %v2513, %v1930
    %v2547 = vand.u32 %v2514, %v1930
    %2549 = vmatpush.bf16.msra.mxu0 0
    %2550 = vmatpush.bf16.msra.mxu0 0
    %2551 = vmatpush.bf16.msra.mxu0 0
    %2552 = vmatpush.bf16.msra.mxu0 %v2538
    %2553 = vmatpush.bf16.msra.mxu0 %v2507
    %2554 = vmatpush.bf16.msra.mxu0 %v2503
    %2555 = vmatpush.bf16.msra.mxu0 %v2499
    %2556 = vmatpush.bf16.msra.mxu0 %v2495
    %2557 = vmatmul.bf16.gmra.mxu0 %v2532
    %v2558 = vpop.f32.mrf.mxu0
    %v2559 = vadd.f32 0.0, %v2558
    %v2560 = vpop.f32.mrf.mxu0
    %v2561 = vadd.f32 0.0, %v2560
    %2562 = vmatmul.bf16.gmra.mxu0 %v2535
    %v2563 = vpop.f32.mrf.mxu0
    %v2564 = vadd.f32 0.0, %v2563
    %v2565 = vpop.f32.mrf.mxu0
    %2566 = vdwg.mxu0
    %2567 = vmatpush.bf16.msra.mxu0 0
    %2568 = vmatpush.bf16.msra.mxu0 0
    %2569 = vmatpush.bf16.msra.mxu0 0
    %2570 = vmatpush.bf16.msra.mxu0 %v2541
    %2571 = vmatpush.bf16.msra.mxu0 %v2508
    %2572 = vmatpush.bf16.msra.mxu0 %v2504
    %2573 = vmatpush.bf16.msra.mxu0 %v2500
    %2574 = vmatpush.bf16.msra.mxu0 %v2496
    %2575 = vmatmul.bf16.gmra.mxu0 %v2532
    %v2576 = vpop.f32.mrf.mxu0
    %v2577 = vadd.f32 0.0, %v2576
    %v2578 = vpop.f32.mrf.mxu0
    %v2579 = vadd.f32 0.0, %v2578
    %2580 = vmatmul.bf16.gmra.mxu0 %v2535
    %v2581 = vpop.f32.mrf.mxu0
    %v2582 = vadd.f32 0.0, %v2581
    %v2583 = vpop.f32.mrf.mxu0
    %2584 = vdwg.mxu0
    %2585 = vmatpush.bf16.msra.mxu0 0
    %2586 = vmatpush.bf16.msra.mxu0 0
    %2587 = vmatpush.bf16.msra.mxu0 0
    %2588 = vmatpush.bf16.msra.mxu0 %v2544
    %2589 = vmatpush.bf16.msra.mxu0 %v2509
    %2590 = vmatpush.bf16.msra.mxu0 %v2505
    %2591 = vmatpush.bf16.msra.mxu0 %v2501
    %2592 = vmatpush.bf16.msra.mxu0 %v2497
    %2593 = vmatmul.bf16.gmra.mxu0 %v2532
    %v2594 = vpop.f32.mrf.mxu0
    %v2595 = vadd.f32 0.0, %v2594
    %v2596 = vpop.f32.mrf.mxu0
    %v2597 = vadd.f32 0.0, %v2596
    %2598 = vmatmul.bf16.gmra.mxu0 %v2535
    %v2599 = vpop.f32.mrf.mxu0
    %v2600 = vadd.f32 0.0, %v2599
    %v2601 = vpop.f32.mrf.mxu0
    %2602 = vdwg.mxu0
    %2603 = vmatpush.bf16.msra.mxu0 0
    %2604 = vmatpush.bf16.msra.mxu0 0
    %2605 = vmatpush.bf16.msra.mxu0 0
    %2606 = vmatpush.bf16.msra.mxu0 %v2547
    %2607 = vmatpush.bf16.msra.mxu0 %v2510
    %2608 = vmatpush.bf16.msra.mxu0 %v2506
    %2609 = vmatpush.bf16.msra.mxu0 %v2502
    %2610 = vmatpush.bf16.msra.mxu0 %v2498
    %2611 = vmatmul.bf16.gmra.mxu0 %v2532
    %v2612 = vpop.f32.mrf.mxu0
    %v2613 = vadd.f32 0.0, %v2612
    %v2614 = vpop.f32.mrf.mxu0
    %v2615 = vadd.f32 0.0, %v2614
    %2616 = vmatmul.bf16.gmra.mxu0 %v2535
    %v2617 = vpop.f32.mrf.mxu0
    %v2618 = vadd.f32 0.0, %v2617
    %v2619 = vpop.f32.mrf.mxu0
    %2620 = vdwg.mxu0
    %v2621 = vadd.f32 %v2395, %v2559
    %v2622 = vadd.f32 %v2396, %v2577
    %v2623 = vadd.f32 %v2397, %v2595
    %v2624 = vadd.f32 %v2398, %v2613
    %v2625 = vadd.f32 %v2399, %v2561
    %v2626 = vadd.f32 %v2400, %v2579
    %v2627 = vadd.f32 %v2401, %v2597
    %v2628 = vadd.f32 %v2402, %v2615
    %v2629 = vadd.f32 %v2403, %v2564
    %v2630 = vadd.f32 %v2404, %v2582
    %v2631 = vadd.f32 %v2405, %v2600
    %v2632 = vadd.f32 %v2406, %v2618
    %s2633 = scalar_lea.vmem %s7, 576
    %v2634 = vld [vmem:[%s2633] sm:$0xff]
    %v2635 = vld [vmem:[%s2633 + $0x8] sm:$0xff]
    %v2636 = vld [vmem:[%s2633 + $0x10] sm:$0xff]
    %v2637 = vld [vmem:[%s2633 + $0x18] sm:$0xff]
    %v2638 = vld [vmem:[%s2633 + $0x20] sm:$0xff]
    %v2639 = vld [vmem:[%s2633 + $0x28] sm:$0xff]
    %v2640 = vld [vmem:[%s2633 + $0x30] sm:$0xff]
    %v2641 = vld [vmem:[%s2633 + $0x38] sm:$0xff]
    %v2642 = vld [vmem:[%s2633 + $0x40] sm:$0xff]
    %v2643 = vld [vmem:[%s2633 + $0x48] sm:$0xff]
    %v2644 = vld [vmem:[%s2633 + $0x50] sm:$0xff]
    %v2645 = vld [vmem:[%s2633 + $0x58] sm:$0xff]
    %v2646 = vld [vmem:[%s2633 + $0x60] sm:$0xff]
    %v2647 = vld [vmem:[%s2633 + $0x68] sm:$0xff]
    %v2648 = vld [vmem:[%s2633 + $0x70] sm:$0xff]
    %v2649 = vld [vmem:[%s2633 + $0x78] sm:$0xff]
    %v2650 = vld [vmem:[%s2633 + $0x80] sm:$0x11]
    %v2651 = vld [vmem:[%s2633 + $0x88] sm:$0x11]
    %v2652 = vrot.slane %v1815, 2
    %v2653 = vrot.slane %v2428, 2
    %v2654 = vsel %vm704, %v2652, %v2653
    %v2673 = vunpack.c.l.b16 %v2634
    %v2674 = vunpack.c.h.b16 %v2634
    %v2675 = vunpack.c.l.b16 %v2635
    %v2676 = vunpack.c.h.b16 %v2635
    %v2677 = vunpack.c.l.b16 %v2636
    %v2678 = vunpack.c.h.b16 %v2636
    %v2679 = vunpack.c.l.b16 %v2637
    %v2680 = vunpack.c.h.b16 %v2637
    %v2681 = vunpack.c.l.b16 %v2638
    %v2682 = vunpack.c.h.b16 %v2638
    %v2683 = vunpack.c.l.b16 %v2639
    %v2684 = vunpack.c.h.b16 %v2639
    %v2685 = vunpack.c.l.b16 %v2640
    %v2686 = vunpack.c.h.b16 %v2640
    %v2687 = vunpack.c.l.b16 %v2641
    %v2688 = vunpack.c.h.b16 %v2641
    %v2689 = vunpack.c.l.b16 %v2642
    %v2690 = vunpack.c.h.b16 %v2642
    %v2691 = vunpack.c.l.b16 %v2643
    %v2692 = vunpack.c.h.b16 %v2643
    %v2693 = vunpack.c.l.b16 %v2644
    %v2694 = vunpack.c.h.b16 %v2644
    %v2695 = vunpack.c.l.b16 %v2645
    %v2696 = vunpack.c.h.b16 %v2645
    %v2697 = vunpack.c.l.b16 %v2646
    %v2698 = vunpack.c.h.b16 %v2646
    %v2699 = vunpack.c.l.b16 %v2647
    %v2700 = vunpack.c.h.b16 %v2647
    %v2701 = vunpack.c.l.b16 %v2648
    %v2702 = vunpack.c.h.b16 %v2648
    %v2703 = vunpack.c.l.b16 %v2649
    %v2704 = vunpack.c.h.b16 %v2649
    %v2705 = vunpack.c.l.b16 %v2650
    %v2706 = vunpack.c.h.b16 %v2650
    %v2707 = vunpack.c.l.b16 %v2651
    %v2708 = vunpack.c.h.b16 %v2651
    %v2709 = vpack.c.b16 %v2677, %v2673
    %v2710 = vpack.c.b16 %v2678, %v2674
    %v2711 = vpack.c.b16 %v2679, %v2675
    %v2712 = vpack.c.b16 %v2680, %v2676
    %v2713 = vpack.c.b16 %v2685, %v2681
    %v2714 = vpack.c.b16 %v2686, %v2682
    %v2715 = vpack.c.b16 %v2687, %v2683
    %v2716 = vpack.c.b16 %v2688, %v2684
    %v2717 = vpack.c.b16 %v2693, %v2689
    %v2718 = vpack.c.b16 %v2694, %v2690
    %v2719 = vpack.c.b16 %v2695, %v2691
    %v2720 = vpack.c.b16 %v2696, %v2692
    %v2721 = vpack.c.b16 %v2701, %v2697
    %v2722 = vpack.c.b16 %v2702, %v2698
    %v2723 = vpack.c.b16 %v2703, %v2699
    %v2724 = vpack.c.b16 %v2704, %v2700
    %v2725 = vpack.c.b16 %v2705, %v2705
    %v2726 = vpack.c.b16 %v2706, %v2706
    %v2727 = vpack.c.b16 %v2707, %v2707
    %v2728 = vpack.c.b16 %v2708, %v2708
    %v2746 = vsel %vm1922, %v2654, 0
    %v2749 = vsel %vm1922, %v2653, 0
    %v2752 = vand.u32 %v2725, %v1930
    %v2755 = vand.u32 %v2726, %v1930
    %v2758 = vand.u32 %v2727, %v1930
    %v2761 = vand.u32 %v2728, %v1930
    %2763 = vmatpush.bf16.msra.mxu0 0
    %2764 = vmatpush.bf16.msra.mxu0 0
    %2765 = vmatpush.bf16.msra.mxu0 0
    %2766 = vmatpush.bf16.msra.mxu0 %v2752
    %2767 = vmatpush.bf16.msra.mxu0 %v2721
    %2768 = vmatpush.bf16.msra.mxu0 %v2717
    %2769 = vmatpush.bf16.msra.mxu0 %v2713
    %2770 = vmatpush.bf16.msra.mxu0 %v2709
    %2771 = vmatmul.bf16.gmra.mxu0 %v2746
    %v2772 = vpop.f32.mrf.mxu0
    %v2773 = vadd.f32 0.0, %v2772
    %v2774 = vpop.f32.mrf.mxu0
    %v2775 = vadd.f32 0.0, %v2774
    %2776 = vmatmul.bf16.gmra.mxu0 %v2749
    %v2777 = vpop.f32.mrf.mxu0
    %v2778 = vadd.f32 0.0, %v2777
    %v2779 = vpop.f32.mrf.mxu0
    %2780 = vdwg.mxu0
    %2781 = vmatpush.bf16.msra.mxu0 0
    %2782 = vmatpush.bf16.msra.mxu0 0
    %2783 = vmatpush.bf16.msra.mxu0 0
    %2784 = vmatpush.bf16.msra.mxu0 %v2755
    %2785 = vmatpush.bf16.msra.mxu0 %v2722
    %2786 = vmatpush.bf16.msra.mxu0 %v2718
    %2787 = vmatpush.bf16.msra.mxu0 %v2714
    %2788 = vmatpush.bf16.msra.mxu0 %v2710
    %2789 = vmatmul.bf16.gmra.mxu0 %v2746
    %v2790 = vpop.f32.mrf.mxu0
    %v2791 = vadd.f32 0.0, %v2790
    %v2792 = vpop.f32.mrf.mxu0
    %v2793 = vadd.f32 0.0, %v2792
    %2794 = vmatmul.bf16.gmra.mxu0 %v2749
    %v2795 = vpop.f32.mrf.mxu0
    %v2796 = vadd.f32 0.0, %v2795
    %v2797 = vpop.f32.mrf.mxu0
    %2798 = vdwg.mxu0
    %2799 = vmatpush.bf16.msra.mxu0 0
    %2800 = vmatpush.bf16.msra.mxu0 0
    %2801 = vmatpush.bf16.msra.mxu0 0
    %2802 = vmatpush.bf16.msra.mxu0 %v2758
    %2803 = vmatpush.bf16.msra.mxu0 %v2723
    %2804 = vmatpush.bf16.msra.mxu0 %v2719
    %2805 = vmatpush.bf16.msra.mxu0 %v2715
    %2806 = vmatpush.bf16.msra.mxu0 %v2711
    %2807 = vmatmul.bf16.gmra.mxu0 %v2746
    %v2808 = vpop.f32.mrf.mxu0
    %v2809 = vadd.f32 0.0, %v2808
    %v2810 = vpop.f32.mrf.mxu0
    %v2811 = vadd.f32 0.0, %v2810
    %2812 = vmatmul.bf16.gmra.mxu0 %v2749
    %v2813 = vpop.f32.mrf.mxu0
    %v2814 = vadd.f32 0.0, %v2813
    %v2815 = vpop.f32.mrf.mxu0
    %2816 = vdwg.mxu0
    %2817 = vmatpush.bf16.msra.mxu0 0
    %2818 = vmatpush.bf16.msra.mxu0 0
    %2819 = vmatpush.bf16.msra.mxu0 0
    %2820 = vmatpush.bf16.msra.mxu0 %v2761
    %2821 = vmatpush.bf16.msra.mxu0 %v2724
    %2822 = vmatpush.bf16.msra.mxu0 %v2720
    %2823 = vmatpush.bf16.msra.mxu0 %v2716
    %2824 = vmatpush.bf16.msra.mxu0 %v2712
    %2825 = vmatmul.bf16.gmra.mxu0 %v2746
    %v2826 = vpop.f32.mrf.mxu0
    %v2827 = vadd.f32 0.0, %v2826
    %v2828 = vpop.f32.mrf.mxu0
    %v2829 = vadd.f32 0.0, %v2828
    %2830 = vmatmul.bf16.gmra.mxu0 %v2749
    %v2831 = vpop.f32.mrf.mxu0
    %v2832 = vadd.f32 0.0, %v2831
    %v2833 = vpop.f32.mrf.mxu0
    %2834 = vdwg.mxu0
    %v2835 = vadd.f32 %v2621, %v2773
    %v2836 = vadd.f32 %v2622, %v2791
    %v2837 = vadd.f32 %v2623, %v2809
    %v2838 = vadd.f32 %v2624, %v2827
    %v2839 = vadd.f32 %v2625, %v2775
    %v2840 = vadd.f32 %v2626, %v2793
    %v2841 = vadd.f32 %v2627, %v2811
    %v2842 = vadd.f32 %v2628, %v2829
    %v2843 = vadd.f32 %v2629, %v2778
    %v2844 = vadd.f32 %v2630, %v2796
    %v2845 = vadd.f32 %v2631, %v2814
    %v2846 = vadd.f32 %v2632, %v2832
    %v2847 = vld [vmem:[%s8] sm:$0xf]
    %v2849 = vperm.slane %v2847, 0
    %v2850 = vperm.slane %v2847, 1
    %v2851 = vperm.slane %v2847, 2
    %v2852 = vperm.slane %v2847, 3
    %v2857 = vadd.f32 %v2835, %v2849
    %v2858 = vadd.f32 %v2836, %v2850
    %v2859 = vadd.f32 %v2837, %v2851
    %v2860 = vadd.f32 %v2838, %v2852
    %v2861 = vadd.f32 %v2839, %v2849
    %v2862 = vadd.f32 %v2840, %v2850
    %v2863 = vadd.f32 %v2841, %v2851
    %v2864 = vadd.f32 %v2842, %v2852
    %v2865 = vadd.f32 %v2843, %v2849
    %v2866 = vadd.f32 %v2844, %v2850
    %v2867 = vadd.f32 %v2845, %v2851
    %v2868 = vadd.f32 %v2846, %v2852
    %v2869 = vld [vmem:[%s9] sm:$0xff]
    %v2870 = vld [vmem:[%s9 + $0x8] sm:$0xff]
    %v2871 = vld [vmem:[%s9 + $0x10] sm:$0x3f]
    %2873 = vset.pattern.permute.xlu0 0
    %2874 = vperm.xlu0 %2873, %v2869
    %v2875 = vpop.permute.xlu0 %2874
    %2878 = vset.pattern.permute.xlu0 0
    %2879 = vperm.xlu0 %2878, %v2870
    %v2880 = vpop.permute.xlu0 %2879
    %2883 = vset.pattern.permute.xlu0 0
    %2884 = vperm.xlu0 %2883, %v2871
    %v2885 = vpop.permute.xlu0 %2884
    %v2887 = vadd.f32 %v2857, %v2875
    %v2888 = vadd.f32 %v2858, %v2875
    %v2889 = vadd.f32 %v2859, %v2875
    %v2890 = vadd.f32 %v2860, %v2875
    %v2891 = vadd.f32 %v2861, %v2880
    %v2892 = vadd.f32 %v2862, %v2880
    %v2893 = vadd.f32 %v2863, %v2880
    %v2894 = vadd.f32 %v2864, %v2880
    %v2895 = vadd.f32 %v2865, %v2885
    %v2896 = vadd.f32 %v2866, %v2885
    %v2897 = vadd.f32 %v2867, %v2885
    %v2898 = vadd.f32 %v2868, %v2885
    %v2911 = vrot.slane %v2887, 6
    %v2912 = vrot.slane %v2888, 6
    %v2913 = vrot.slane %v2889, 6
    %v2914 = vrot.slane %v2890, 6
    %v2915 = vrot.slane %v2891, 6
    %v2916 = vsel %vm908, %v2911, %v2915
    %v2917 = vrot.slane %v2892, 6
    %v2918 = vsel %vm908, %v2912, %v2917
    %v2919 = vrot.slane %v2893, 6
    %v2920 = vsel %vm908, %v2913, %v2919
    %v2921 = vrot.slane %v2894, 6
    %v2922 = vsel %vm908, %v2914, %v2921
    %v2923 = vrot.slane %v2895, 6
    %v2924 = vsel %vm908, %v2915, %v2923
    %v2925 = vrot.slane %v2896, 6
    %v2926 = vsel %vm908, %v2917, %v2925
    %v2927 = vrot.slane %v2897, 6
    %v2928 = vsel %vm908, %v2919, %v2927
    %v2929 = vrot.slane %v2898, 6
    %v2930 = vsel %vm908, %v2921, %v2929
    %v2943 = vsel %vm908, -1e+30, %v2911
    %v2944 = vsel %vm908, -1e+30, %v2912
    %v2945 = vsel %vm908, -1e+30, %v2913
    %v2946 = vsel %vm908, -1e+30, %v2914
    %v2951 = vrot.slane %v2943, 1
    %v2952 = vrot.slane %v2916, 1
    %v2953 = vsel %vm300, %v2951, %v2952
    %v2954 = vrot.slane %v2944, 1
    %v2955 = vrot.slane %v2918, 1
    %v2956 = vsel %vm300, %v2954, %v2955
    %v2957 = vrot.slane %v2945, 1
    %v2958 = vrot.slane %v2920, 1
    %v2959 = vsel %vm300, %v2957, %v2958
    %v2960 = vrot.slane %v2946, 1
    %v2961 = vrot.slane %v2922, 1
    %v2962 = vsel %vm300, %v2960, %v2961
    %v2963 = vrot.slane %v2924, 1
    %v2964 = vsel %vm300, %v2952, %v2963
    %v2965 = vrot.slane %v2926, 1
    %v2966 = vsel %vm300, %v2955, %v2965
    %v2967 = vrot.slane %v2928, 1
    %v2968 = vsel %vm300, %v2958, %v2967
    %v2969 = vrot.slane %v2930, 1
    %v2970 = vsel %vm300, %v2961, %v2969
    %v2983 = vmax.f32 %v2943, %v2953
    %v2984 = vmax.f32 %v2944, %v2956
    %v2985 = vmax.f32 %v2945, %v2959
    %v2986 = vmax.f32 %v2946, %v2962
    %v2987 = vmax.f32 %v2916, %v2964
    %v2988 = vmax.f32 %v2918, %v2966
    %v2989 = vmax.f32 %v2920, %v2968
    %v2990 = vmax.f32 %v2922, %v2970
    %v2991 = vmax.f32 %v2924, %v2963
    %v2992 = vmax.f32 %v2926, %v2965
    %v2993 = vmax.f32 %v2928, %v2967
    %v2994 = vmax.f32 %v2930, %v2969
    %v2995 = vrot.slane %v2943, 2
    %v2996 = vrot.slane %v2916, 2
    %v2997 = vsel %vm1017, %v2995, %v2996
    %v2998 = vrot.slane %v2944, 2
    %v2999 = vrot.slane %v2918, 2
    %v3000 = vsel %vm1017, %v2998, %v2999
    %v3001 = vrot.slane %v2945, 2
    %v3002 = vrot.slane %v2920, 2
    %v3003 = vsel %vm1017, %v3001, %v3002
    %v3004 = vrot.slane %v2946, 2
    %v3005 = vrot.slane %v2922, 2
    %v3006 = vsel %vm1017, %v3004, %v3005
    %v3007 = vrot.slane %v2924, 2
    %v3008 = vsel %vm1017, %v2996, %v3007
    %v3009 = vrot.slane %v2926, 2
    %v3010 = vsel %vm1017, %v2999, %v3009
    %v3011 = vrot.slane %v2928, 2
    %v3012 = vsel %vm1017, %v3002, %v3011
    %v3013 = vrot.slane %v2930, 2
    %v3014 = vsel %vm1017, %v3005, %v3013
    %v3027 = vmax.f32 %v2983, %v2997
    %v3028 = vmax.f32 %v2984, %v3000
    %v3029 = vmax.f32 %v2985, %v3003
    %v3030 = vmax.f32 %v2986, %v3006
    %v3031 = vmax.f32 %v2987, %v3008
    %v3032 = vmax.f32 %v2988, %v3010
    %v3033 = vmax.f32 %v2989, %v3012
    %v3034 = vmax.f32 %v2990, %v3014
    %v3035 = vmax.f32 %v2991, %v3007
    %v3036 = vmax.f32 %v2992, %v3009
    %v3037 = vmax.f32 %v2993, %v3011
    %v3038 = vmax.f32 %v2994, %v3013
    %v3040 = vrot.slane %v2943, 3
    %v3041 = vrot.slane %v2916, 3
    %v3042 = vsel %vm1076, %v3040, %v3041
    %v3043 = vrot.slane %v2944, 3
    %v3044 = vrot.slane %v2918, 3
    %v3045 = vsel %vm1076, %v3043, %v3044
    %v3046 = vrot.slane %v2945, 3
    %v3047 = vrot.slane %v2920, 3
    %v3048 = vsel %vm1076, %v3046, %v3047
    %v3049 = vrot.slane %v2946, 3
    %v3050 = vrot.slane %v2922, 3
    %v3051 = vsel %vm1076, %v3049, %v3050
    %v3052 = vrot.slane %v2924, 3
    %v3053 = vsel %vm1076, %v3041, %v3052
    %v3054 = vrot.slane %v2926, 3
    %v3055 = vsel %vm1076, %v3044, %v3054
    %v3056 = vrot.slane %v2928, 3
    %v3057 = vsel %vm1076, %v3047, %v3056
    %v3058 = vrot.slane %v2930, 3
    %v3059 = vsel %vm1076, %v3050, %v3058
    %v3060 = vrot.slane -1e+30, 3
    %v3061 = vsel %vm1076, %v3052, %v3060
    %v3062 = vsel %vm1076, %v3054, %v3060
    %v3063 = vsel %vm1076, %v3056, %v3060
    %v3064 = vsel %vm1076, %v3058, %v3060
    %v3077 = vmax.f32 %v3027, %v3042
    %v3078 = vmax.f32 %v3028, %v3045
    %v3079 = vmax.f32 %v3029, %v3048
    %v3080 = vmax.f32 %v3030, %v3051
    %v3081 = vmax.f32 %v3031, %v3053
    %v3082 = vmax.f32 %v3032, %v3055
    %v3083 = vmax.f32 %v3033, %v3057
    %v3084 = vmax.f32 %v3034, %v3059
    %v3085 = vmax.f32 %v3035, %v3061
    %v3086 = vmax.f32 %v3036, %v3062
    %v3087 = vmax.f32 %v3037, %v3063
    %v3088 = vmax.f32 %v3038, %v3064
    %v3089 = vrot.slane %v2943, 4
    %v3090 = vrot.slane %v2916, 4
    %v3091 = vsel %vm1135, %v3089, %v3090
    %v3092 = vrot.slane %v2944, 4
    %v3093 = vrot.slane %v2918, 4
    %v3094 = vsel %vm1135, %v3092, %v3093
    %v3095 = vrot.slane %v2945, 4
    %v3096 = vrot.slane %v2920, 4
    %v3097 = vsel %vm1135, %v3095, %v3096
    %v3098 = vrot.slane %v2946, 4
    %v3099 = vrot.slane %v2922, 4
    %v3100 = vsel %vm1135, %v3098, %v3099
    %v3101 = vrot.slane %v2924, 4
    %v3102 = vsel %vm1135, %v3090, %v3101
    %v3103 = vrot.slane %v2926, 4
    %v3104 = vsel %vm1135, %v3093, %v3103
    %v3105 = vrot.slane %v2928, 4
    %v3106 = vsel %vm1135, %v3096, %v3105
    %v3107 = vrot.slane %v2930, 4
    %v3108 = vsel %vm1135, %v3099, %v3107
    %v3109 = vrot.slane -1e+30, 4
    %v3110 = vsel %vm1135, %v3101, %v3109
    %v3111 = vsel %vm1135, %v3103, %v3109
    %v3112 = vsel %vm1135, %v3105, %v3109
    %v3113 = vsel %vm1135, %v3107, %v3109
    %v3126 = vmax.f32 %v3077, %v3091
    %v3127 = vmax.f32 %v3078, %v3094
    %v3128 = vmax.f32 %v3079, %v3097
    %v3129 = vmax.f32 %v3080, %v3100
    %v3130 = vmax.f32 %v3081, %v3102
    %v3131 = vmax.f32 %v3082, %v3104
    %v3132 = vmax.f32 %v3083, %v3106
    %v3133 = vmax.f32 %v3084, %v3108
    %v3134 = vmax.f32 %v3085, %v3110
    %v3135 = vmax.f32 %v3086, %v3111
    %v3136 = vmax.f32 %v3087, %v3112
    %v3137 = vmax.f32 %v3088, %v3113
    %3150 = vrot.lane.b32.xlu0 %v3126, 100
    %v3151 = vpop.permute.xlu0 %3150
    %3152 = vrot.lane.b32.xlu0 %v3127, 100
    %v3153 = vpop.permute.xlu0 %3152
    %3154 = vrot.lane.b32.xlu0 %v3128, 100
    %v3155 = vpop.permute.xlu0 %3154
    %3156 = vrot.lane.b32.xlu0 %v3129, 100
    %v3157 = vpop.permute.xlu0 %3156
    %3158 = vrot.lane.b32.xlu0 %v3130, 100
    %v3159 = vpop.permute.xlu0 %3158
    %3160 = vrot.lane.b32.xlu0 %v3131, 100
    %v3161 = vpop.permute.xlu0 %3160
    %3162 = vrot.lane.b32.xlu0 %v3132, 100
    %v3163 = vpop.permute.xlu0 %3162
    %3164 = vrot.lane.b32.xlu0 %v3133, 100
    %v3165 = vpop.permute.xlu0 %3164
    %3166 = vrot.lane.b32.xlu0 %v3134, 100
    %v3167 = vpop.permute.xlu0 %3166
    %3168 = vrot.lane.b32.xlu0 %v3135, 100
    %v3169 = vpop.permute.xlu0 %3168
    %3170 = vrot.lane.b32.xlu0 %v3136, 100
    %v3171 = vpop.permute.xlu0 %3170
    %3172 = vrot.lane.b32.xlu0 %v3137, 100
    %v3173 = vpop.permute.xlu0 %3172
    %vm3174 = vcmask 818176
    %v3175 = vsel %vm3174, %v3151, %v3153
    %v3176 = vsel %vm3174, %v3153, %v3155
    %v3177 = vsel %vm3174, %v3155, %v3157
    %v3178 = vsel %vm3174, %v3159, %v3161
    %v3179 = vsel %vm3174, %v3161, %v3163
    %v3180 = vsel %vm3174, %v3163, %v3165
    %v3181 = vsel %vm3174, %v3167, %v3169
    %v3182 = vsel %vm3174, %v3169, %v3171
    %v3183 = vsel %vm3174, %v3171, %v3173
    %v3199 = vsel %vm3174, -1e+30, %v3151
    %v3200 = vsel %vm3174, -1e+30, %v3159
    %v3201 = vsel %vm3174, -1e+30, %v3167
    %vm3202 = vcmask 310272
    %v3203 = vsel %vm3202, %v3157, -1e+30
    %v3204 = vsel %vm3202, %v3165, -1e+30
    %v3205 = vsel %vm3202, %v3173, -1e+30
    %3209 = vrot.lane.b32.xlu0 %v3199, 78
    %v3210 = vpop.permute.xlu0 %3209
    %3211 = vrot.lane.b32.xlu0 %v3175, 78
    %v3212 = vpop.permute.xlu0 %3211
    %3213 = vrot.lane.b32.xlu0 %v3176, 78
    %v3214 = vpop.permute.xlu0 %3213
    %3215 = vrot.lane.b32.xlu0 %v3177, 78
    %v3216 = vpop.permute.xlu0 %3215
    %3217 = vrot.lane.b32.xlu0 %v3200, 78
    %v3218 = vpop.permute.xlu0 %3217
    %3219 = vrot.lane.b32.xlu0 %v3178, 78
    %v3220 = vpop.permute.xlu0 %3219
    %3221 = vrot.lane.b32.xlu0 %v3179, 78
    %v3222 = vpop.permute.xlu0 %3221
    %3223 = vrot.lane.b32.xlu0 %v3180, 78
    %v3224 = vpop.permute.xlu0 %3223
    %3225 = vrot.lane.b32.xlu0 %v3201, 78
    %v3226 = vpop.permute.xlu0 %3225
    %3227 = vrot.lane.b32.xlu0 %v3181, 78
    %v3228 = vpop.permute.xlu0 %3227
    %3229 = vrot.lane.b32.xlu0 %v3182, 78
    %v3230 = vpop.permute.xlu0 %3229
    %3231 = vrot.lane.b32.xlu0 %v3183, 78
    %v3232 = vpop.permute.xlu0 %3231
    %vm3233 = vcmask 637952
    %v3234 = vsel %vm3233, %v3210, %v3212
    %v3235 = vsel %vm3233, %v3212, %v3214
    %v3236 = vsel %vm3233, %v3214, %v3216
    %v3237 = vsel %vm3233, %v3218, %v3220
    %v3238 = vsel %vm3233, %v3220, %v3222
    %v3239 = vsel %vm3233, %v3222, %v3224
    %v3240 = vsel %vm3233, %v3226, %v3228
    %v3241 = vsel %vm3233, %v3228, %v3230
    %v3242 = vsel %vm3233, %v3230, %v3232
    %v3255 = vmax.f32 %v3199, %v3234
    %v3256 = vmax.f32 %v3175, %v3235
    %v3257 = vmax.f32 %v3176, %v3236
    %v3258 = vmax.f32 %v3177, %v3216
    %v3259 = vmax.f32 %v3200, %v3237
    %v3260 = vmax.f32 %v3178, %v3238
    %v3261 = vmax.f32 %v3179, %v3239
    %v3262 = vmax.f32 %v3180, %v3224
    %v3263 = vmax.f32 %v3201, %v3240
    %v3264 = vmax.f32 %v3181, %v3241
    %v3265 = vmax.f32 %v3182, %v3242
    %v3266 = vmax.f32 %v3183, %v3232
    %3270 = vrot.lane.b32.xlu0 %v3199, 28
    %v3271 = vpop.permute.xlu0 %3270
    %3272 = vrot.lane.b32.xlu0 %v3175, 28
    %v3273 = vpop.permute.xlu0 %3272
    %3274 = vrot.lane.b32.xlu0 %v3176, 28
    %v3275 = vpop.permute.xlu0 %3274
    %3276 = vrot.lane.b32.xlu0 %v3177, 28
    %v3277 = vpop.permute.xlu0 %3276
    %3278 = vrot.lane.b32.xlu0 %v3203, 28
    %v3279 = vpop.permute.xlu0 %3278
    %3280 = vrot.lane.b32.xlu0 %v3200, 28
    %v3281 = vpop.permute.xlu0 %3280
    %3282 = vrot.lane.b32.xlu0 %v3178, 28
    %v3283 = vpop.permute.xlu0 %3282
    %3284 = vrot.lane.b32.xlu0 %v3179, 28
    %v3285 = vpop.permute.xlu0 %3284
    %3286 = vrot.lane.b32.xlu0 %v3180, 28
    %v3287 = vpop.permute.xlu0 %3286
    %3288 = vrot.lane.b32.xlu0 %v3204, 28
    %v3289 = vpop.permute.xlu0 %3288
    %3290 = vrot.lane.b32.xlu0 %v3201, 28
    %v3291 = vpop.permute.xlu0 %3290
    %3292 = vrot.lane.b32.xlu0 %v3181, 28
    %v3293 = vpop.permute.xlu0 %3292
    %3294 = vrot.lane.b32.xlu0 %v3182, 28
    %v3295 = vpop.permute.xlu0 %3294
    %3296 = vrot.lane.b32.xlu0 %v3183, 28
    %v3297 = vpop.permute.xlu0 %3296
    %3298 = vrot.lane.b32.xlu0 %v3205, 28
    %v3299 = vpop.permute.xlu0 %3298
    %vm3300 = vcmask 228352
    %v3301 = vsel %vm3300, %v3271, %v3273
    %v3302 = vsel %vm3300, %v3273, %v3275
    %v3303 = vsel %vm3300, %v3275, %v3277
    %v3304 = vsel %vm3300, %v3277, %v3279
    %v3305 = vsel %vm3300, %v3281, %v3283
    %v3306 = vsel %vm3300, %v3283, %v3285
    %v3307 = vsel %vm3300, %v3285, %v3287
    %v3308 = vsel %vm3300, %v3287, %v3289
    %v3309 = vsel %vm3300, %v3291, %v3293
    %v3310 = vsel %vm3300, %v3293, %v3295
    %v3311 = vsel %vm3300, %v3295, %v3297
    %v3312 = vsel %vm3300, %v3297, %v3299
    %v3325 = vmax.f32 %v3255, %v3301
    %v3326 = vmax.f32 %v3256, %v3302
    %v3327 = vmax.f32 %v3257, %v3303
    %v3328 = vmax.f32 %v3258, %v3304
    %v3329 = vmax.f32 %v3259, %v3305
    %v3330 = vmax.f32 %v3260, %v3306
    %v3331 = vmax.f32 %v3261, %v3307
    %v3332 = vmax.f32 %v3262, %v3308
    %v3333 = vmax.f32 %v3263, %v3309
    %v3334 = vmax.f32 %v3264, %v3310
    %v3335 = vmax.f32 %v3265, %v3311
    %v3336 = vmax.f32 %v3266, %v3312
    %3337 = vrot.lane.b32.xlu0 %v3175, 106
    %v3338 = vpop.permute.xlu0 %3337
    %3339 = vrot.lane.b32.xlu0 %v3176, 106
    %v3340 = vpop.permute.xlu0 %3339
    %3341 = vrot.lane.b32.xlu0 %v3177, 106
    %v3342 = vpop.permute.xlu0 %3341
    %3343 = vrot.lane.b32.xlu0 %v3203, 106
    %v3344 = vpop.permute.xlu0 %3343
    %3345 = vrot.lane.b32.xlu0 %v3178, 106
    %v3346 = vpop.permute.xlu0 %3345
    %3347 = vrot.lane.b32.xlu0 %v3179, 106
    %v3348 = vpop.permute.xlu0 %3347
    %3349 = vrot.lane.b32.xlu0 %v3180, 106
    %v3350 = vpop.permute.xlu0 %3349
    %3351 = vrot.lane.b32.xlu0 %v3204, 106
    %v3352 = vpop.permute.xlu0 %3351
    %3353 = vrot.lane.b32.xlu0 %v3181, 106
    %v3354 = vpop.permute.xlu0 %3353
    %3355 = vrot.lane.b32.xlu0 %v3182, 106
    %v3356 = vpop.permute.xlu0 %3355
    %3357 = vrot.lane.b32.xlu0 %v3183, 106
    %v3358 = vpop.permute.xlu0 %3357
    %3359 = vrot.lane.b32.xlu0 %v3205, 106
    %v3360 = vpop.permute.xlu0 %3359
    %vm3361 = vcmask 867328
    %v3362 = vsel %vm3361, %v3338, %v3340
    %v3363 = vsel %vm3361, %v3340, %v3342
    %v3364 = vsel %vm3361, %v3342, %v3344
    %v3365 = vsel %vm3361, %v3346, %v3348
    %v3366 = vsel %vm3361, %v3348, %v3350
    %v3367 = vsel %vm3361, %v3350, %v3352
    %v3368 = vsel %vm3361, %v3354, %v3356
    %v3369 = vsel %vm3361, %v3356, %v3358
    %v3370 = vsel %vm3361, %v3358, %v3360
    %v3383 = vmax.f32 %v3325, %v3362
    %v3384 = vmax.f32 %v3326, %v3363
    %v3385 = vmax.f32 %v3327, %v3364
    %v3386 = vmax.f32 %v3328, %v3344
    %v3387 = vmax.f32 %v3329, %v3365
    %v3388 = vmax.f32 %v3330, %v3366
    %v3389 = vmax.f32 %v3331, %v3367
    %v3390 = vmax.f32 %v3332, %v3352
    %v3391 = vmax.f32 %v3333, %v3368
    %v3392 = vmax.f32 %v3334, %v3369
    %v3393 = vmax.f32 %v3335, %v3370
    %v3394 = vmax.f32 %v3336, %v3360
    %3395 = vrot.lane.b32.xlu0 %v3175, 56
    %v3396 = vpop.permute.xlu0 %3395
    %3397 = vrot.lane.b32.xlu0 %v3176, 56
    %v3398 = vpop.permute.xlu0 %3397
    %3399 = vrot.lane.b32.xlu0 %v3177, 56
    %v3400 = vpop.permute.xlu0 %3399
    %3401 = vrot.lane.b32.xlu0 %v3203, 56
    %v3402 = vpop.permute.xlu0 %3401
    %3403 = vrot.lane.b32.xlu0 -1e+30, 56
    %v3404 = vpop.permute.xlu0 %3403
    %3405 = vrot.lane.b32.xlu0 %v3178, 56
    %v3406 = vpop.permute.xlu0 %3405
    %3407 = vrot.lane.b32.xlu0 %v3179, 56
    %v3408 = vpop.permute.xlu0 %3407
    %3409 = vrot.lane.b32.xlu0 %v3180, 56
    %v3410 = vpop.permute.xlu0 %3409
    %3411 = vrot.lane.b32.xlu0 %v3204, 56
    %v3412 = vpop.permute.xlu0 %3411
    %3413 = vrot.lane.b32.xlu0 %v3181, 56
    %v3414 = vpop.permute.xlu0 %3413
    %3415 = vrot.lane.b32.xlu0 %v3182, 56
    %v3416 = vpop.permute.xlu0 %3415
    %3417 = vrot.lane.b32.xlu0 %v3183, 56
    %v3418 = vpop.permute.xlu0 %3417
    %3419 = vrot.lane.b32.xlu0 %v3205, 56
    %v3420 = vpop.permute.xlu0 %3419
    %v3421 = vsel %vm1593, %v3396, %v3398
    %v3422 = vsel %vm1593, %v3398, %v3400
    %v3423 = vsel %vm1593, %v3400, %v3402
    %v3424 = vsel %vm1593, %v3402, %v3404
    %v3425 = vsel %vm1593, %v3406, %v3408
    %v3426 = vsel %vm1593, %v3408, %v3410
    %v3427 = vsel %vm1593, %v3410, %v3412
    %v3428 = vsel %vm1593, %v3412, %v3404
    %v3429 = vsel %vm1593, %v3414, %v3416
    %v3430 = vsel %vm1593, %v3416, %v3418
    %v3431 = vsel %vm1593, %v3418, %v3420
    %v3432 = vsel %vm1593, %v3420, %v3404
    %v3445 = vmax.f32 %v3383, %v3421
    %v3446 = vmax.f32 %v3384, %v3422
    %v3447 = vmax.f32 %v3385, %v3423
    %v3448 = vmax.f32 %v3386, %v3424
    %v3449 = vmax.f32 %v3387, %v3425
    %v3450 = vmax.f32 %v3388, %v3426
    %v3451 = vmax.f32 %v3389, %v3427
    %v3452 = vmax.f32 %v3390, %v3428
    %v3453 = vmax.f32 %v3391, %v3429
    %v3454 = vmax.f32 %v3392, %v3430
    %v3455 = vmax.f32 %v3393, %v3431
    %v3456 = vmax.f32 %v3394, %v3432
    %v3457 = vmax.f32 %v3445, 0.0
    %v3458 = vmax.f32 %v3446, 0.0
    %v3459 = vmax.f32 %v3447, 0.0
    %v3460 = vmax.f32 %v3448, 0.0
    %v3461 = vmax.f32 %v3449, 0.0
    %v3462 = vmax.f32 %v3450, 0.0
    %v3463 = vmax.f32 %v3451, 0.0
    %v3464 = vmax.f32 %v3452, 0.0
    %v3465 = vmax.f32 %v3453, 0.0
    %v3466 = vmax.f32 %v3454, 0.0
    %v3467 = vmax.f32 %v3455, 0.0
    %v3468 = vmax.f32 %v3456, 0.0
    %v3469 = vmin.f32 %v3457, 6.0
    %v3470 = vmin.f32 %v3458, 6.0
    %v3471 = vmin.f32 %v3459, 6.0
    %v3472 = vmin.f32 %v3460, 6.0
    %v3473 = vmin.f32 %v3461, 6.0
    %v3474 = vmin.f32 %v3462, 6.0
    %v3475 = vmin.f32 %v3463, 6.0
    %v3476 = vmin.f32 %v3464, 6.0
    %v3477 = vmin.f32 %v3465, 6.0
    %v3478 = vmin.f32 %v3466, 6.0
    %v3479 = vmin.f32 %v3467, 6.0
    %v3480 = vmin.f32 %v3468, 6.0
    %v3481 = vld [vmem:[%s10] sm:$0xf]
    %v3482 = vld [vmem:[%s10 + $0x4] sm:$0x1]
    %v3483 = vpack.c.bf16 %v3473, %v3469
    %v3484 = vpack.c.bf16 %v3474, %v3470
    %v3485 = vpack.c.bf16 %v3475, %v3471
    %v3486 = vpack.c.bf16 %v3476, %v3472
    %v3487 = vpack.c.bf16 %v3477, %v3477
    %v3488 = vpack.c.bf16 %v3478, %v3478
    %v3489 = vpack.c.bf16 %v3479, %v3479
    %v3490 = vpack.c.bf16 %v3480, %v3480
    %v3493 = vunpack.c.l.b16 %v3481
    %v3494 = vunpack.c.l.b16 %v3482
    %v3495 = vpack.c.b16 %v3494, %v3493
    %vm3496 = vcmask 179200
    %v3498 = vsel %vm3496, %v3495, 0
    %vm3500 = vcmask 1042432
    %v3502 = vsel %vm3500, %v3487, 0
    %v3505 = vsel %vm3500, %v3488, 0
    %v3508 = vsel %vm3500, %v3489, 0
    %v3511 = vsel %vm3500, %v3490, 0
    %3513 = vmatpush.bf16.msra.mxu0 0
    %3514 = vmatpush.bf16.msra.mxu0 0
    %3515 = vmatpush.bf16.msra.mxu0 0
    %3516 = vmatpush.bf16.msra.mxu0 0
    %3517 = vmatpush.bf16.msra.mxu0 0
    %3518 = vmatpush.bf16.msra.mxu0 0
    %3519 = vmatpush.bf16.msra.mxu0 %v3502
    %3520 = vmatpush.bf16.msra.mxu0 %v3483
    %3521 = vmatmul.bf16.gmra.mxu0 %v3498
    %v3522 = vpop.f32.mrf.mxu0
    %v3523 = vadd.f32 0.0, %v3522
    %v3524 = vpop.f32.mrf.mxu0
    %v3525 = vadd.f32 0.0, %v3524
    %3526 = vdwg.mxu0
    %3527 = vmatpush.bf16.msra.mxu0 0
    %3528 = vmatpush.bf16.msra.mxu0 0
    %3529 = vmatpush.bf16.msra.mxu0 0
    %3530 = vmatpush.bf16.msra.mxu0 0
    %3531 = vmatpush.bf16.msra.mxu0 0
    %3532 = vmatpush.bf16.msra.mxu0 0
    %3533 = vmatpush.bf16.msra.mxu0 %v3505
    %3534 = vmatpush.bf16.msra.mxu0 %v3484
    %3535 = vmatmul.bf16.gmra.mxu0 %v3498
    %v3536 = vpop.f32.mrf.mxu0
    %v3537 = vadd.f32 0.0, %v3536
    %v3538 = vpop.f32.mrf.mxu0
    %v3539 = vadd.f32 0.0, %v3538
    %3540 = vdwg.mxu0
    %3541 = vmatpush.bf16.msra.mxu0 0
    %3542 = vmatpush.bf16.msra.mxu0 0
    %3543 = vmatpush.bf16.msra.mxu0 0
    %3544 = vmatpush.bf16.msra.mxu0 0
    %3545 = vmatpush.bf16.msra.mxu0 0
    %3546 = vmatpush.bf16.msra.mxu0 0
    %3547 = vmatpush.bf16.msra.mxu0 %v3508
    %3548 = vmatpush.bf16.msra.mxu0 %v3485
    %3549 = vmatmul.bf16.gmra.mxu0 %v3498
    %v3550 = vpop.f32.mrf.mxu0
    %v3551 = vadd.f32 0.0, %v3550
    %v3552 = vpop.f32.mrf.mxu0
    %v3553 = vadd.f32 0.0, %v3552
    %3554 = vdwg.mxu0
    %3555 = vmatpush.bf16.msra.mxu0 0
    %3556 = vmatpush.bf16.msra.mxu0 0
    %3557 = vmatpush.bf16.msra.mxu0 0
    %3558 = vmatpush.bf16.msra.mxu0 0
    %3559 = vmatpush.bf16.msra.mxu0 0
    %3560 = vmatpush.bf16.msra.mxu0 0
    %3561 = vmatpush.bf16.msra.mxu0 %v3511
    %3562 = vmatpush.bf16.msra.mxu0 %v3486
    %3563 = vmatmul.bf16.gmra.mxu0 %v3498
    %v3564 = vpop.f32.mrf.mxu0
    %v3565 = vadd.f32 0.0, %v3564
    %v3566 = vpop.f32.mrf.mxu0
    %v3567 = vadd.f32 0.0, %v3566
    %3568 = vdwg.mxu0
    %v3569 = vpack.c.bf16 %v3525, %v3523
    %v3570 = vpack.c.bf16 %v3539, %v3537
    %v3571 = vpack.c.bf16 %v3553, %v3551
    %v3572 = vpack.c.bf16 %v3567, %v3565
    %v3573 = vld [vmem:[%s11] sm:$0xff]
    %v3574 = vld [vmem:[%s11 + $0x8] sm:$0xff]
    %v3575 = vld [vmem:[%s11 + $0x10] sm:$0xff]
    %v3576 = vld [vmem:[%s11 + $0x18] sm:$0xff]
    %v3577 = vld [vmem:[%s11 + $0x20] sm:$0xff]
    %v3578 = vld [vmem:[%s11 + $0x28] sm:$0xff]
    %v3579 = vld [vmem:[%s11 + $0x30] sm:$0xff]
    %v3580 = vld [vmem:[%s11 + $0x38] sm:$0xff]
    %v3581 = vld [vmem:[%s11 + $0x40] sm:$0xff]
    %v3582 = vld [vmem:[%s11 + $0x48] sm:$0xff]
    %v3583 = vld [vmem:[%s11 + $0x50] sm:$0xff]
    %v3584 = vld [vmem:[%s11 + $0x58] sm:$0xff]
    %v3585 = vld [vmem:[%s11 + $0x60] sm:$0xff]
    %v3586 = vld [vmem:[%s11 + $0x68] sm:$0xff]
    %v3587 = vld [vmem:[%s11 + $0x70] sm:$0xff]
    %v3588 = vld [vmem:[%s11 + $0x78] sm:$0xff]
    %v3589 = vld [vmem:[%s11 + $0x80] sm:$0xff]
    %v3590 = vld [vmem:[%s11 + $0x88] sm:$0xff]
    %v3591 = vld [vmem:[%s11 + $0x90] sm:$0xff]
    %v3592 = vld [vmem:[%s11 + $0x98] sm:$0xff]
    %v3593 = vld [vmem:[%s11 + $0xa0] sm:$0xff]
    %v3594 = vld [vmem:[%s11 + $0xa8] sm:$0xff]
    %v3595 = vld [vmem:[%s11 + $0xb0] sm:$0xff]
    %v3596 = vld [vmem:[%s11 + $0xb8] sm:$0xff]
    %v3597 = vld [vmem:[%s11 + $0xc0] sm:$0xff]
    %v3598 = vld [vmem:[%s11 + $0xc8] sm:$0xff]
    %v3599 = vld [vmem:[%s11 + $0xd0] sm:$0xff]
    %v3600 = vld [vmem:[%s11 + $0xd8] sm:$0xff]
    %v3601 = vld [vmem:[%s11 + $0xe0] sm:$0xff]
    %v3602 = vld [vmem:[%s11 + $0xe8] sm:$0xff]
    %v3603 = vld [vmem:[%s11 + $0xf0] sm:$0xff]
    %v3604 = vld [vmem:[%s11 + $0xf8] sm:$0xff]
    %v3605 = vld [vmem:[%s11 + $0x100] sm:$0xff]
    %v3606 = vld [vmem:[%s11 + $0x108] sm:$0xff]
    %v3607 = vld [vmem:[%s11 + $0x110] sm:$0xff]
    %v3608 = vld [vmem:[%s11 + $0x118] sm:$0xff]
    %v3609 = vld [vmem:[%s11 + $0x120] sm:$0xff]
    %v3610 = vld [vmem:[%s11 + $0x128] sm:$0xff]
    %v3611 = vld [vmem:[%s11 + $0x130] sm:$0xff]
    %v3612 = vld [vmem:[%s11 + $0x138] sm:$0xff]
    %v3613 = vld [vmem:[%s11 + $0x140] sm:$0xff]
    %v3614 = vld [vmem:[%s11 + $0x148] sm:$0xff]
    %v3615 = vld [vmem:[%s11 + $0x150] sm:$0xff]
    %v3616 = vld [vmem:[%s11 + $0x158] sm:$0xff]
    %v3617 = vld [vmem:[%s11 + $0x160] sm:$0xff]
    %v3618 = vld [vmem:[%s11 + $0x168] sm:$0xff]
    %v3619 = vld [vmem:[%s11 + $0x170] sm:$0xff]
    %v3620 = vld [vmem:[%s11 + $0x178] sm:$0xff]
    %v3621 = vld [vmem:[%s11 + $0x180] sm:$0xff]
    %v3622 = vld [vmem:[%s11 + $0x188] sm:$0xff]
    %v3623 = vld [vmem:[%s11 + $0x190] sm:$0xff]
    %v3624 = vld [vmem:[%s11 + $0x198] sm:$0xff]
    %v3625 = vld [vmem:[%s11 + $0x1a0] sm:$0xff]
    %v3626 = vld [vmem:[%s11 + $0x1a8] sm:$0xff]
    %v3627 = vld [vmem:[%s11 + $0x1b0] sm:$0xff]
    %v3628 = vld [vmem:[%s11 + $0x1b8] sm:$0xff]
    %v3629 = vld [vmem:[%s11 + $0x1c0] sm:$0x11]
    %v3687 = vunpack.c.l.b16 %v3573
    %v3688 = vunpack.c.h.b16 %v3573
    %v3689 = vunpack.c.l.b16 %v3574
    %v3690 = vunpack.c.h.b16 %v3574
    %v3691 = vunpack.c.l.b16 %v3575
    %v3692 = vunpack.c.h.b16 %v3575
    %v3693 = vunpack.c.l.b16 %v3576
    %v3694 = vunpack.c.h.b16 %v3576
    %v3695 = vunpack.c.l.b16 %v3577
    %v3696 = vunpack.c.h.b16 %v3577
    %v3697 = vunpack.c.l.b16 %v3578
    %v3698 = vunpack.c.h.b16 %v3578
    %v3699 = vunpack.c.l.b16 %v3579
    %v3700 = vunpack.c.h.b16 %v3579
    %v3701 = vunpack.c.l.b16 %v3580
    %v3702 = vunpack.c.h.b16 %v3580
    %v3703 = vunpack.c.l.b16 %v3581
    %v3704 = vunpack.c.h.b16 %v3581
    %v3705 = vunpack.c.l.b16 %v3582
    %v3706 = vunpack.c.h.b16 %v3582
    %v3707 = vunpack.c.l.b16 %v3583
    %v3708 = vunpack.c.h.b16 %v3583
    %v3709 = vunpack.c.l.b16 %v3584
    %v3710 = vunpack.c.h.b16 %v3584
    %v3711 = vunpack.c.l.b16 %v3585
    %v3712 = vunpack.c.h.b16 %v3585
    %v3713 = vunpack.c.l.b16 %v3586
    %v3714 = vunpack.c.h.b16 %v3586
    %v3715 = vunpack.c.l.b16 %v3587
    %v3716 = vunpack.c.h.b16 %v3587
    %v3717 = vunpack.c.l.b16 %v3588
    %v3718 = vunpack.c.h.b16 %v3588
    %v3719 = vunpack.c.l.b16 %v3589
    %v3720 = vunpack.c.h.b16 %v3589
    %v3721 = vunpack.c.l.b16 %v3590
    %v3722 = vunpack.c.h.b16 %v3590
    %v3723 = vunpack.c.l.b16 %v3591
    %v3724 = vunpack.c.h.b16 %v3591
    %v3725 = vunpack.c.l.b16 %v3592
    %v3726 = vunpack.c.h.b16 %v3592
    %v3727 = vunpack.c.l.b16 %v3593
    %v3728 = vunpack.c.h.b16 %v3593
    %v3729 = vunpack.c.l.b16 %v3594
    %v3730 = vunpack.c.h.b16 %v3594
    %v3731 = vunpack.c.l.b16 %v3595
    %v3732 = vunpack.c.h.b16 %v3595
    %v3733 = vunpack.c.l.b16 %v3596
    %v3734 = vunpack.c.h.b16 %v3596
    %v3735 = vunpack.c.l.b16 %v3597
    %v3736 = vunpack.c.h.b16 %v3597
    %v3737 = vunpack.c.l.b16 %v3598
    %v3738 = vunpack.c.h.b16 %v3598
    %v3739 = vunpack.c.l.b16 %v3599
    %v3740 = vunpack.c.h.b16 %v3599
    %v3741 = vunpack.c.l.b16 %v3600
    %v3742 = vunpack.c.h.b16 %v3600
    %v3743 = vunpack.c.l.b16 %v3601
    %v3744 = vunpack.c.h.b16 %v3601
    %v3745 = vunpack.c.l.b16 %v3602
    %v3746 = vunpack.c.h.b16 %v3602
    %v3747 = vunpack.c.l.b16 %v3603
    %v3748 = vunpack.c.h.b16 %v3603
    %v3749 = vunpack.c.l.b16 %v3604
    %v3750 = vunpack.c.h.b16 %v3604
    %v3751 = vunpack.c.l.b16 %v3605
    %v3752 = vunpack.c.h.b16 %v3605
    %v3753 = vunpack.c.l.b16 %v3606
    %v3754 = vunpack.c.h.b16 %v3606
    %v3755 = vunpack.c.l.b16 %v3607
    %v3756 = vunpack.c.h.b16 %v3607
    %v3757 = vunpack.c.l.b16 %v3608
    %v3758 = vunpack.c.h.b16 %v3608
    %v3759 = vunpack.c.l.b16 %v3609
    %v3760 = vunpack.c.h.b16 %v3609
    %v3761 = vunpack.c.l.b16 %v3610
    %v3762 = vunpack.c.h.b16 %v3610
    %v3763 = vunpack.c.l.b16 %v3611
    %v3764 = vunpack.c.h.b16 %v3611
    %v3765 = vunpack.c.l.b16 %v3612
    %v3766 = vunpack.c.h.b16 %v3612
    %v3767 = vunpack.c.l.b16 %v3613
    %v3768 = vunpack.c.h.b16 %v3613
    %v3769 = vunpack.c.l.b16 %v3614
    %v3770 = vunpack.c.h.b16 %v3614
    %v3771 = vunpack.c.l.b16 %v3615
    %v3772 = vunpack.c.h.b16 %v3615
    %v3773 = vunpack.c.l.b16 %v3616
    %v3774 = vunpack.c.h.b16 %v3616
    %v3775 = vunpack.c.l.b16 %v3617
    %v3776 = vunpack.c.h.b16 %v3617
    %v3777 = vunpack.c.l.b16 %v3618
    %v3778 = vunpack.c.h.b16 %v3618
    %v3779 = vunpack.c.l.b16 %v3619
    %v3780 = vunpack.c.h.b16 %v3619
    %v3781 = vunpack.c.l.b16 %v3620
    %v3782 = vunpack.c.h.b16 %v3620
    %v3783 = vunpack.c.l.b16 %v3621
    %v3784 = vunpack.c.h.b16 %v3621
    %v3785 = vunpack.c.l.b16 %v3622
    %v3786 = vunpack.c.h.b16 %v3622
    %v3787 = vunpack.c.l.b16 %v3623
    %v3788 = vunpack.c.h.b16 %v3623
    %v3789 = vunpack.c.l.b16 %v3624
    %v3790 = vunpack.c.h.b16 %v3624
    %v3791 = vunpack.c.l.b16 %v3625
    %v3792 = vunpack.c.h.b16 %v3625
    %v3793 = vunpack.c.l.b16 %v3626
    %v3794 = vunpack.c.h.b16 %v3626
    %v3795 = vunpack.c.l.b16 %v3627
    %v3796 = vunpack.c.h.b16 %v3627
    %v3797 = vunpack.c.l.b16 %v3628
    %v3798 = vunpack.c.h.b16 %v3628
    %v3799 = vunpack.c.l.b16 %v3629
    %v3800 = vunpack.c.h.b16 %v3629
    %v3801 = vpack.c.b16 %v3689, %v3687
    %v3802 = vpack.c.b16 %v3690, %v3688
    %v3803 = vpack.c.b16 %v3693, %v3691
    %v3804 = vpack.c.b16 %v3694, %v3692
    %v3805 = vpack.c.b16 %v3697, %v3695
    %v3806 = vpack.c.b16 %v3698, %v3696
    %v3807 = vpack.c.b16 %v3701, %v3699
    %v3808 = vpack.c.b16 %v3702, %v3700
    %v3809 = vpack.c.b16 %v3705, %v3703
    %v3810 = vpack.c.b16 %v3706, %v3704
    %v3811 = vpack.c.b16 %v3709, %v3707
    %v3812 = vpack.c.b16 %v3710, %v3708
    %v3813 = vpack.c.b16 %v3713, %v3711
    %v3814 = vpack.c.b16 %v3714, %v3712
    %v3815 = vpack.c.b16 %v3717, %v3715
    %v3816 = vpack.c.b16 %v3718, %v3716
    %v3817 = vpack.c.b16 %v3721, %v3719
    %v3818 = vpack.c.b16 %v3722, %v3720
    %v3819 = vpack.c.b16 %v3725, %v3723
    %v3820 = vpack.c.b16 %v3726, %v3724
    %v3821 = vpack.c.b16 %v3729, %v3727
    %v3822 = vpack.c.b16 %v3730, %v3728
    %v3823 = vpack.c.b16 %v3733, %v3731
    %v3824 = vpack.c.b16 %v3734, %v3732
    %v3825 = vpack.c.b16 %v3737, %v3735
    %v3826 = vpack.c.b16 %v3738, %v3736
    %v3827 = vpack.c.b16 %v3741, %v3739
    %v3828 = vpack.c.b16 %v3742, %v3740
    %v3829 = vpack.c.b16 %v3745, %v3743
    %v3830 = vpack.c.b16 %v3746, %v3744
    %v3831 = vpack.c.b16 %v3749, %v3747
    %v3832 = vpack.c.b16 %v3750, %v3748
    %v3833 = vpack.c.b16 %v3753, %v3751
    %v3834 = vpack.c.b16 %v3754, %v3752
    %v3835 = vpack.c.b16 %v3757, %v3755
    %v3836 = vpack.c.b16 %v3758, %v3756
    %v3837 = vpack.c.b16 %v3761, %v3759
    %v3838 = vpack.c.b16 %v3762, %v3760
    %v3839 = vpack.c.b16 %v3765, %v3763
    %v3840 = vpack.c.b16 %v3766, %v3764
    %v3841 = vpack.c.b16 %v3769, %v3767
    %v3842 = vpack.c.b16 %v3770, %v3768
    %v3843 = vpack.c.b16 %v3773, %v3771
    %v3844 = vpack.c.b16 %v3774, %v3772
    %v3845 = vpack.c.b16 %v3777, %v3775
    %v3846 = vpack.c.b16 %v3778, %v3776
    %v3847 = vpack.c.b16 %v3781, %v3779
    %v3848 = vpack.c.b16 %v3782, %v3780
    %v3849 = vpack.c.b16 %v3785, %v3783
    %v3850 = vpack.c.b16 %v3786, %v3784
    %v3851 = vpack.c.b16 %v3789, %v3787
    %v3852 = vpack.c.b16 %v3790, %v3788
    %v3853 = vpack.c.b16 %v3793, %v3791
    %v3854 = vpack.c.b16 %v3794, %v3792
    %v3855 = vpack.c.b16 %v3797, %v3795
    %v3856 = vpack.c.b16 %v3798, %v3796
    %v3857 = vpack.c.b16 %v3799, %v3799
    %v3858 = vpack.c.b16 %v3800, %v3800
    %vm3915 = vcmask 539648
    %v3917 = vsel %vm3915, %v3572, 0
    %v3920 = vsel %vm1726, %v3857, 0
    %v3923 = vsel %vm1726, %v3858, 0
    %3925 = vmatpush.bf16.msra.mxu0 %v3815
    %3926 = vmatpush.bf16.msra.mxu0 %v3813
    %3927 = vmatpush.bf16.msra.mxu0 %v3811
    %3928 = vmatpush.bf16.msra.mxu0 %v3809
    %3929 = vmatpush.bf16.msra.mxu0 %v3807
    %3930 = vmatpush.bf16.msra.mxu0 %v3805
    %3931 = vmatpush.bf16.msra.mxu0 %v3803
    %3932 = vmatpush.bf16.msra.mxu0 %v3801
    %3933 = vmatmul.bf16.gmra.mxu0 %v3569
    %v3934 = vpop.f32.mrf.mxu0
    %v3935 = vadd.f32 0.0, %v3934
    %v3936 = vpop.f32.mrf.mxu0
    %v3937 = vadd.f32 0.0, %v3936
    %3938 = vdwg.mxu0
    %3939 = vmatpush.bf16.msra.mxu0 %v3831
    %3940 = vmatpush.bf16.msra.mxu0 %v3829
    %3941 = vmatpush.bf16.msra.mxu0 %v3827
    %3942 = vmatpush.bf16.msra.mxu0 %v3825
    %3943 = vmatpush.bf16.msra.mxu0 %v3823
    %3944 = vmatpush.bf16.msra.mxu0 %v3821
    %3945 = vmatpush.bf16.msra.mxu0 %v3819
    %3946 = vmatpush.bf16.msra.mxu0 %v3817
    %3947 = vmatmul.bf16.gmra.mxu0 %v3570
    %v3948 = vpop.f32.mrf.mxu0
    %v3949 = vadd.f32 %v3935, %v3948
    %v3950 = vpop.f32.mrf.mxu0
    %v3951 = vadd.f32 %v3937, %v3950
    %3952 = vdwg.mxu0
    %3953 = vmatpush.bf16.msra.mxu0 %v3847
    %3954 = vmatpush.bf16.msra.mxu0 %v3845
    %3955 = vmatpush.bf16.msra.mxu0 %v3843
    %3956 = vmatpush.bf16.msra.mxu0 %v3841
    %3957 = vmatpush.bf16.msra.mxu0 %v3839
    %3958 = vmatpush.bf16.msra.mxu0 %v3837
    %3959 = vmatpush.bf16.msra.mxu0 %v3835
    %3960 = vmatpush.bf16.msra.mxu0 %v3833
    %3961 = vmatmul.bf16.gmra.mxu0 %v3571
    %v3962 = vpop.f32.mrf.mxu0
    %v3963 = vadd.f32 %v3949, %v3962
    %v3964 = vpop.f32.mrf.mxu0
    %v3965 = vadd.f32 %v3951, %v3964
    %3966 = vdwg.mxu0
    %3967 = vmatpush.bf16.msra.mxu0 0
    %3968 = vmatpush.bf16.msra.mxu0 0
    %3969 = vmatpush.bf16.msra.mxu0 0
    %3970 = vmatpush.bf16.msra.mxu0 %v3920
    %3971 = vmatpush.bf16.msra.mxu0 %v3855
    %3972 = vmatpush.bf16.msra.mxu0 %v3853
    %3973 = vmatpush.bf16.msra.mxu0 %v3851
    %3974 = vmatpush.bf16.msra.mxu0 %v3849
    %3975 = vmatmul.bf16.gmra.mxu0 %v3917
    %v3976 = vpop.f32.mrf.mxu0
    %v3977 = vadd.f32 %v3963, %v3976
    %v3978 = vpop.f32.mrf.mxu0
    %v3979 = vadd.f32 %v3965, %v3978
    %3980 = vdwg.mxu0
    %3981 = vmatpush.bf16.msra.mxu0 %v3816
    %3982 = vmatpush.bf16.msra.mxu0 %v3814
    %3983 = vmatpush.bf16.msra.mxu0 %v3812
    %3984 = vmatpush.bf16.msra.mxu0 %v3810
    %3985 = vmatpush.bf16.msra.mxu0 %v3808
    %3986 = vmatpush.bf16.msra.mxu0 %v3806
    %3987 = vmatpush.bf16.msra.mxu0 %v3804
    %3988 = vmatpush.bf16.msra.mxu0 %v3802
    %3989 = vmatmul.bf16.gmra.mxu0 %v3569
    %v3990 = vpop.f32.mrf.mxu0
    %v3991 = vadd.f32 0.0, %v3990
    %v3992 = vpop.f32.mrf.mxu0
    %v3993 = vadd.f32 0.0, %v3992
    %3994 = vdwg.mxu0
    %3995 = vmatpush.bf16.msra.mxu0 %v3832
    %3996 = vmatpush.bf16.msra.mxu0 %v3830
    %3997 = vmatpush.bf16.msra.mxu0 %v3828
    %3998 = vmatpush.bf16.msra.mxu0 %v3826
    %3999 = vmatpush.bf16.msra.mxu0 %v3824
    %4000 = vmatpush.bf16.msra.mxu0 %v3822
    %4001 = vmatpush.bf16.msra.mxu0 %v3820
    %4002 = vmatpush.bf16.msra.mxu0 %v3818
    %4003 = vmatmul.bf16.gmra.mxu0 %v3570
    %v4004 = vpop.f32.mrf.mxu0
    %v4005 = vadd.f32 %v3991, %v4004
    %v4006 = vpop.f32.mrf.mxu0
    %v4007 = vadd.f32 %v3993, %v4006
    %4008 = vdwg.mxu0
    %4009 = vmatpush.bf16.msra.mxu0 %v3848
    %4010 = vmatpush.bf16.msra.mxu0 %v3846
    %4011 = vmatpush.bf16.msra.mxu0 %v3844
    %4012 = vmatpush.bf16.msra.mxu0 %v3842
    %4013 = vmatpush.bf16.msra.mxu0 %v3840
    %4014 = vmatpush.bf16.msra.mxu0 %v3838
    %4015 = vmatpush.bf16.msra.mxu0 %v3836
    %4016 = vmatpush.bf16.msra.mxu0 %v3834
    %4017 = vmatmul.bf16.gmra.mxu0 %v3571
    %v4018 = vpop.f32.mrf.mxu0
    %v4019 = vadd.f32 %v4005, %v4018
    %v4020 = vpop.f32.mrf.mxu0
    %v4021 = vadd.f32 %v4007, %v4020
    %4022 = vdwg.mxu0
    %4023 = vmatpush.bf16.msra.mxu0 0
    %4024 = vmatpush.bf16.msra.mxu0 0
    %4025 = vmatpush.bf16.msra.mxu0 0
    %4026 = vmatpush.bf16.msra.mxu0 %v3923
    %4027 = vmatpush.bf16.msra.mxu0 %v3856
    %4028 = vmatpush.bf16.msra.mxu0 %v3854
    %4029 = vmatpush.bf16.msra.mxu0 %v3852
    %4030 = vmatpush.bf16.msra.mxu0 %v3850
    %4031 = vmatmul.bf16.gmra.mxu0 %v3917
    %v4032 = vpop.f32.mrf.mxu0
    %v4033 = vadd.f32 %v4019, %v4032
    %v4034 = vpop.f32.mrf.mxu0
    %v4035 = vadd.f32 %v4021, %v4034
    %4036 = vdwg.mxu0
    %v4037 = vpack.c.bf16 %v4033, %v3977
    %v4038 = vpack.c.bf16 %v4035, %v3979
    %v4039 = vld [vmem:[#allocation7] sm:$0x1]
    %v4040 = vld [vmem:[%s13] sm:$0x1]
    %4041 = vset.pattern.permute.xlu0 0
    %4042 = vperm.xlu0 %4041, %v116
    %v4043 = vpop.permute.xlu0 %4042
    %v4046 = vperm.slane %v4040, 0
    %v4048 = vmul.f32 %v4043, %v4046
    %v4050 = vperm.slane %v4039, 0
    %v4052 = vadd.f32 %v4050, %v4048
    %v4054 = vunpack.c.l.b16 %v4037
    %v4055 = vunpack.c.h.b16 %v4037
    %v4056 = vpack.c.b16 %v4054, %v4054
    %v4057 = vpack.c.b16 %v4055, %v4055
    %v4060 = vrot.slane %v4056, 2
    %v4061 = vrot.slane %v4057, 2
    %vm4064 = vcmask 1040384
    %vm4065 = vsmask.f32 256
    %vm4066 = vmand %vm4064, %vm4065
    %v4067 = vsel %vm4066, %v4056, %v4060
    %v4068 = vsel %vm4066, %v4057, %v4061
    %v4069 = vld [vmem:[%s12] sm:$0xf]
    %v4070 = vld [vmem:[%s12 + $0x4] sm:$0xf]
    %v4071 = vld [vmem:[%s12 + $0x8] sm:$0xf]
    %v4072 = vld [vmem:[%s12 + $0xc] sm:$0xf]
    %v4073 = vld [vmem:[%s12 + $0x10] sm:$0xf]
    %v4074 = vld [vmem:[%s12 + $0x14] sm:$0xf]
    %v4075 = vld [vmem:[%s12 + $0x18] sm:$0xf]
    %v4076 = vld [vmem:[%s12 + $0x1c] sm:$0xf]
    %v4077 = vld [vmem:[%s12 + $0x20] sm:$0xf]
    %v4078 = vld [vmem:[%s12 + $0x24] sm:$0xf]
    %v4079 = vld [vmem:[%s12 + $0x28] sm:$0xf]
    %v4080 = vld [vmem:[%s12 + $0x2c] sm:$0xf]
    %v4081 = vld [vmem:[%s12 + $0x30] sm:$0xf]
    %v4082 = vld [vmem:[%s12 + $0x34] sm:$0xf]
    %v4083 = vld [vmem:[%s12 + $0x38] sm:$0xf]
    %v4084 = vld [vmem:[%s12 + $0x3c] sm:$0xf]
    %v4085 = vld [vmem:[%s12 + $0x40] sm:$0xf]
    %v4086 = vld [vmem:[%s12 + $0x44] sm:$0xf]
    %v4087 = vld [vmem:[%s12 + $0x48] sm:$0xf]
    %v4088 = vld [vmem:[%s12 + $0x4c] sm:$0xf]
    %v4089 = vld [vmem:[%s12 + $0x50] sm:$0xf]
    %v4090 = vld [vmem:[%s12 + $0x54] sm:$0xf]
    %v4091 = vld [vmem:[%s12 + $0x58] sm:$0xf]
    %v4092 = vld [vmem:[%s12 + $0x5c] sm:$0xf]
    %v4093 = vld [vmem:[%s12 + $0x60] sm:$0xf]
    %v4094 = vld [vmem:[%s12 + $0x64] sm:$0xf]
    %v4095 = vld [vmem:[%s12 + $0x68] sm:$0xf]
    %v4096 = vld [vmem:[%s12 + $0x6c] sm:$0xf]
    %v4097 = vld [vmem:[%s12 + $0x70] sm:$0xf]
    %v4098 = vld [vmem:[%s12 + $0x74] sm:$0xf]
    %v4099 = vld [vmem:[%s12 + $0x78] sm:$0xf]
    %v4100 = vld [vmem:[%s12 + $0x7c] sm:$0x1]
    %v4133 = vunpack.c.l.b16 %v4069
    %v4134 = vunpack.c.l.b16 %v4070
    %v4135 = vunpack.c.l.b16 %v4071
    %v4136 = vunpack.c.l.b16 %v4072
    %v4137 = vunpack.c.l.b16 %v4073
    %v4138 = vunpack.c.l.b16 %v4074
    %v4139 = vunpack.c.l.b16 %v4075
    %v4140 = vunpack.c.l.b16 %v4076
    %v4141 = vunpack.c.l.b16 %v4077
    %v4142 = vunpack.c.l.b16 %v4078
    %v4143 = vunpack.c.l.b16 %v4079
    %v4144 = vunpack.c.l.b16 %v4080
    %v4145 = vunpack.c.l.b16 %v4081
    %v4146 = vunpack.c.l.b16 %v4082
    %v4147 = vunpack.c.l.b16 %v4083
    %v4148 = vunpack.c.l.b16 %v4084
    %v4149 = vunpack.c.l.b16 %v4085
    %v4150 = vunpack.c.l.b16 %v4086
    %v4151 = vunpack.c.l.b16 %v4087
    %v4152 = vunpack.c.l.b16 %v4088
    %v4153 = vunpack.c.l.b16 %v4089
    %v4154 = vunpack.c.l.b16 %v4090
    %v4155 = vunpack.c.l.b16 %v4091
    %v4156 = vunpack.c.l.b16 %v4092
    %v4157 = vunpack.c.l.b16 %v4093
    %v4158 = vunpack.c.l.b16 %v4094
    %v4159 = vunpack.c.l.b16 %v4095
    %v4160 = vunpack.c.l.b16 %v4096
    %v4161 = vunpack.c.l.b16 %v4097
    %v4162 = vunpack.c.l.b16 %v4098
    %v4163 = vunpack.c.l.b16 %v4099
    %v4164 = vunpack.c.l.b16 %v4100
    %v4165 = vpack.c.b16 %v4134, %v4133
    %v4166 = vpack.c.b16 %v4136, %v4135
    %v4167 = vpack.c.b16 %v4138, %v4137
    %v4168 = vpack.c.b16 %v4140, %v4139
    %v4169 = vpack.c.b16 %v4142, %v4141
    %v4170 = vpack.c.b16 %v4144, %v4143
    %v4171 = vpack.c.b16 %v4146, %v4145
    %v4172 = vpack.c.b16 %v4148, %v4147
    %v4173 = vpack.c.b16 %v4150, %v4149
    %v4174 = vpack.c.b16 %v4152, %v4151
    %v4175 = vpack.c.b16 %v4154, %v4153
    %v4176 = vpack.c.b16 %v4156, %v4155
    %v4177 = vpack.c.b16 %v4158, %v4157
    %v4178 = vpack.c.b16 %v4160, %v4159
    %v4179 = vpack.c.b16 %v4162, %v4161
    %v4180 = vpack.c.b16 %v4164, %v4163
    %vm4196 = vcmask 998400
    %v4198 = vsel %vm4196, %v4068, 0
    %v4201 = vsel %vm1076, %v4180, 0
    %4203 = vmatpush.bf16.msra.mxu0 %v4172
    %4204 = vmatpush.bf16.msra.mxu0 %v4171
    %4205 = vmatpush.bf16.msra.mxu0 %v4170
    %4206 = vmatpush.bf16.msra.mxu0 %v4169
    %4207 = vmatpush.bf16.msra.mxu0 %v4168
    %4208 = vmatpush.bf16.msra.mxu0 %v4167
    %4209 = vmatpush.bf16.msra.mxu0 %v4166
    %4210 = vmatpush.bf16.msra.mxu0 %v4165
    %4211 = vmatmul.bf16.gmra.mxu0 %v4067
    %v4212 = vpop.f32.mrf.mxu0
    %v4213 = vadd.f32 0.0, %v4212
    %v4214 = vpop.f32.mrf.mxu0
    %4215 = vdwg.mxu0
    %4216 = vmatpush.bf16.msra.mxu0 %v4201
    %4217 = vmatpush.bf16.msra.mxu0 %v4179
    %4218 = vmatpush.bf16.msra.mxu0 %v4178
    %4219 = vmatpush.bf16.msra.mxu0 %v4177
    %4220 = vmatpush.bf16.msra.mxu0 %v4176
    %4221 = vmatpush.bf16.msra.mxu0 %v4175
    %4222 = vmatpush.bf16.msra.mxu0 %v4174
    %4223 = vmatpush.bf16.msra.mxu0 %v4173
    %4224 = vmatmul.bf16.gmra.mxu0 %v4198
    %v4225 = vpop.f32.mrf.mxu0
    %v4226 = vadd.f32 %v4213, %v4225
    %v4227 = vpop.f32.mrf.mxu0
    %4228 = vdwg.mxu0
    %v4229 = vadd.f32 %v4052, %v4226
    %v4231 = vshrl.u32 %v4056, 16
    %v4234 = vshrl.u32 %v4057, 16
    %v4238 = vshll.u32 %v4056, 16
    %v4240 = vrot.slane %v4238, 3
    %v4241 = vshll.u32 %v4057, 16
    %v4243 = vrot.slane %v4241, 3
    %v4246 = vsel %vm4066, %v4231, %v4240
    %v4247 = vsel %vm4066, %v4234, %v4243
    %s4248 = scalar_lea.vmem %s12, 128
    %v4249 = vld [vmem:[%s4248] sm:$0xf]
    %v4250 = vld [vmem:[%s4248 + $0x4] sm:$0xf]
    %v4251 = vld [vmem:[%s4248 + $0x8] sm:$0xf]
    %v4252 = vld [vmem:[%s4248 + $0xc] sm:$0xf]
    %v4253 = vld [vmem:[%s4248 + $0x10] sm:$0xf]
    %v4254 = vld [vmem:[%s4248 + $0x14] sm:$0xf]
    %v4255 = vld [vmem:[%s4248 + $0x18] sm:$0xf]
    %v4256 = vld [vmem:[%s4248 + $0x1c] sm:$0xf]
    %v4257 = vld [vmem:[%s4248 + $0x20] sm:$0xf]
    %v4258 = vld [vmem:[%s4248 + $0x24] sm:$0xf]
    %v4259 = vld [vmem:[%s4248 + $0x28] sm:$0xf]
    %v4260 = vld [vmem:[%s4248 + $0x2c] sm:$0xf]
    %v4261 = vld [vmem:[%s4248 + $0x30] sm:$0xf]
    %v4262 = vld [vmem:[%s4248 + $0x34] sm:$0xf]
    %v4263 = vld [vmem:[%s4248 + $0x38] sm:$0xf]
    %v4264 = vld [vmem:[%s4248 + $0x3c] sm:$0xf]
    %v4265 = vld [vmem:[%s4248 + $0x40] sm:$0xf]
    %v4266 = vld [vmem:[%s4248 + $0x44] sm:$0xf]
    %v4267 = vld [vmem:[%s4248 + $0x48] sm:$0xf]
    %v4268 = vld [vmem:[%s4248 + $0x4c] sm:$0xf]
    %v4269 = vld [vmem:[%s4248 + $0x50] sm:$0xf]
    %v4270 = vld [vmem:[%s4248 + $0x54] sm:$0xf]
    %v4271 = vld [vmem:[%s4248 + $0x58] sm:$0xf]
    %v4272 = vld [vmem:[%s4248 + $0x5c] sm:$0xf]
    %v4273 = vld [vmem:[%s4248 + $0x60] sm:$0xf]
    %v4274 = vld [vmem:[%s4248 + $0x64] sm:$0xf]
    %v4275 = vld [vmem:[%s4248 + $0x68] sm:$0xf]
    %v4276 = vld [vmem:[%s4248 + $0x6c] sm:$0xf]
    %v4277 = vld [vmem:[%s4248 + $0x70] sm:$0xf]
    %v4278 = vld [vmem:[%s4248 + $0x74] sm:$0xf]
    %v4279 = vld [vmem:[%s4248 + $0x78] sm:$0xf]
    %v4280 = vld [vmem:[%s4248 + $0x7c] sm:$0x1]
    %v4313 = vunpack.c.l.b16 %v4249
    %v4314 = vunpack.c.l.b16 %v4250
    %v4315 = vunpack.c.l.b16 %v4251
    %v4316 = vunpack.c.l.b16 %v4252
    %v4317 = vunpack.c.l.b16 %v4253
    %v4318 = vunpack.c.l.b16 %v4254
    %v4319 = vunpack.c.l.b16 %v4255
    %v4320 = vunpack.c.l.b16 %v4256
    %v4321 = vunpack.c.l.b16 %v4257
    %v4322 = vunpack.c.l.b16 %v4258
    %v4323 = vunpack.c.l.b16 %v4259
    %v4324 = vunpack.c.l.b16 %v4260
    %v4325 = vunpack.c.l.b16 %v4261
    %v4326 = vunpack.c.l.b16 %v4262
    %v4327 = vunpack.c.l.b16 %v4263
    %v4328 = vunpack.c.l.b16 %v4264
    %v4329 = vunpack.c.l.b16 %v4265
    %v4330 = vunpack.c.l.b16 %v4266
    %v4331 = vunpack.c.l.b16 %v4267
    %v4332 = vunpack.c.l.b16 %v4268
    %v4333 = vunpack.c.l.b16 %v4269
    %v4334 = vunpack.c.l.b16 %v4270
    %v4335 = vunpack.c.l.b16 %v4271
    %v4336 = vunpack.c.l.b16 %v4272
    %v4337 = vunpack.c.l.b16 %v4273
    %v4338 = vunpack.c.l.b16 %v4274
    %v4339 = vunpack.c.l.b16 %v4275
    %v4340 = vunpack.c.l.b16 %v4276
    %v4341 = vunpack.c.l.b16 %v4277
    %v4342 = vunpack.c.l.b16 %v4278
    %v4343 = vunpack.c.l.b16 %v4279
    %v4344 = vunpack.c.l.b16 %v4280
    %v4345 = vpack.c.b16 %v4314, %v4313
    %v4346 = vpack.c.b16 %v4316, %v4315
    %v4347 = vpack.c.b16 %v4318, %v4317
    %v4348 = vpack.c.b16 %v4320, %v4319
    %v4349 = vpack.c.b16 %v4322, %v4321
    %v4350 = vpack.c.b16 %v4324, %v4323
    %v4351 = vpack.c.b16 %v4326, %v4325
    %v4352 = vpack.c.b16 %v4328, %v4327
    %v4353 = vpack.c.b16 %v4330, %v4329
    %v4354 = vpack.c.b16 %v4332, %v4331
    %v4355 = vpack.c.b16 %v4334, %v4333
    %v4356 = vpack.c.b16 %v4336, %v4335
    %v4357 = vpack.c.b16 %v4338, %v4337
    %v4358 = vpack.c.b16 %v4340, %v4339
    %v4359 = vpack.c.b16 %v4342, %v4341
    %v4360 = vpack.c.b16 %v4344, %v4343
    %v4377 = vsel %vm4196, %v4247, 0
    %v4380 = vsel %vm1076, %v4360, 0
    %4382 = vmatpush.bf16.msra.mxu0 %v4352
    %4383 = vmatpush.bf16.msra.mxu0 %v4351
    %4384 = vmatpush.bf16.msra.mxu0 %v4350
    %4385 = vmatpush.bf16.msra.mxu0 %v4349
    %4386 = vmatpush.bf16.msra.mxu0 %v4348
    %4387 = vmatpush.bf16.msra.mxu0 %v4347
    %4388 = vmatpush.bf16.msra.mxu0 %v4346
    %4389 = vmatpush.bf16.msra.mxu0 %v4345
    %4390 = vmatmul.bf16.gmra.mxu0 %v4246
    %v4391 = vpop.f32.mrf.mxu0
    %v4392 = vadd.f32 0.0, %v4391
    %v4393 = vpop.f32.mrf.mxu0
    %4394 = vdwg.mxu0
    %4395 = vmatpush.bf16.msra.mxu0 %v4380
    %4396 = vmatpush.bf16.msra.mxu0 %v4359
    %4397 = vmatpush.bf16.msra.mxu0 %v4358
    %4398 = vmatpush.bf16.msra.mxu0 %v4357
    %4399 = vmatpush.bf16.msra.mxu0 %v4356
    %4400 = vmatpush.bf16.msra.mxu0 %v4355
    %4401 = vmatpush.bf16.msra.mxu0 %v4354
    %4402 = vmatpush.bf16.msra.mxu0 %v4353
    %4403 = vmatmul.bf16.gmra.mxu0 %v4377
    %v4404 = vpop.f32.mrf.mxu0
    %v4405 = vadd.f32 %v4392, %v4404
    %v4406 = vpop.f32.mrf.mxu0
    %4407 = vdwg.mxu0
    %v4408 = vadd.f32 %v4229, %v4405
    %v4409 = vrot.slane %v4056, 1
    %v4410 = vrot.slane %v4057, 1
    %v4413 = vrot.slane %v4056, 3
    %v4414 = vrot.slane %v4057, 3
    %v4417 = vsel %vm4066, %v4409, %v4413
    %v4418 = vsel %vm4066, %v4410, %v4414
    %s4419 = scalar_lea.vmem %s12, 256
    %v4420 = vld [vmem:[%s4419] sm:$0xf]
    %v4421 = vld [vmem:[%s4419 + $0x4] sm:$0xf]
    %v4422 = vld [vmem:[%s4419 + $0x8] sm:$0xf]
    %v4423 = vld [vmem:[%s4419 + $0xc] sm:$0xf]
    %v4424 = vld [vmem:[%s4419 + $0x10] sm:$0xf]
    %v4425 = vld [vmem:[%s4419 + $0x14] sm:$0xf]
    %v4426 = vld [vmem:[%s4419 + $0x18] sm:$0xf]
    %v4427 = vld [vmem:[%s4419 + $0x1c] sm:$0xf]
    %v4428 = vld [vmem:[%s4419 + $0x20] sm:$0xf]
    %v4429 = vld [vmem:[%s4419 + $0x24] sm:$0xf]
    %v4430 = vld [vmem:[%s4419 + $0x28] sm:$0xf]
    %v4431 = vld [vmem:[%s4419 + $0x2c] sm:$0xf]
    %v4432 = vld [vmem:[%s4419 + $0x30] sm:$0xf]
    %v4433 = vld [vmem:[%s4419 + $0x34] sm:$0xf]
    %v4434 = vld [vmem:[%s4419 + $0x38] sm:$0xf]
    %v4435 = vld [vmem:[%s4419 + $0x3c] sm:$0xf]
    %v4436 = vld [vmem:[%s4419 + $0x40] sm:$0xf]
    %v4437 = vld [vmem:[%s4419 + $0x44] sm:$0xf]
    %v4438 = vld [vmem:[%s4419 + $0x48] sm:$0xf]
    %v4439 = vld [vmem:[%s4419 + $0x4c] sm:$0xf]
    %v4440 = vld [vmem:[%s4419 + $0x50] sm:$0xf]
    %v4441 = vld [vmem:[%s4419 + $0x54] sm:$0xf]
    %v4442 = vld [vmem:[%s4419 + $0x58] sm:$0xf]
    %v4443 = vld [vmem:[%s4419 + $0x5c] sm:$0xf]
    %v4444 = vld [vmem:[%s4419 + $0x60] sm:$0xf]
    %v4445 = vld [vmem:[%s4419 + $0x64] sm:$0xf]
    %v4446 = vld [vmem:[%s4419 + $0x68] sm:$0xf]
    %v4447 = vld [vmem:[%s4419 + $0x6c] sm:$0xf]
    %v4448 = vld [vmem:[%s4419 + $0x70] sm:$0xf]
    %v4449 = vld [vmem:[%s4419 + $0x74] sm:$0xf]
    %v4450 = vld [vmem:[%s4419 + $0x78] sm:$0xf]
    %v4451 = vld [vmem:[%s4419 + $0x7c] sm:$0x1]
    %v4484 = vunpack.c.l.b16 %v4420
    %v4485 = vunpack.c.l.b16 %v4421
    %v4486 = vunpack.c.l.b16 %v4422
    %v4487 = vunpack.c.l.b16 %v4423
    %v4488 = vunpack.c.l.b16 %v4424
    %v4489 = vunpack.c.l.b16 %v4425
    %v4490 = vunpack.c.l.b16 %v4426
    %v4491 = vunpack.c.l.b16 %v4427
    %v4492 = vunpack.c.l.b16 %v4428
    %v4493 = vunpack.c.l.b16 %v4429
    %v4494 = vunpack.c.l.b16 %v4430
    %v4495 = vunpack.c.l.b16 %v4431
    %v4496 = vunpack.c.l.b16 %v4432
    %v4497 = vunpack.c.l.b16 %v4433
    %v4498 = vunpack.c.l.b16 %v4434
    %v4499 = vunpack.c.l.b16 %v4435
    %v4500 = vunpack.c.l.b16 %v4436
    %v4501 = vunpack.c.l.b16 %v4437
    %v4502 = vunpack.c.l.b16 %v4438
    %v4503 = vunpack.c.l.b16 %v4439
    %v4504 = vunpack.c.l.b16 %v4440
    %v4505 = vunpack.c.l.b16 %v4441
    %v4506 = vunpack.c.l.b16 %v4442
    %v4507 = vunpack.c.l.b16 %v4443
    %v4508 = vunpack.c.l.b16 %v4444
    %v4509 = vunpack.c.l.b16 %v4445
    %v4510 = vunpack.c.l.b16 %v4446
    %v4511 = vunpack.c.l.b16 %v4447
    %v4512 = vunpack.c.l.b16 %v4448
    %v4513 = vunpack.c.l.b16 %v4449
    %v4514 = vunpack.c.l.b16 %v4450
    %v4515 = vunpack.c.l.b16 %v4451
    %v4516 = vpack.c.b16 %v4485, %v4484
    %v4517 = vpack.c.b16 %v4487, %v4486
    %v4518 = vpack.c.b16 %v4489, %v4488
    %v4519 = vpack.c.b16 %v4491, %v4490
    %v4520 = vpack.c.b16 %v4493, %v4492
    %v4521 = vpack.c.b16 %v4495, %v4494
    %v4522 = vpack.c.b16 %v4497, %v4496
    %v4523 = vpack.c.b16 %v4499, %v4498
    %v4524 = vpack.c.b16 %v4501, %v4500
    %v4525 = vpack.c.b16 %v4503, %v4502
    %v4526 = vpack.c.b16 %v4505, %v4504
    %v4527 = vpack.c.b16 %v4507, %v4506
    %v4528 = vpack.c.b16 %v4509, %v4508
    %v4529 = vpack.c.b16 %v4511, %v4510
    %v4530 = vpack.c.b16 %v4513, %v4512
    %v4531 = vpack.c.b16 %v4515, %v4514
    %v4548 = vsel %vm4196, %v4418, 0
    %v4551 = vsel %vm1076, %v4531, 0
    %4553 = vmatpush.bf16.msra.mxu0 %v4523
    %4554 = vmatpush.bf16.msra.mxu0 %v4522
    %4555 = vmatpush.bf16.msra.mxu0 %v4521
    %4556 = vmatpush.bf16.msra.mxu0 %v4520
    %4557 = vmatpush.bf16.msra.mxu0 %v4519
    %4558 = vmatpush.bf16.msra.mxu0 %v4518
    %4559 = vmatpush.bf16.msra.mxu0 %v4517
    %4560 = vmatpush.bf16.msra.mxu0 %v4516
    %4561 = vmatmul.bf16.gmra.mxu0 %v4417
    %v4562 = vpop.f32.mrf.mxu0
    %v4563 = vadd.f32 0.0, %v4562
    %v4564 = vpop.f32.mrf.mxu0
    %4565 = vdwg.mxu0
    %4566 = vmatpush.bf16.msra.mxu0 %v4551
    %4567 = vmatpush.bf16.msra.mxu0 %v4530
    %4568 = vmatpush.bf16.msra.mxu0 %v4529
    %4569 = vmatpush.bf16.msra.mxu0 %v4528
    %4570 = vmatpush.bf16.msra.mxu0 %v4527
    %4571 = vmatpush.bf16.msra.mxu0 %v4526
    %4572 = vmatpush.bf16.msra.mxu0 %v4525
    %4573 = vmatpush.bf16.msra.mxu0 %v4524
    %4574 = vmatmul.bf16.gmra.mxu0 %v4548
    %v4575 = vpop.f32.mrf.mxu0
    %v4576 = vadd.f32 %v4563, %v4575
    %v4577 = vpop.f32.mrf.mxu0
    %4578 = vdwg.mxu0
    %v4579 = vadd.f32 %v4408, %v4576
    %v4580 = vrot.slane %v4231, 1
    %v4581 = vrot.slane %v4234, 1
    %v4585 = vunpack.c.l.b16 %v4038
    %v4586 = vunpack.c.h.b16 %v4038
    %v4587 = vpack.c.b16 %v4585, %v4585
    %v4588 = vpack.c.b16 %v4586, %v4586
    %v4590 = vshll.u32 %v4587, 16
    %v4593 = vshll.u32 %v4588, 16
    %v4597 = vsel %vm4066, %v4580, %v4590
    %v4598 = vsel %vm4066, %v4581, %v4593
    %s4599 = scalar_lea.vmem %s12, 384
    %v4600 = vld [vmem:[%s4599] sm:$0xf]
    %v4601 = vld [vmem:[%s4599 + $0x4] sm:$0xf]
    %v4602 = vld [vmem:[%s4599 + $0x8] sm:$0xf]
    %v4603 = vld [vmem:[%s4599 + $0xc] sm:$0xf]
    %v4604 = vld [vmem:[%s4599 + $0x10] sm:$0xf]
    %v4605 = vld [vmem:[%s4599 + $0x14] sm:$0xf]
    %v4606 = vld [vmem:[%s4599 + $0x18] sm:$0xf]
    %v4607 = vld [vmem:[%s4599 + $0x1c] sm:$0xf]
    %v4608 = vld [vmem:[%s4599 + $0x20] sm:$0xf]
    %v4609 = vld [vmem:[%s4599 + $0x24] sm:$0xf]
    %v4610 = vld [vmem:[%s4599 + $0x28] sm:$0xf]
    %v4611 = vld [vmem:[%s4599 + $0x2c] sm:$0xf]
    %v4612 = vld [vmem:[%s4599 + $0x30] sm:$0xf]
    %v4613 = vld [vmem:[%s4599 + $0x34] sm:$0xf]
    %v4614 = vld [vmem:[%s4599 + $0x38] sm:$0xf]
    %v4615 = vld [vmem:[%s4599 + $0x3c] sm:$0xf]
    %v4616 = vld [vmem:[%s4599 + $0x40] sm:$0xf]
    %v4617 = vld [vmem:[%s4599 + $0x44] sm:$0xf]
    %v4618 = vld [vmem:[%s4599 + $0x48] sm:$0xf]
    %v4619 = vld [vmem:[%s4599 + $0x4c] sm:$0xf]
    %v4620 = vld [vmem:[%s4599 + $0x50] sm:$0xf]
    %v4621 = vld [vmem:[%s4599 + $0x54] sm:$0xf]
    %v4622 = vld [vmem:[%s4599 + $0x58] sm:$0xf]
    %v4623 = vld [vmem:[%s4599 + $0x5c] sm:$0xf]
    %v4624 = vld [vmem:[%s4599 + $0x60] sm:$0xf]
    %v4625 = vld [vmem:[%s4599 + $0x64] sm:$0xf]
    %v4626 = vld [vmem:[%s4599 + $0x68] sm:$0xf]
    %v4627 = vld [vmem:[%s4599 + $0x6c] sm:$0xf]
    %v4628 = vld [vmem:[%s4599 + $0x70] sm:$0xf]
    %v4629 = vld [vmem:[%s4599 + $0x74] sm:$0xf]
    %v4630 = vld [vmem:[%s4599 + $0x78] sm:$0xf]
    %v4631 = vld [vmem:[%s4599 + $0x7c] sm:$0x1]
    %v4664 = vunpack.c.l.b16 %v4600
    %v4665 = vunpack.c.l.b16 %v4601
    %v4666 = vunpack.c.l.b16 %v4602
    %v4667 = vunpack.c.l.b16 %v4603
    %v4668 = vunpack.c.l.b16 %v4604
    %v4669 = vunpack.c.l.b16 %v4605
    %v4670 = vunpack.c.l.b16 %v4606
    %v4671 = vunpack.c.l.b16 %v4607
    %v4672 = vunpack.c.l.b16 %v4608
    %v4673 = vunpack.c.l.b16 %v4609
    %v4674 = vunpack.c.l.b16 %v4610
    %v4675 = vunpack.c.l.b16 %v4611
    %v4676 = vunpack.c.l.b16 %v4612
    %v4677 = vunpack.c.l.b16 %v4613
    %v4678 = vunpack.c.l.b16 %v4614
    %v4679 = vunpack.c.l.b16 %v4615
    %v4680 = vunpack.c.l.b16 %v4616
    %v4681 = vunpack.c.l.b16 %v4617
    %v4682 = vunpack.c.l.b16 %v4618
    %v4683 = vunpack.c.l.b16 %v4619
    %v4684 = vunpack.c.l.b16 %v4620
    %v4685 = vunpack.c.l.b16 %v4621
    %v4686 = vunpack.c.l.b16 %v4622
    %v4687 = vunpack.c.l.b16 %v4623
    %v4688 = vunpack.c.l.b16 %v4624
    %v4689 = vunpack.c.l.b16 %v4625
    %v4690 = vunpack.c.l.b16 %v4626
    %v4691 = vunpack.c.l.b16 %v4627
    %v4692 = vunpack.c.l.b16 %v4628
    %v4693 = vunpack.c.l.b16 %v4629
    %v4694 = vunpack.c.l.b16 %v4630
    %v4695 = vunpack.c.l.b16 %v4631
    %v4696 = vpack.c.b16 %v4665, %v4664
    %v4697 = vpack.c.b16 %v4667, %v4666
    %v4698 = vpack.c.b16 %v4669, %v4668
    %v4699 = vpack.c.b16 %v4671, %v4670
    %v4700 = vpack.c.b16 %v4673, %v4672
    %v4701 = vpack.c.b16 %v4675, %v4674
    %v4702 = vpack.c.b16 %v4677, %v4676
    %v4703 = vpack.c.b16 %v4679, %v4678
    %v4704 = vpack.c.b16 %v4681, %v4680
    %v4705 = vpack.c.b16 %v4683, %v4682
    %v4706 = vpack.c.b16 %v4685, %v4684
    %v4707 = vpack.c.b16 %v4687, %v4686
    %v4708 = vpack.c.b16 %v4689, %v4688
    %v4709 = vpack.c.b16 %v4691, %v4690
    %v4710 = vpack.c.b16 %v4693, %v4692
    %v4711 = vpack.c.b16 %v4695, %v4694
    %v4728 = vsel %vm4196, %v4598, 0
    %v4731 = vsel %vm1076, %v4711, 0
    %4733 = vmatpush.bf16.msra.mxu0 %v4703
    %4734 = vmatpush.bf16.msra.mxu0 %v4702
    %4735 = vmatpush.bf16.msra.mxu0 %v4701
    %4736 = vmatpush.bf16.msra.mxu0 %v4700
    %4737 = vmatpush.bf16.msra.mxu0 %v4699
    %4738 = vmatpush.bf16.msra.mxu0 %v4698
    %4739 = vmatpush.bf16.msra.mxu0 %v4697
    %4740 = vmatpush.bf16.msra.mxu0 %v4696
    %4741 = vmatmul.bf16.gmra.mxu0 %v4597
    %v4742 = vpop.f32.mrf.mxu0
    %v4743 = vadd.f32 0.0, %v4742
    %v4744 = vpop.f32.mrf.mxu0
    %4745 = vdwg.mxu0
    %4746 = vmatpush.bf16.msra.mxu0 %v4731
    %4747 = vmatpush.bf16.msra.mxu0 %v4710
    %4748 = vmatpush.bf16.msra.mxu0 %v4709
    %4749 = vmatpush.bf16.msra.mxu0 %v4708
    %4750 = vmatpush.bf16.msra.mxu0 %v4707
    %4751 = vmatpush.bf16.msra.mxu0 %v4706
    %4752 = vmatpush.bf16.msra.mxu0 %v4705
    %4753 = vmatpush.bf16.msra.mxu0 %v4704
    %4754 = vmatmul.bf16.gmra.mxu0 %v4728
    %v4755 = vpop.f32.mrf.mxu0
    %v4756 = vadd.f32 %v4743, %v4755
    %v4757 = vpop.f32.mrf.mxu0
    %4758 = vdwg.mxu0
    %v4759 = vadd.f32 %v4579, %v4756
    %v4762 = vsel %vm4066, %v4060, %v4587
    %v4763 = vsel %vm4066, %v4061, %v4588
    %s4764 = scalar_lea.vmem %s12, 512
    %v4765 = vld [vmem:[%s4764] sm:$0xf]
    %v4766 = vld [vmem:[%s4764 + $0x4] sm:$0xf]
    %v4767 = vld [vmem:[%s4764 + $0x8] sm:$0xf]
    %v4768 = vld [vmem:[%s4764 + $0xc] sm:$0xf]
    %v4769 = vld [vmem:[%s4764 + $0x10] sm:$0xf]
    %v4770 = vld [vmem:[%s4764 + $0x14] sm:$0xf]
    %v4771 = vld [vmem:[%s4764 + $0x18] sm:$0xf]
    %v4772 = vld [vmem:[%s4764 + $0x1c] sm:$0xf]
    %v4773 = vld [vmem:[%s4764 + $0x20] sm:$0xf]
    %v4774 = vld [vmem:[%s4764 + $0x24] sm:$0xf]
    %v4775 = vld [vmem:[%s4764 + $0x28] sm:$0xf]
    %v4776 = vld [vmem:[%s4764 + $0x2c] sm:$0xf]
    %v4777 = vld [vmem:[%s4764 + $0x30] sm:$0xf]
    %v4778 = vld [vmem:[%s4764 + $0x34] sm:$0xf]
    %v4779 = vld [vmem:[%s4764 + $0x38] sm:$0xf]
    %v4780 = vld [vmem:[%s4764 + $0x3c] sm:$0xf]
    %v4781 = vld [vmem:[%s4764 + $0x40] sm:$0xf]
    %v4782 = vld [vmem:[%s4764 + $0x44] sm:$0xf]
    %v4783 = vld [vmem:[%s4764 + $0x48] sm:$0xf]
    %v4784 = vld [vmem:[%s4764 + $0x4c] sm:$0xf]
    %v4785 = vld [vmem:[%s4764 + $0x50] sm:$0xf]
    %v4786 = vld [vmem:[%s4764 + $0x54] sm:$0xf]
    %v4787 = vld [vmem:[%s4764 + $0x58] sm:$0xf]
    %v4788 = vld [vmem:[%s4764 + $0x5c] sm:$0xf]
    %v4789 = vld [vmem:[%s4764 + $0x60] sm:$0xf]
    %v4790 = vld [vmem:[%s4764 + $0x64] sm:$0xf]
    %v4791 = vld [vmem:[%s4764 + $0x68] sm:$0xf]
    %v4792 = vld [vmem:[%s4764 + $0x6c] sm:$0xf]
    %v4793 = vld [vmem:[%s4764 + $0x70] sm:$0xf]
    %v4794 = vld [vmem:[%s4764 + $0x74] sm:$0xf]
    %v4795 = vld [vmem:[%s4764 + $0x78] sm:$0xf]
    %v4796 = vld [vmem:[%s4764 + $0x7c] sm:$0x1]
    %v4829 = vunpack.c.l.b16 %v4765
    %v4830 = vunpack.c.l.b16 %v4766
    %v4831 = vunpack.c.l.b16 %v4767
    %v4832 = vunpack.c.l.b16 %v4768
    %v4833 = vunpack.c.l.b16 %v4769
    %v4834 = vunpack.c.l.b16 %v4770
    %v4835 = vunpack.c.l.b16 %v4771
    %v4836 = vunpack.c.l.b16 %v4772
    %v4837 = vunpack.c.l.b16 %v4773
    %v4838 = vunpack.c.l.b16 %v4774
    %v4839 = vunpack.c.l.b16 %v4775
    %v4840 = vunpack.c.l.b16 %v4776
    %v4841 = vunpack.c.l.b16 %v4777
    %v4842 = vunpack.c.l.b16 %v4778
    %v4843 = vunpack.c.l.b16 %v4779
    %v4844 = vunpack.c.l.b16 %v4780
    %v4845 = vunpack.c.l.b16 %v4781
    %v4846 = vunpack.c.l.b16 %v4782
    %v4847 = vunpack.c.l.b16 %v4783
    %v4848 = vunpack.c.l.b16 %v4784
    %v4849 = vunpack.c.l.b16 %v4785
    %v4850 = vunpack.c.l.b16 %v4786
    %v4851 = vunpack.c.l.b16 %v4787
    %v4852 = vunpack.c.l.b16 %v4788
    %v4853 = vunpack.c.l.b16 %v4789
    %v4854 = vunpack.c.l.b16 %v4790
    %v4855 = vunpack.c.l.b16 %v4791
    %v4856 = vunpack.c.l.b16 %v4792
    %v4857 = vunpack.c.l.b16 %v4793
    %v4858 = vunpack.c.l.b16 %v4794
    %v4859 = vunpack.c.l.b16 %v4795
    %v4860 = vunpack.c.l.b16 %v4796
    %v4861 = vpack.c.b16 %v4830, %v4829
    %v4862 = vpack.c.b16 %v4832, %v4831
    %v4863 = vpack.c.b16 %v4834, %v4833
    %v4864 = vpack.c.b16 %v4836, %v4835
    %v4865 = vpack.c.b16 %v4838, %v4837
    %v4866 = vpack.c.b16 %v4840, %v4839
    %v4867 = vpack.c.b16 %v4842, %v4841
    %v4868 = vpack.c.b16 %v4844, %v4843
    %v4869 = vpack.c.b16 %v4846, %v4845
    %v4870 = vpack.c.b16 %v4848, %v4847
    %v4871 = vpack.c.b16 %v4850, %v4849
    %v4872 = vpack.c.b16 %v4852, %v4851
    %v4873 = vpack.c.b16 %v4854, %v4853
    %v4874 = vpack.c.b16 %v4856, %v4855
    %v4875 = vpack.c.b16 %v4858, %v4857
    %v4876 = vpack.c.b16 %v4860, %v4859
    %v4893 = vsel %vm4196, %v4763, 0
    %v4896 = vsel %vm1076, %v4876, 0
    %4898 = vmatpush.bf16.msra.mxu0 %v4868
    %4899 = vmatpush.bf16.msra.mxu0 %v4867
    %4900 = vmatpush.bf16.msra.mxu0 %v4866
    %4901 = vmatpush.bf16.msra.mxu0 %v4865
    %4902 = vmatpush.bf16.msra.mxu0 %v4864
    %4903 = vmatpush.bf16.msra.mxu0 %v4863
    %4904 = vmatpush.bf16.msra.mxu0 %v4862
    %4905 = vmatpush.bf16.msra.mxu0 %v4861
    %4906 = vmatmul.bf16.gmra.mxu0 %v4762
    %v4907 = vpop.f32.mrf.mxu0
    %v4908 = vadd.f32 0.0, %v4907
    %v4909 = vpop.f32.mrf.mxu0
    %4910 = vdwg.mxu0
    %4911 = vmatpush.bf16.msra.mxu0 %v4896
    %4912 = vmatpush.bf16.msra.mxu0 %v4875
    %4913 = vmatpush.bf16.msra.mxu0 %v4874
    %4914 = vmatpush.bf16.msra.mxu0 %v4873
    %4915 = vmatpush.bf16.msra.mxu0 %v4872
    %4916 = vmatpush.bf16.msra.mxu0 %v4871
    %4917 = vmatpush.bf16.msra.mxu0 %v4870
    %4918 = vmatpush.bf16.msra.mxu0 %v4869
    %4919 = vmatmul.bf16.gmra.mxu0 %v4893
    %v4920 = vpop.f32.mrf.mxu0
    %v4921 = vadd.f32 %v4908, %v4920
    %v4922 = vpop.f32.mrf.mxu0
    %4923 = vdwg.mxu0
    %v4924 = vadd.f32 %v4759, %v4921
    %v4925 = vmax.f32 %v4924, 0.0
    %v4926 = vmin.f32 %v4925, 6.0
    %v4927 = vpack.c.bf16 %v4926, %v4926
    %v4928 = vld [vmem:[%s15] sm:$0xf]
    %v4929 = vld [vmem:[%s15 + $0x4] sm:$0xf]
    %v4930 = vld [vmem:[%s15 + $0x8] sm:$0xf]
    %v4931 = vld [vmem:[%s15 + $0xc] sm:$0xf]
    %v4932 = vld [vmem:[%s15 + $0x10] sm:$0xf]
    %v4933 = vld [vmem:[%s15 + $0x14] sm:$0xf]
    %v4934 = vld [vmem:[%s15 + $0x18] sm:$0xf]
    %v4935 = vld [vmem:[%s15 + $0x1c] sm:$0xf]
    %v4936 = vld [vmem:[%s15 + $0x20] sm:$0xf]
    %v4937 = vld [vmem:[%s15 + $0x24] sm:$0xf]
    %v4938 = vld [vmem:[%s15 + $0x28] sm:$0xf]
    %v4939 = vld [vmem:[%s15 + $0x2c] sm:$0xf]
    %v4940 = vld [vmem:[%s15 + $0x30] sm:$0x3]
    %v4941 = vld [vmem:[%s16] sm:$0x1]
    %v4943 = vperm.slane %v4941, 0
    %v4945 = vmul.f32 %v4043, %v4943
    %v4959 = vunpack.c.l.b16 %v4928
    %v4960 = vunpack.c.l.b16 %v4929
    %v4961 = vunpack.c.l.b16 %v4930
    %v4962 = vunpack.c.l.b16 %v4931
    %v4963 = vunpack.c.l.b16 %v4932
    %v4964 = vunpack.c.l.b16 %v4933
    %v4965 = vunpack.c.l.b16 %v4934
    %v4966 = vunpack.c.l.b16 %v4935
    %v4967 = vunpack.c.l.b16 %v4936
    %v4968 = vunpack.c.l.b16 %v4937
    %v4969 = vunpack.c.l.b16 %v4938
    %v4970 = vunpack.c.l.b16 %v4939
    %v4971 = vunpack.c.l.b16 %v4940
    %v4972 = vpack.c.b16 %v4960, %v4959
    %v4973 = vpack.c.b16 %v4962, %v4961
    %v4974 = vpack.c.b16 %v4964, %v4963
    %v4975 = vpack.c.b16 %v4966, %v4965
    %v4976 = vpack.c.b16 %v4968, %v4967
    %v4977 = vpack.c.b16 %v4970, %v4969
    %v4978 = vpack.c.b16 %v4971, %v4971
    %v4986 = vsel %vm3174, %v4927, 0
    %v4989 = vsel %vm908, %v4978, 0
    %4991 = vmatpush.bf16.msra.mxu0 0
    %4992 = vmatpush.bf16.msra.mxu0 %v4989
    %4993 = vmatpush.bf16.msra.mxu0 %v4977
    %4994 = vmatpush.bf16.msra.mxu0 %v4976
    %4995 = vmatpush.bf16.msra.mxu0 %v4975
    %4996 = vmatpush.bf16.msra.mxu0 %v4974
    %4997 = vmatpush.bf16.msra.mxu0 %v4973
    %4998 = vmatpush.bf16.msra.mxu0 %v4972
    %4999 = vmatmul.bf16.gmra.mxu0 %v4986
    %v5000 = vpop.f32.mrf.mxu0
    %v5001 = vadd.f32 %v4945, %v5000
    %v5002 = vpop.f32.mrf.mxu0
    %5003 = vdwg.mxu0
    %v5004 = vld [vmem:[#allocation9] sm:$0x1]
    %v5006 = vperm.slane %v5004, 0
    %v5008 = vadd.f32 %v5001, %v5006
    %v5009 = vmax.f32 %v5008, 0.0
    %v5010 = vmin.f32 %v5009, 6.0
    %v5011 = vpack.c.bf16 %v5010, %v5010
    %v5012 = vld [vmem:[%s18] sm:$0xf]
    %v5013 = vld [vmem:[%s18 + $0x4] sm:$0xf]
    %v5014 = vld [vmem:[%s18 + $0x8] sm:$0xf]
    %v5015 = vld [vmem:[%s18 + $0xc] sm:$0xf]
    %v5016 = vld [vmem:[%s18 + $0x10] sm:$0xf]
    %v5017 = vld [vmem:[%s18 + $0x14] sm:$0xf]
    %v5018 = vld [vmem:[%s18 + $0x18] sm:$0x1]
    %v5019 = vld [vmem:[#allocation3] sm:$0x1]
    %v5021 = vperm.slane %v5019, 0
    %v5023 = vmul.f32 %v116, %v5021
    %v5031 = vunpack.c.l.b16 %v5012
    %v5032 = vunpack.c.l.b16 %v5013
    %v5033 = vunpack.c.l.b16 %v5014
    %v5034 = vunpack.c.l.b16 %v5015
    %v5035 = vunpack.c.l.b16 %v5016
    %v5036 = vunpack.c.l.b16 %v5017
    %v5037 = vunpack.c.l.b16 %v5018
    %v5038 = vpack.c.b16 %v5032, %v5031
    %v5039 = vpack.c.b16 %v5034, %v5033
    %v5040 = vpack.c.b16 %v5036, %v5035
    %v5041 = vpack.c.b16 %v5037, %v5037
    %vm5045 = vcmask 408576
    %v5047 = vsel %vm5045, %v5011, 0
    %v5050 = vsel %vm1726, %v5041, 0
    %5052 = vmatpush.bf16.msra.mxu0 0
    %5053 = vmatpush.bf16.msra.mxu0 0
    %5054 = vmatpush.bf16.msra.mxu0 0
    %5055 = vmatpush.bf16.msra.mxu0 0
    %5056 = vmatpush.bf16.msra.mxu0 %v5050
    %5057 = vmatpush.bf16.msra.mxu0 %v5040
    %5058 = vmatpush.bf16.msra.mxu0 %v5039
    %5059 = vmatpush.bf16.msra.mxu0 %v5038
    %5060 = vmatmul.bf16.gmra.mxu0 %v5047
    %v5061 = vpop.f32.mrf.mxu0
    %v5062 = vadd.f32 %v5023, %v5061
    %v5063 = vpop.f32.mrf.mxu0
    %5064 = vdwg.mxu0
    %v5065 = vld [vmem:[#allocation4] sm:$0x1]
    %v5067 = vperm.slane %v5065, 0
    %v5069 = vadd.f32 %v5062, %v5067
    %vm5070 = vcmask 1024
    %5071 = vst.msk [vmem:[%s21] sm:$0x3] %vm5070, %v5069
    // Predicated region
    $region98: #{cnn_forward.1} parent=1 // pred_check
      _
    $region99: #{cnn_forward.1} parent=1 // pred_check_branch
      %5073 = sbr.rel (0) target = $region101
    $region100: #{cnn_forward.1} parent=1 // pred_region
      _
    $region101: #{cnn_forward.1} parent=1 // pred_fallthru
      _
    // Predicated region
    $region102: #{cnn_forward.1} parent=1 // pred_check
      _
    $region103: #{cnn_forward.1} parent=1 // pred_check_branch
      %5075 = sbr.rel (0) target = $region105
    $region104: #{cnn_forward.1} parent=1 // pred_region
      _
    $region105: #{cnn_forward.1} parent=1 // pred_fallthru
      _
    %5076 = vsyncpa [#allocation6], 1
    %5077 = vsyncpa [#allocation8], 1

</llo_original>
